<compile_context>
chip_gen: v6e
topology: v6e:2x2x1
jax: 0.10.0
libtpu: 0.0.40
codegen_flags: <defaults>
</compile_context>

<pallas_src>
import functools

import jax
import jax.numpy as jnp
import numpy as np
from jax.experimental import pallas as pl
from jax.experimental.pallas import tpu as pltpu

# ----------------------------- hyperparameters -----------------------------
VOCAB = 16          # API token vocabulary
HID = 32            # encoder hidden / embedding size
FEAT = 32           # CNN3D feature size
FUSE = FEAT + HID   # decoder hidden size (= fusion feature size) = 64
SEQ = 8
BATCH = 2
C, T, H, W = 3, 4, 16, 16

# hardware-tile padded sizes (f32 min tile = (8, 128))
B_PAD = 8
LANE = 128
VOCAB_PAD = LANE
HID_PAD = LANE      # encoder gate block size (lane aligned)
FUSE_PAD = LANE     # decoder gate block size (lane aligned)
C_PAD = LANE
GATE3 = 3 * FUSE_PAD          # 384 (== 3 * HID_PAD)

VMEM_SPEC = pl.BlockSpec(memory_space=pltpu.MemorySpace.VMEM)
ANY_SPEC = pl.BlockSpec(memory_space=pl.ANY)


# ------------------------------ fused kernel --------------------------------
def _gru_step(gi, h, whh_ref, bhh, gate):
    """PyTorch-order (r, z, n) GRU cell on padded (8, 128) tiles.

    `gi` (input-side gates, incl. b_ih) was hoisted out of the recurrence, so the
    only MXU op on the serial chain is h @ w_hh (bf16 operands, f32 accumulate).
    Gate blocks are `gate` (=128) lanes wide: lane-aligned full-vreg slices.
    """
    gh = jnp.dot(h.astype(jnp.bfloat16), whh_ref[...],
                 preferred_element_type=jnp.float32) + bhh
    i_r, i_z, i_n = gi[:, :gate], gi[:, gate:2 * gate], gi[:, 2 * gate:]
    h_r, h_z, h_n = gh[:, :gate], gh[:, gate:2 * gate], gh[:, 2 * gate:]
    r = jax.nn.sigmoid(i_r + h_r)
    z = jax.nn.sigmoid(i_z + h_z)
    n = jnp.tanh(i_n + r * h_n)
    return (1.0 - z) * n + z * h


def seq2seq_kernel(enc_oh_ref, dec_oh_ref, pooled_ref,
                   enc_gi_tab_ref, enc_whh_ref, enc_bih_ref, enc_bhh_ref,
                   cnn_w_ref, cnn_b_ref,
                   dec_gi_tab_hbm, dec_whh_hbm, dec_bih_ref, dec_bhh_ref,
                   out_w_hbm, out_b_ref,
                   logits_ref, dec_h_ref,
                   gi_scr, h_all, dec_gi_buf, dec_whh_buf, out_w_buf, dma_sems):
    # ---- start decoder-weight DMAs now; they hide behind the encoder work ----
    cp_gi = pltpu.make_async_copy(dec_gi_tab_hbm, dec_gi_buf, dma_sems.at[0])
    cp_whh = pltpu.make_async_copy(dec_whh_hbm, dec_whh_buf, dma_sems.at[1])
    cp_ow = pltpu.make_async_copy(out_w_hbm, out_w_buf, dma_sems.at[2])
    cp_gi.start()
    cp_whh.start()
    cp_ow.start()

    # ---- encoder: input-side gates for ALL timesteps in ONE MXU op ----------
    gi_scr[...] = (jnp.dot(enc_oh_ref[...], enc_gi_tab_ref[...],
                           preferred_element_type=jnp.float32) + enc_bih_ref[...])
    enc_bhh = enc_bhh_ref[...]            # pre-broadcast (8, 384): no per-step bcast
    h_enc = jnp.zeros((B_PAD, HID_PAD), jnp.float32)
    for t in range(SEQ):                  # static unroll: LLO sees the whole chain
        gi = gi_scr[pl.ds(t * B_PAD, B_PAD), :]
        h_enc = _gru_step(gi, h_enc, enc_whh_ref, enc_bhh, HID_PAD)

    # ---- CNN3D feature linear (stand-in) + fusion ----------------------------
    # TODO(synk): the real CNN3D module is external to seq2seq.py; a global-avg-pool
    # + Linear(C -> FEAT) stand-in is used so the fusion path matches in shape.
    cnn = jnp.dot(pooled_ref[...], cnn_w_ref[...],
                  preferred_element_type=jnp.float32) + cnn_b_ref[...]   # lanes [0, FEAT)
    # fusion = torch.cat((CNN, enc_hidden), 2): disjoint lane supports -> plain add.
    h_dec = cnn + h_enc

    # ---- decoder: hoisted gi matmul, recurrence, batched output projection ---
    cp_gi.wait()
    gi_scr[...] = (jnp.dot(dec_oh_ref[...], dec_gi_buf[...],
                           preferred_element_type=jnp.float32) + dec_bih_ref[...])
    cp_whh.wait()
    dec_bhh = dec_bhh_ref[...]
    for t in range(SEQ):
        gi = gi_scr[pl.ds(t * B_PAD, B_PAD), :]
        h_dec = _gru_step(gi, h_dec, dec_whh_buf, dec_bhh, FUSE_PAD)
        h_all[pl.ds(t * B_PAD, B_PAD), :] = h_dec     # off-path full-tile store

    cp_ow.wait()
    logits_ref[...] = (jnp.dot(h_all[...].astype(jnp.bfloat16), out_w_buf[...],
                               preferred_element_type=jnp.float32) + out_b_ref[...])
    dec_h_ref[...] = h_dec


def _fused_call(enc_oh, dec_oh, pooled, pp):
    return pl.pallas_call(
        seq2seq_kernel,
        out_shape=(jax.ShapeDtypeStruct((SEQ * B_PAD, VOCAB_PAD), jnp.float32),
                   jax.ShapeDtypeStruct((B_PAD, FUSE_PAD), jnp.float32)),
        in_specs=[VMEM_SPEC, VMEM_SPEC, VMEM_SPEC,          # one-hots, pooled
                  VMEM_SPEC, VMEM_SPEC, VMEM_SPEC, VMEM_SPEC,  # encoder weights
                  VMEM_SPEC, VMEM_SPEC,                     # cnn stand-in
                  ANY_SPEC, ANY_SPEC, VMEM_SPEC, VMEM_SPEC,  # decoder (big tables in HBM)
                  ANY_SPEC, VMEM_SPEC],                     # output projection
        out_specs=(VMEM_SPEC, VMEM_SPEC),
        scratch_shapes=[
            pltpu.VMEM((SEQ * B_PAD, GATE3), jnp.float32),     # gi for all steps (reused enc/dec)
            pltpu.VMEM((SEQ * B_PAD, FUSE_PAD), jnp.float32),  # decoder h history
            pltpu.VMEM((VOCAB_PAD, GATE3), jnp.bfloat16),      # dec gi table landing buffer
            pltpu.VMEM((FUSE_PAD, GATE3), jnp.bfloat16),       # dec w_hh landing buffer
            pltpu.VMEM((FUSE_PAD, VOCAB_PAD), jnp.bfloat16),   # out_w landing buffer
            pltpu.SemaphoreType.DMA((3,)),
        ],
    )(enc_oh, dec_oh, pooled,
      pp["enc_gi_tab"], pp["enc_w_hh"], pp["enc_b_ih"], pp["enc_b_hh"],
      pp["cnn_w"], pp["cnn_b"],
      pp["dec_gi_tab"], pp["dec_w_hh"], pp["dec_b_ih"], pp["dec_b_hh"],
      pp["out_w"], pp["out_b"])


# ------------------------------ parameter init ------------------------------
def init_params(key):
    """Logical (unpadded) parameters, PyTorch GRU gate order (r, z, n)."""
    ks = jax.random.split(key, 12)
    s = 0.1
    return {
        # Encoder: Embedding(VOCAB, HID) + GRU(HID -> HID)
        "enc_emb": jax.random.normal(ks[0], (VOCAB, HID), jnp.float32) * s,
        "enc_w_ih": jax.random.normal(ks[1], (HID, 3 * HID), jnp.float32) * s,
        "enc_w_hh": jax.random.normal(ks[2], (HID, 3 * HID), jnp.float32) * s,
        "enc_b_ih": jax.random.normal(ks[3], (1, 3 * HID), jnp.float32) * s,
        "enc_b_hh": jax.random.normal(ks[4], (1, 3 * HID), jnp.float32) * s,
        # CNN3D stand-in: global avg pool over (T,H,W) then Linear(C -> FEAT)
        "cnn_w": jax.random.normal(ks[5], (C, FEAT), jnp.float32) * s,
        "cnn_b": jax.random.normal(ks[6], (1, FEAT), jnp.float32) * s,
        # Decoder: Embedding(VOCAB, HID) + GRU(HID -> FUSE) + Linear(FUSE -> VOCAB)
        "dec_emb": jax.random.normal(ks[7], (VOCAB, HID), jnp.float32) * s,
        "dec_w_ih": jax.random.normal(ks[8], (HID, 3 * FUSE), jnp.float32) * s,
        "dec_w_hh": jax.random.normal(ks[9], (FUSE, 3 * FUSE), jnp.float32) * s,
        "dec_b_ih": jnp.zeros((1, 3 * FUSE), jnp.float32),
        "dec_b_hh": jnp.zeros((1, 3 * FUSE), jnp.float32),
        "out_w": jax.random.normal(ks[10], (FUSE, VOCAB), jnp.float32) * s,
        "out_b": jax.random.normal(ks[11], (1, VOCAB), jnp.float32) * s,
    }


def _pad2(x, rows, cols, row_off=0, col_off=0):
    r, c = x.shape
    return jnp.pad(x, ((row_off, rows - row_off - r), (col_off, cols - col_off - c)))


def _pad_gru_w(w, rows_pad, gate_pad, row_off=0, col_off=0):
    g = w.shape[1] // 3
    return jnp.concatenate(
        [_pad2(w[:, i * g:(i + 1) * g], rows_pad, gate_pad, row_off, col_off)
         for i in range(3)], axis=1)


def _pad_gru_b(b, gate_pad, col_off=0):
    g = b.shape[1] // 3
    return jnp.concatenate(
        [_pad2(b[:, i * g:(i + 1) * g], 1, gate_pad, 0, col_off)
         for i in range(3)], axis=1)


def pad_params(p):
    """Zero-pad to (8,128)-tiled shapes, fuse emb@w_ih into per-token gi tables,
    pre-broadcast b_hh, and pre-cast MXU weight operands to bf16. Encoder hidden
    is placed at lane offset FEAT so fusion = cnn + enc_hidden inside the kernel."""
    enc_gi = p["enc_emb"] @ p["enc_w_ih"]          # (VOCAB, 3*HID)  fused input table
    dec_gi = p["dec_emb"] @ p["dec_w_ih"]          # (VOCAB, 3*FUSE) fused input table
    return {
        "enc_gi_tab": _pad_gru_w(enc_gi, VOCAB_PAD, HID_PAD, 0, FEAT).astype(jnp.bfloat16),
        "enc_w_hh": _pad_gru_w(p["enc_w_hh"], HID_PAD, HID_PAD, FEAT, FEAT).astype(jnp.bfloat16),
        "enc_b_ih": _pad_gru_b(p["enc_b_ih"], HID_PAD, FEAT),
        "enc_b_hh": jnp.tile(_pad_gru_b(p["enc_b_hh"], HID_PAD, FEAT), (B_PAD, 1)),
        "cnn_w": _pad2(p["cnn_w"], C_PAD, FUSE_PAD),                     # cnn lanes [0,FEAT)
        "cnn_b": _pad2(p["cnn_b"], 1, FUSE_PAD),
        "dec_gi_tab": _pad_gru_w(dec_gi, VOCAB_PAD, FUSE_PAD, 0, 0).astype(jnp.bfloat16),
        "dec_w_hh": _pad_gru_w(p["dec_w_hh"], FUSE_PAD, FUSE_PAD, 0, 0).astype(jnp.bfloat16),
        "dec_b_ih": _pad_gru_b(p["dec_b_ih"], FUSE_PAD, 0),
        "dec_b_hh": jnp.tile(_pad_gru_b(p["dec_b_hh"], FUSE_PAD, 0), (B_PAD, 1)),
        "out_w": _pad2(p["out_w"], FUSE_PAD, VOCAB_PAD).astype(jnp.bfloat16),
        "out_b": _pad2(p["out_b"], 1, VOCAB_PAD),
    }


# ------------------------------ forward pass --------------------------------
def seq2seq_forward(padded_params, animation, input_api, target_api):
    """animation (B,C,T,H,W) f32; input_api/target_api (SEQ,B) int32
       -> decoder_outputs (SEQ,B,VOCAB), decoder_hidden (1,B,FUSE)."""
    b = animation.shape[0]

    # tiny glue: spatial pooling and one-hot token encoding, padded to tiles and
    # pre-flattened to (SEQ*B_PAD, VOCAB_PAD) so the kernel's hoisted gi matmul is 2D.
    pooled = jnp.mean(animation, axis=(2, 3, 4))                                 # (B, C)
    pooled = jnp.pad(pooled, ((0, B_PAD - b), (0, C_PAD - C)))

    def tokens_to_oh(tok):
        oh = jax.nn.one_hot(tok, VOCAB_PAD, dtype=jnp.float32)                   # (SEQ,B,128)
        oh = jnp.pad(oh, ((0, 0), (0, B_PAD - b), (0, 0)))
        return oh.reshape(SEQ * B_PAD, VOCAB_PAD).astype(jnp.bfloat16)

    enc_oh = tokens_to_oh(input_api)
    dec_oh = tokens_to_oh(target_api)

    logits_pad, dec_h_pad = _fused_call(enc_oh, dec_oh, pooled, padded_params)

    logits_pad = logits_pad.reshape(SEQ, B_PAD, VOCAB_PAD)
    decoder_outputs = logits_pad[:, :b, :VOCAB]
    decoder_hidden = dec_h_pad[None, :b, :FUSE]
    return decoder_outputs, decoder_hidden
    # TODO(synk): autoregressive `evaluate` path of the reference is not implemented
    # (this is the teacher-forced forward() only).


# ------------------------- pure-JAX reference (check) ------------------------
def _ref_gru(x, h, w_ih, w_hh, b_ih, b_hh):
    gi = x @ w_ih + b_ih
    gh = h @ w_hh + b_hh
    i_r, i_z, i_n = jnp.split(gi, 3, axis=-1)
    h_r, h_z, h_n = jnp.split(gh, 3, axis=-1)
    r = jax.nn.sigmoid(i_r + h_r)
    z = jax.nn.sigmoid(i_z + h_z)
    n = jnp.tanh(i_n + r * h_n)
    return (1.0 - z) * n + z * h


def ref_forward(p, animation, input_api, target_api):
    emb = p["enc_emb"][input_api]
    h = jnp.zeros((input_api.shape[1], HID), jnp.float32)
    for t in range(input_api.shape[0]):
        h = _ref_gru(emb[t], h, p["enc_w_ih"], p["enc_w_hh"], p["enc_b_ih"], p["enc_b_hh"])
    pooled = jnp.mean(animation, axis=(2, 3, 4))
    cnn = pooled @ p["cnn_w"] + p["cnn_b"]
    hdec = jnp.concatenate([cnn, h], axis=-1)
    demb = p["dec_emb"][target_api]
    outs = []
    for t in range(target_api.shape[0]):
        hdec = _ref_gru(demb[t], hdec, p["dec_w_ih"], p["dec_w_hh"], p["dec_b_ih"], p["dec_b_hh"])
        outs.append(hdec @ p["out_w"] + p["out_b"])
    return jnp.stack(outs, axis=0), hdec[None]


# ----------------------------------- main -----------------------------------
if __name__ == "__main__":
    key = jax.random.PRNGKey(0)
    kp, ka, ki, kt = jax.random.split(key, 4)

    params = init_params(kp)
    padded_params = pad_params(params)

    animation = jax.random.normal(ka, (BATCH, C, T, H, W), jnp.float32)
    input_api = jax.random.randint(ki, (SEQ, BATCH), 0, VOCAB, jnp.int32)
    target_api = jax.random.randint(kt, (SEQ, BATCH), 0, VOCAB, jnp.int32)

    fwd = jax.jit(functools.partial(seq2seq_forward, padded_params))
    decoder_outputs, decoder_hidden = fwd(animation, input_api, target_api)
    jax.block_until_ready((decoder_outputs, decoder_hidden))

    assert decoder_outputs.shape == (SEQ, BATCH, VOCAB), decoder_outputs.shape
    assert decoder_hidden.shape == (1, BATCH, FUSE), decoder_hidden.shape

    # numerical check against a pure-JAX reference of the same logical model
    # (bf16 MXU operands in the kernel -> loose tolerance)
    ref_out, ref_hid = ref_forward(params, animation, input_api, target_api)
    np.testing.assert_allclose(np.asarray(decoder_outputs), np.asarray(ref_out),
                               rtol=5e-2, atol=5e-2)
    np.testing.assert_allclose(np.asarray(decoder_hidden), np.asarray(ref_hid),
                               rtol=5e-2, atol=5e-2)

    print("KERNEL_OK")
</pallas_src>

<mosaic_0001>
module attributes {stable_mosaic.version = 11 : i64} {
  func.func @seq2seq_kernel(%arg0: memref<64x128xbf16, #tpu.memory_space<vmem>>, %arg1: memref<64x128xbf16, #tpu.memory_space<vmem>>, %arg2: memref<8x128xf32, #tpu.memory_space<vmem>>, %arg3: memref<128x384xbf16, #tpu.memory_space<vmem>>, %arg4: memref<128x384xbf16, #tpu.memory_space<vmem>>, %arg5: memref<1x384xf32, #tpu.memory_space<vmem>>, %arg6: memref<8x384xf32, #tpu.memory_space<vmem>>, %arg7: memref<128x128xf32, #tpu.memory_space<vmem>>, %arg8: memref<1x128xf32, #tpu.memory_space<vmem>>, %arg9: memref<128x384xbf16, #tpu.memory_space<any>>, %arg10: memref<128x384xbf16, #tpu.memory_space<any>>, %arg11: memref<1x384xf32, #tpu.memory_space<vmem>>, %arg12: memref<8x384xf32, #tpu.memory_space<vmem>>, %arg13: memref<128x128xbf16, #tpu.memory_space<any>>, %arg14: memref<1x128xf32, #tpu.memory_space<vmem>>, %arg15: memref<64x128xf32, #tpu.memory_space<vmem>>, %arg16: memref<8x128xf32, #tpu.memory_space<vmem>>, %arg17: memref<64x384xf32, #tpu.memory_space<vmem>>, %arg18: memref<64x128xf32, #tpu.memory_space<vmem>>, %arg19: memref<128x384xbf16, #tpu.memory_space<vmem>>, %arg20: memref<128x384xbf16, #tpu.memory_space<vmem>>, %arg21: memref<128x128xbf16, #tpu.memory_space<vmem>>, %arg22: memref<3x!tpu.dma_semaphore, #tpu.memory_space<semaphore_mem>>) attributes {dimension_semantics = [], scalar_prefetch = 0 : i64, scratch_operands = 6 : i64, tpu.core_type = #tpu.core_type<tc>} {
    %c0_i32 = arith.constant 0 : i32
    %0 = tpu.memref_slice %arg22[%c0_i32] : memref<3x!tpu.dma_semaphore, #tpu.memory_space<semaphore_mem>> -> memref<1x!tpu.dma_semaphore, #tpu.memory_space<semaphore_mem>>
    %1 = tpu.memref_squeeze %0 : memref<1x!tpu.dma_semaphore, #tpu.memory_space<semaphore_mem>> -> memref<!tpu.dma_semaphore, #tpu.memory_space<semaphore_mem>>
    tpu.enqueue_dma source(%arg9 : memref<128x384xbf16, #tpu.memory_space<any>>) target(%arg19 : memref<128x384xbf16, #tpu.memory_space<vmem>>) target_semaphore(%1 : memref<!tpu.dma_semaphore, #tpu.memory_space<semaphore_mem>>)
    %c1_i32 = arith.constant 1 : i32
    %2 = tpu.memref_slice %arg22[%c1_i32] : memref<3x!tpu.dma_semaphore, #tpu.memory_space<semaphore_mem>> -> memref<1x!tpu.dma_semaphore, #tpu.memory_space<semaphore_mem>>
    %3 = tpu.memref_squeeze %2 : memref<1x!tpu.dma_semaphore, #tpu.memory_space<semaphore_mem>> -> memref<!tpu.dma_semaphore, #tpu.memory_space<semaphore_mem>>
    tpu.enqueue_dma source(%arg10 : memref<128x384xbf16, #tpu.memory_space<any>>) target(%arg20 : memref<128x384xbf16, #tpu.memory_space<vmem>>) target_semaphore(%3 : memref<!tpu.dma_semaphore, #tpu.memory_space<semaphore_mem>>)
    %c2_i32 = arith.constant 2 : i32
    %4 = tpu.memref_slice %arg22[%c2_i32] : memref<3x!tpu.dma_semaphore, #tpu.memory_space<semaphore_mem>> -> memref<1x!tpu.dma_semaphore, #tpu.memory_space<semaphore_mem>>
    %5 = tpu.memref_squeeze %4 : memref<1x!tpu.dma_semaphore, #tpu.memory_space<semaphore_mem>> -> memref<!tpu.dma_semaphore, #tpu.memory_space<semaphore_mem>>
    tpu.enqueue_dma source(%arg13 : memref<128x128xbf16, #tpu.memory_space<any>>) target(%arg21 : memref<128x128xbf16, #tpu.memory_space<vmem>>) target_semaphore(%5 : memref<!tpu.dma_semaphore, #tpu.memory_space<semaphore_mem>>)
    %c0 = arith.constant 0 : index
    %c0_0 = arith.constant 0 : index
    %6 = vector.load %arg0[%c0, %c0_0] : memref<64x128xbf16, #tpu.memory_space<vmem>>, vector<64x128xbf16>
    %c0_1 = arith.constant 0 : index
    %c0_2 = arith.constant 0 : index
    %7 = vector.load %arg3[%c0_1, %c0_2] : memref<128x384xbf16, #tpu.memory_space<vmem>>, vector<128x384xbf16>
    %cst = arith.constant dense<0.000000e+00> : vector<64x384xf32>
    %8 = tpu.matmul %6, %7, %cst {dimension_numbers = #tpu.dot_dimension_numbers<[1], [0], [0], [1], [0, 0, 1, 1], [], []>} : vector<64x128xbf16>, vector<128x384xbf16>, vector<64x384xf32> -> vector<64x384xf32>
    %c0_3 = arith.constant 0 : index
    %c0_4 = arith.constant 0 : index
    %9 = vector.load %arg5[%c0_3, %c0_4] : memref<1x384xf32, #tpu.memory_space<vmem>>, vector<1x384xf32>
    %10 = vector.broadcast %9 : vector<1x384xf32> to vector<64x384xf32>
    %11 = arith.addf %8, %10 : vector<64x384xf32>
    %c0_5 = arith.constant 0 : index
    %c0_6 = arith.constant 0 : index
    %12 = vector.load %arg17[%c0_5, %c0_6] : memref<64x384xf32, #tpu.memory_space<vmem>>, vector<64x384xf32>
    tpu.vector_store %arg17[%c0_5, %c0_6], %11 {strides = array<i32>} : memref<64x384xf32, #tpu.memory_space<vmem>>, vector<64x384xf32>,
    %c0_7 = arith.constant 0 : index
    %c0_8 = arith.constant 0 : index
    %13 = vector.load %arg6[%c0_7, %c0_8] : memref<8x384xf32, #tpu.memory_space<vmem>>, vector<8x384xf32>
    %cst_9 = arith.constant 0.000000e+00 : f32
    %14 = vector.broadcast %cst_9 : f32 to vector<8x128xf32>
    %c0_10 = arith.constant 0 : index
    %c0_11 = arith.constant 0 : index
    %15 = vector.load %arg17[%c0_10, %c0_11] : memref<64x384xf32, #tpu.memory_space<vmem>>, vector<8x384xf32>
    %16 = arith.truncf %14 : vector<8x128xf32> to vector<8x128xbf16>
    %c0_12 = arith.constant 0 : index
    %c0_13 = arith.constant 0 : index
    %17 = vector.load %arg4[%c0_12, %c0_13] : memref<128x384xbf16, #tpu.memory_space<vmem>>, vector<128x384xbf16>
    %cst_14 = arith.constant dense<0.000000e+00> : vector<8x384xf32>
    %18 = tpu.matmul %16, %17, %cst_14 {dimension_numbers = #tpu.dot_dimension_numbers<[1], [0], [0], [1], [0, 0, 1, 1], [], []>} : vector<8x128xbf16>, vector<128x384xbf16>, vector<8x384xf32> -> vector<8x384xf32>
    %19 = arith.addf %18, %13 : vector<8x384xf32>
    %20 = vector.extract_strided_slice %15 {offsets = [0, 0], sizes = [8, 128], strides = [1, 1]} : vector<8x384xf32> to vector<8x128xf32>
    %21 = vector.extract_strided_slice %15 {offsets = [0, 128], sizes = [8, 128], strides = [1, 1]} : vector<8x384xf32> to vector<8x128xf32>
    %22 = vector.extract_strided_slice %15 {offsets = [0, 256], sizes = [8, 128], strides = [1, 1]} : vector<8x384xf32> to vector<8x128xf32>
    %23 = vector.extract_strided_slice %19 {offsets = [0, 0], sizes = [8, 128], strides = [1, 1]} : vector<8x384xf32> to vector<8x128xf32>
    %24 = vector.extract_strided_slice %19 {offsets = [0, 128], sizes = [8, 128], strides = [1, 1]} : vector<8x384xf32> to vector<8x128xf32>
    %25 = vector.extract_strided_slice %19 {offsets = [0, 256], sizes = [8, 128], strides = [1, 1]} : vector<8x384xf32> to vector<8x128xf32>
    %26 = arith.addf %20, %23 : vector<8x128xf32>
    %27 = arith.negf %26 : vector<8x128xf32>
    %28 = math.exp %27 : vector<8x128xf32>
    %cst_15 = arith.constant 1.000000e+00 : f32
    %29 = vector.broadcast %cst_15 : f32 to vector<8x128xf32>
    %30 = arith.addf %29, %28 : vector<8x128xf32>
    %31 = arith.divf %29, %30 : vector<8x128xf32>
    %32 = arith.addf %21, %24 : vector<8x128xf32>
    %33 = arith.negf %32 : vector<8x128xf32>
    %34 = math.exp %33 : vector<8x128xf32>
    %cst_16 = arith.constant 1.000000e+00 : f32
    %35 = vector.broadcast %cst_16 : f32 to vector<8x128xf32>
    %36 = arith.addf %35, %34 : vector<8x128xf32>
    %37 = arith.divf %35, %36 : vector<8x128xf32>
    %38 = arith.mulf %31, %25 : vector<8x128xf32>
    %39 = arith.addf %22, %38 : vector<8x128xf32>
    %40 = math.tanh %39 : vector<8x128xf32>
    %cst_17 = arith.constant 1.000000e+00 : f32
    %41 = vector.broadcast %cst_17 : f32 to vector<8x128xf32>
    %42 = arith.subf %41, %37 : vector<8x128xf32>
    %43 = arith.mulf %42, %40 : vector<8x128xf32>
    %44 = arith.mulf %37, %14 : vector<8x128xf32>
    %45 = arith.addf %43, %44 : vector<8x128xf32>
    %c8 = arith.constant 8 : index
    %c0_18 = arith.constant 0 : index
    %46 = vector.load %arg17[%c8, %c0_18] : memref<64x384xf32, #tpu.memory_space<vmem>>, vector<8x384xf32>
    %47 = arith.truncf %45 : vector<8x128xf32> to vector<8x128xbf16>
    %c0_19 = arith.constant 0 : index
    %c0_20 = arith.constant 0 : index
    %48 = vector.load %arg4[%c0_19, %c0_20] : memref<128x384xbf16, #tpu.memory_space<vmem>>, vector<128x384xbf16>
    %cst_21 = arith.constant dense<0.000000e+00> : vector<8x384xf32>
    %49 = tpu.matmul %47, %48, %cst_21 {dimension_numbers = #tpu.dot_dimension_numbers<[1], [0], [0], [1], [0, 0, 1, 1], [], []>} : vector<8x128xbf16>, vector<128x384xbf16>, vector<8x384xf32> -> vector<8x384xf32>
    %50 = arith.addf %49, %13 : vector<8x384xf32>
    %51 = vector.extract_strided_slice %46 {offsets = [0, 0], sizes = [8, 128], strides = [1, 1]} : vector<8x384xf32> to vector<8x128xf32>
    %52 = vector.extract_strided_slice %46 {offsets = [0, 128], sizes = [8, 128], strides = [1, 1]} : vector<8x384xf32> to vector<8x128xf32>
    %53 = vector.extract_strided_slice %46 {offsets = [0, 256], sizes = [8, 128], strides = [1, 1]} : vector<8x384xf32> to vector<8x128xf32>
    %54 = vector.extract_strided_slice %50 {offsets = [0, 0], sizes = [8, 128], strides = [1, 1]} : vector<8x384xf32> to vector<8x128xf32>
    %55 = vector.extract_strided_slice %50 {offsets = [0, 128], sizes = [8, 128], strides = [1, 1]} : vector<8x384xf32> to vector<8x128xf32>
    %56 = vector.extract_strided_slice %50 {offsets = [0, 256], sizes = [8, 128], strides = [1, 1]} : vector<8x384xf32> to vector<8x128xf32>
    %57 = arith.addf %51, %54 : vector<8x128xf32>
    %58 = arith.negf %57 : vector<8x128xf32>
    %59 = math.exp %58 : vector<8x128xf32>
    %cst_22 = arith.constant 1.000000e+00 : f32
    %60 = vector.broadcast %cst_22 : f32 to vector<8x128xf32>
    %61 = arith.addf %60, %59 : vector<8x128xf32>
    %62 = arith.divf %60, %61 : vector<8x128xf32>
    %63 = arith.addf %52, %55 : vector<8x128xf32>
    %64 = arith.negf %63 : vector<8x128xf32>
    %65 = math.exp %64 : vector<8x128xf32>
    %cst_23 = arith.constant 1.000000e+00 : f32
    %66 = vector.broadcast %cst_23 : f32 to vector<8x128xf32>
    %67 = arith.addf %66, %65 : vector<8x128xf32>
    %68 = arith.divf %66, %67 : vector<8x128xf32>
    %69 = arith.mulf %62, %56 : vector<8x128xf32>
    %70 = arith.addf %53, %69 : vector<8x128xf32>
    %71 = math.tanh %70 : vector<8x128xf32>
    %cst_24 = arith.constant 1.000000e+00 : f32
    %72 = vector.broadcast %cst_24 : f32 to vector<8x128xf32>
    %73 = arith.subf %72, %68 : vector<8x128xf32>
    %74 = arith.mulf %73, %71 : vector<8x128xf32>
    %75 = arith.mulf %68, %45 : vector<8x128xf32>
    %76 = arith.addf %74, %75 : vector<8x128xf32>
    %c16 = arith.constant 16 : index
    %c0_25 = arith.constant 0 : index
    %77 = vector.load %arg17[%c16, %c0_25] : memref<64x384xf32, #tpu.memory_space<vmem>>, vector<8x384xf32>
    %78 = arith.truncf %76 : vector<8x128xf32> to vector<8x128xbf16>
    %c0_26 = arith.constant 0 : index
    %c0_27 = arith.constant 0 : index
    %79 = vector.load %arg4[%c0_26, %c0_27] : memref<128x384xbf16, #tpu.memory_space<vmem>>, vector<128x384xbf16>
    %cst_28 = arith.constant dense<0.000000e+00> : vector<8x384xf32>
    %80 = tpu.matmul %78, %79, %cst_28 {dimension_numbers = #tpu.dot_dimension_numbers<[1], [0], [0], [1], [0, 0, 1, 1], [], []>} : vector<8x128xbf16>, vector<128x384xbf16>, vector<8x384xf32> -> vector<8x384xf32>
    %81 = arith.addf %80, %13 : vector<8x384xf32>
    %82 = vector.extract_strided_slice %77 {offsets = [0, 0], sizes = [8, 128], strides = [1, 1]} : vector<8x384xf32> to vector<8x128xf32>
    %83 = vector.extract_strided_slice %77 {offsets = [0, 128], sizes = [8, 128], strides = [1, 1]} : vector<8x384xf32> to vector<8x128xf32>
    %84 = vector.extract_strided_slice %77 {offsets = [0, 256], sizes = [8, 128], strides = [1, 1]} : vector<8x384xf32> to vector<8x128xf32>
    %85 = vector.extract_strided_slice %81 {offsets = [0, 0], sizes = [8, 128], strides = [1, 1]} : vector<8x384xf32> to vector<8x128xf32>
    %86 = vector.extract_strided_slice %81 {offsets = [0, 128], sizes = [8, 128], strides = [1, 1]} : vector<8x384xf32> to vector<8x128xf32>
    %87 = vector.extract_strided_slice %81 {offsets = [0, 256], sizes = [8, 128], strides = [1, 1]} : vector<8x384xf32> to vector<8x128xf32>
    %88 = arith.addf %82, %85 : vector<8x128xf32>
    %89 = arith.negf %88 : vector<8x128xf32>
    %90 = math.exp %89 : vector<8x128xf32>
    %cst_29 = arith.constant 1.000000e+00 : f32
    %91 = vector.broadcast %cst_29 : f32 to vector<8x128xf32>
    %92 = arith.addf %91, %90 : vector<8x128xf32>
    %93 = arith.divf %91, %92 : vector<8x128xf32>
    %94 = arith.addf %83, %86 : vector<8x128xf32>
    %95 = arith.negf %94 : vector<8x128xf32>
    %96 = math.exp %95 : vector<8x128xf32>
    %cst_30 = arith.constant 1.000000e+00 : f32
    %97 = vector.broadcast %cst_30 : f32 to vector<8x128xf32>
    %98 = arith.addf %97, %96 : vector<8x128xf32>
    %99 = arith.divf %97, %98 : vector<8x128xf32>
    %100 = arith.mulf %93, %87 : vector<8x128xf32>
    %101 = arith.addf %84, %100 : vector<8x128xf32>
    %102 = math.tanh %101 : vector<8x128xf32>
    %cst_31 = arith.constant 1.000000e+00 : f32
    %103 = vector.broadcast %cst_31 : f32 to vector<8x128xf32>
    %104 = arith.subf %103, %99 : vector<8x128xf32>
    %105 = arith.mulf %104, %102 : vector<8x128xf32>
    %106 = arith.mulf %99, %76 : vector<8x128xf32>
    %107 = arith.addf %105, %106 : vector<8x128xf32>
    %c24 = arith.constant 24 : index
    %c0_32 = arith.constant 0 : index
    %108 = vector.load %arg17[%c24, %c0_32] : memref<64x384xf32, #tpu.memory_space<vmem>>, vector<8x384xf32>
    %109 = arith.truncf %107 : vector<8x128xf32> to vector<8x128xbf16>
    %c0_33 = arith.constant 0 : index
    %c0_34 = arith.constant 0 : index
    %110 = vector.load %arg4[%c0_33, %c0_34] : memref<128x384xbf16, #tpu.memory_space<vmem>>, vector<128x384xbf16>
    %cst_35 = arith.constant dense<0.000000e+00> : vector<8x384xf32>
    %111 = tpu.matmul %109, %110, %cst_35 {dimension_numbers = #tpu.dot_dimension_numbers<[1], [0], [0], [1], [0, 0, 1, 1], [], []>} : vector<8x128xbf16>, vector<128x384xbf16>, vector<8x384xf32> -> vector<8x384xf32>
    %112 = arith.addf %111, %13 : vector<8x384xf32>
    %113 = vector.extract_strided_slice %108 {offsets = [0, 0], sizes = [8, 128], strides = [1, 1]} : vector<8x384xf32> to vector<8x128xf32>
    %114 = vector.extract_strided_slice %108 {offsets = [0, 128], sizes = [8, 128], strides = [1, 1]} : vector<8x384xf32> to vector<8x128xf32>
    %115 = vector.extract_strided_slice %108 {offsets = [0, 256], sizes = [8, 128], strides = [1, 1]} : vector<8x384xf32> to vector<8x128xf32>
    %116 = vector.extract_strided_slice %112 {offsets = [0, 0], sizes = [8, 128], strides = [1, 1]} : vector<8x384xf32> to vector<8x128xf32>
    %117 = vector.extract_strided_slice %112 {offsets = [0, 128], sizes = [8, 128], strides = [1, 1]} : vector<8x384xf32> to vector<8x128xf32>
    %118 = vector.extract_strided_slice %112 {offsets = [0, 256], sizes = [8, 128], strides = [1, 1]} : vector<8x384xf32> to vector<8x128xf32>
    %119 = arith.addf %113, %116 : vector<8x128xf32>
    %120 = arith.negf %119 : vector<8x128xf32>
    %121 = math.exp %120 : vector<8x128xf32>
    %cst_36 = arith.constant 1.000000e+00 : f32
    %122 = vector.broadcast %cst_36 : f32 to vector<8x128xf32>
    %123 = arith.addf %122, %121 : vector<8x128xf32>
    %124 = arith.divf %122, %123 : vector<8x128xf32>
    %125 = arith.addf %114, %117 : vector<8x128xf32>
    %126 = arith.negf %125 : vector<8x128xf32>
    %127 = math.exp %126 : vector<8x128xf32>
    %cst_37 = arith.constant 1.000000e+00 : f32
    %128 = vector.broadcast %cst_37 : f32 to vector<8x128xf32>
    %129 = arith.addf %128, %127 : vector<8x128xf32>
    %130 = arith.divf %128, %129 : vector<8x128xf32>
    %131 = arith.mulf %124, %118 : vector<8x128xf32>
    %132 = arith.addf %115, %131 : vector<8x128xf32>
    %133 = math.tanh %132 : vector<8x128xf32>
    %cst_38 = arith.constant 1.000000e+00 : f32
    %134 = vector.broadcast %cst_38 : f32 to vector<8x128xf32>
    %135 = arith.subf %134, %130 : vector<8x128xf32>
    %136 = arith.mulf %135, %133 : vector<8x128xf32>
    %137 = arith.mulf %130, %107 : vector<8x128xf32>
    %138 = arith.addf %136, %137 : vector<8x128xf32>
    %c32 = arith.constant 32 : index
    %c0_39 = arith.constant 0 : index
    %139 = vector.load %arg17[%c32, %c0_39] : memref<64x384xf32, #tpu.memory_space<vmem>>, vector<8x384xf32>
    %140 = arith.truncf %138 : vector<8x128xf32> to vector<8x128xbf16>
    %c0_40 = arith.constant 0 : index
    %c0_41 = arith.constant 0 : index
    %141 = vector.load %arg4[%c0_40, %c0_41] : memref<128x384xbf16, #tpu.memory_space<vmem>>, vector<128x384xbf16>
    %cst_42 = arith.constant dense<0.000000e+00> : vector<8x384xf32>
    %142 = tpu.matmul %140, %141, %cst_42 {dimension_numbers = #tpu.dot_dimension_numbers<[1], [0], [0], [1], [0, 0, 1, 1], [], []>} : vector<8x128xbf16>, vector<128x384xbf16>, vector<8x384xf32> -> vector<8x384xf32>
    %143 = arith.addf %142, %13 : vector<8x384xf32>
    %144 = vector.extract_strided_slice %139 {offsets = [0, 0], sizes = [8, 128], strides = [1, 1]} : vector<8x384xf32> to vector<8x128xf32>
    %145 = vector.extract_strided_slice %139 {offsets = [0, 128], sizes = [8, 128], strides = [1, 1]} : vector<8x384xf32> to vector<8x128xf32>
    %146 = vector.extract_strided_slice %139 {offsets = [0, 256], sizes = [8, 128], strides = [1, 1]} : vector<8x384xf32> to vector<8x128xf32>
    %147 = vector.extract_strided_slice %143 {offsets = [0, 0], sizes = [8, 128], strides = [1, 1]} : vector<8x384xf32> to vector<8x128xf32>
    %148 = vector.extract_strided_slice %143 {offsets = [0, 128], sizes = [8, 128], strides = [1, 1]} : vector<8x384xf32> to vector<8x128xf32>
    %149 = vector.extract_strided_slice %143 {offsets = [0, 256], sizes = [8, 128], strides = [1, 1]} : vector<8x384xf32> to vector<8x128xf32>
    %150 = arith.addf %144, %147 : vector<8x128xf32>
    %151 = arith.negf %150 : vector<8x128xf32>
    %152 = math.exp %151 : vector<8x128xf32>
    %cst_43 = arith.constant 1.000000e+00 : f32
    %153 = vector.broadcast %cst_43 : f32 to vector<8x128xf32>
    %154 = arith.addf %153, %152 : vector<8x128xf32>
    %155 = arith.divf %153, %154 : vector<8x128xf32>
    %156 = arith.addf %145, %148 : vector<8x128xf32>
    %157 = arith.negf %156 : vector<8x128xf32>
    %158 = math.exp %157 : vector<8x128xf32>
    %cst_44 = arith.constant 1.000000e+00 : f32
    %159 = vector.broadcast %cst_44 : f32 to vector<8x128xf32>
    %160 = arith.addf %159, %158 : vector<8x128xf32>
    %161 = arith.divf %159, %160 : vector<8x128xf32>
    %162 = arith.mulf %155, %149 : vector<8x128xf32>
    %163 = arith.addf %146, %162 : vector<8x128xf32>
    %164 = math.tanh %163 : vector<8x128xf32>
    %cst_45 = arith.constant 1.000000e+00 : f32
    %165 = vector.broadcast %cst_45 : f32 to vector<8x128xf32>
    %166 = arith.subf %165, %161 : vector<8x128xf32>
    %167 = arith.mulf %166, %164 : vector<8x128xf32>
    %168 = arith.mulf %161, %138 : vector<8x128xf32>
    %169 = arith.addf %167, %168 : vector<8x128xf32>
    %c40 = arith.constant 40 : index
    %c0_46 = arith.constant 0 : index
    %170 = vector.load %arg17[%c40, %c0_46] : memref<64x384xf32, #tpu.memory_space<vmem>>, vector<8x384xf32>
    %171 = arith.truncf %169 : vector<8x128xf32> to vector<8x128xbf16>
    %c0_47 = arith.constant 0 : index
    %c0_48 = arith.constant 0 : index
    %172 = vector.load %arg4[%c0_47, %c0_48] : memref<128x384xbf16, #tpu.memory_space<vmem>>, vector<128x384xbf16>
    %cst_49 = arith.constant dense<0.000000e+00> : vector<8x384xf32>
    %173 = tpu.matmul %171, %172, %cst_49 {dimension_numbers = #tpu.dot_dimension_numbers<[1], [0], [0], [1], [0, 0, 1, 1], [], []>} : vector<8x128xbf16>, vector<128x384xbf16>, vector<8x384xf32> -> vector<8x384xf32>
    %174 = arith.addf %173, %13 : vector<8x384xf32>
    %175 = vector.extract_strided_slice %170 {offsets = [0, 0], sizes = [8, 128], strides = [1, 1]} : vector<8x384xf32> to vector<8x128xf32>
    %176 = vector.extract_strided_slice %170 {offsets = [0, 128], sizes = [8, 128], strides = [1, 1]} : vector<8x384xf32> to vector<8x128xf32>
    %177 = vector.extract_strided_slice %170 {offsets = [0, 256], sizes = [8, 128], strides = [1, 1]} : vector<8x384xf32> to vector<8x128xf32>
    %178 = vector.extract_strided_slice %174 {offsets = [0, 0], sizes = [8, 128], strides = [1, 1]} : vector<8x384xf32> to vector<8x128xf32>
    %179 = vector.extract_strided_slice %174 {offsets = [0, 128], sizes = [8, 128], strides = [1, 1]} : vector<8x384xf32> to vector<8x128xf32>
    %180 = vector.extract_strided_slice %174 {offsets = [0, 256], sizes = [8, 128], strides = [1, 1]} : vector<8x384xf32> to vector<8x128xf32>
    %181 = arith.addf %175, %178 : vector<8x128xf32>
    %182 = arith.negf %181 : vector<8x128xf32>
    %183 = math.exp %182 : vector<8x128xf32>
    %cst_50 = arith.constant 1.000000e+00 : f32
    %184 = vector.broadcast %cst_50 : f32 to vector<8x128xf32>
    %185 = arith.addf %184, %183 : vector<8x128xf32>
    %186 = arith.divf %184, %185 : vector<8x128xf32>
    %187 = arith.addf %176, %179 : vector<8x128xf32>
    %188 = arith.negf %187 : vector<8x128xf32>
    %189 = math.exp %188 : vector<8x128xf32>
    %cst_51 = arith.constant 1.000000e+00 : f32
    %190 = vector.broadcast %cst_51 : f32 to vector<8x128xf32>
    %191 = arith.addf %190, %189 : vector<8x128xf32>
    %192 = arith.divf %190, %191 : vector<8x128xf32>
    %193 = arith.mulf %186, %180 : vector<8x128xf32>
    %194 = arith.addf %177, %193 : vector<8x128xf32>
    %195 = math.tanh %194 : vector<8x128xf32>
    %cst_52 = arith.constant 1.000000e+00 : f32
    %196 = vector.broadcast %cst_52 : f32 to vector<8x128xf32>
    %197 = arith.subf %196, %192 : vector<8x128xf32>
    %198 = arith.mulf %197, %195 : vector<8x128xf32>
    %199 = arith.mulf %192, %169 : vector<8x128xf32>
    %200 = arith.addf %198, %199 : vector<8x128xf32>
    %c48 = arith.constant 48 : index
    %c0_53 = arith.constant 0 : index
    %201 = vector.load %arg17[%c48, %c0_53] : memref<64x384xf32, #tpu.memory_space<vmem>>, vector<8x384xf32>
    %202 = arith.truncf %200 : vector<8x128xf32> to vector<8x128xbf16>
    %c0_54 = arith.constant 0 : index
    %c0_55 = arith.constant 0 : index
    %203 = vector.load %arg4[%c0_54, %c0_55] : memref<128x384xbf16, #tpu.memory_space<vmem>>, vector<128x384xbf16>
    %cst_56 = arith.constant dense<0.000000e+00> : vector<8x384xf32>
    %204 = tpu.matmul %202, %203, %cst_56 {dimension_numbers = #tpu.dot_dimension_numbers<[1], [0], [0], [1], [0, 0, 1, 1], [], []>} : vector<8x128xbf16>, vector<128x384xbf16>, vector<8x384xf32> -> vector<8x384xf32>
    %205 = arith.addf %204, %13 : vector<8x384xf32>
    %206 = vector.extract_strided_slice %201 {offsets = [0, 0], sizes = [8, 128], strides = [1, 1]} : vector<8x384xf32> to vector<8x128xf32>
    %207 = vector.extract_strided_slice %201 {offsets = [0, 128], sizes = [8, 128], strides = [1, 1]} : vector<8x384xf32> to vector<8x128xf32>
    %208 = vector.extract_strided_slice %201 {offsets = [0, 256], sizes = [8, 128], strides = [1, 1]} : vector<8x384xf32> to vector<8x128xf32>
    %209 = vector.extract_strided_slice %205 {offsets = [0, 0], sizes = [8, 128], strides = [1, 1]} : vector<8x384xf32> to vector<8x128xf32>
    %210 = vector.extract_strided_slice %205 {offsets = [0, 128], sizes = [8, 128], strides = [1, 1]} : vector<8x384xf32> to vector<8x128xf32>
    %211 = vector.extract_strided_slice %205 {offsets = [0, 256], sizes = [8, 128], strides = [1, 1]} : vector<8x384xf32> to vector<8x128xf32>
    %212 = arith.addf %206, %209 : vector<8x128xf32>
    %213 = arith.negf %212 : vector<8x128xf32>
    %214 = math.exp %213 : vector<8x128xf32>
    %cst_57 = arith.constant 1.000000e+00 : f32
    %215 = vector.broadcast %cst_57 : f32 to vector<8x128xf32>
    %216 = arith.addf %215, %214 : vector<8x128xf32>
    %217 = arith.divf %215, %216 : vector<8x128xf32>
    %218 = arith.addf %207, %210 : vector<8x128xf32>
    %219 = arith.negf %218 : vector<8x128xf32>
    %220 = math.exp %219 : vector<8x128xf32>
    %cst_58 = arith.constant 1.000000e+00 : f32
    %221 = vector.broadcast %cst_58 : f32 to vector<8x128xf32>
    %222 = arith.addf %221, %220 : vector<8x128xf32>
    %223 = arith.divf %221, %222 : vector<8x128xf32>
    %224 = arith.mulf %217, %211 : vector<8x128xf32>
    %225 = arith.addf %208, %224 : vector<8x128xf32>
    %226 = math.tanh %225 : vector<8x128xf32>
    %cst_59 = arith.constant 1.000000e+00 : f32
    %227 = vector.broadcast %cst_59 : f32 to vector<8x128xf32>
    %228 = arith.subf %227, %223 : vector<8x128xf32>
    %229 = arith.mulf %228, %226 : vector<8x128xf32>
    %230 = arith.mulf %223, %200 : vector<8x128xf32>
    %231 = arith.addf %229, %230 : vector<8x128xf32>
    %c56 = arith.constant 56 : index
    %c0_60 = arith.constant 0 : index
    %232 = vector.load %arg17[%c56, %c0_60] : memref<64x384xf32, #tpu.memory_space<vmem>>, vector<8x384xf32>
    %233 = arith.truncf %231 : vector<8x128xf32> to vector<8x128xbf16>
    %c0_61 = arith.constant 0 : index
    %c0_62 = arith.constant 0 : index
    %234 = vector.load %arg4[%c0_61, %c0_62] : memref<128x384xbf16, #tpu.memory_space<vmem>>, vector<128x384xbf16>
    %cst_63 = arith.constant dense<0.000000e+00> : vector<8x384xf32>
    %235 = tpu.matmul %233, %234, %cst_63 {dimension_numbers = #tpu.dot_dimension_numbers<[1], [0], [0], [1], [0, 0, 1, 1], [], []>} : vector<8x128xbf16>, vector<128x384xbf16>, vector<8x384xf32> -> vector<8x384xf32>
    %236 = arith.addf %235, %13 : vector<8x384xf32>
    %237 = vector.extract_strided_slice %232 {offsets = [0, 0], sizes = [8, 128], strides = [1, 1]} : vector<8x384xf32> to vector<8x128xf32>
    %238 = vector.extract_strided_slice %232 {offsets = [0, 128], sizes = [8, 128], strides = [1, 1]} : vector<8x384xf32> to vector<8x128xf32>
    %239 = vector.extract_strided_slice %232 {offsets = [0, 256], sizes = [8, 128], strides = [1, 1]} : vector<8x384xf32> to vector<8x128xf32>
    %240 = vector.extract_strided_slice %236 {offsets = [0, 0], sizes = [8, 128], strides = [1, 1]} : vector<8x384xf32> to vector<8x128xf32>
    %241 = vector.extract_strided_slice %236 {offsets = [0, 128], sizes = [8, 128], strides = [1, 1]} : vector<8x384xf32> to vector<8x128xf32>
    %242 = vector.extract_strided_slice %236 {offsets = [0, 256], sizes = [8, 128], strides = [1, 1]} : vector<8x384xf32> to vector<8x128xf32>
    %243 = arith.addf %237, %240 : vector<8x128xf32>
    %244 = arith.negf %243 : vector<8x128xf32>
    %245 = math.exp %244 : vector<8x128xf32>
    %cst_64 = arith.constant 1.000000e+00 : f32
    %246 = vector.broadcast %cst_64 : f32 to vector<8x128xf32>
    %247 = arith.addf %246, %245 : vector<8x128xf32>
    %248 = arith.divf %246, %247 : vector<8x128xf32>
    %249 = arith.addf %238, %241 : vector<8x128xf32>
    %250 = arith.negf %249 : vector<8x128xf32>
    %251 = math.exp %250 : vector<8x128xf32>
    %cst_65 = arith.constant 1.000000e+00 : f32
    %252 = vector.broadcast %cst_65 : f32 to vector<8x128xf32>
    %253 = arith.addf %252, %251 : vector<8x128xf32>
    %254 = arith.divf %252, %253 : vector<8x128xf32>
    %255 = arith.mulf %248, %242 : vector<8x128xf32>
    %256 = arith.addf %239, %255 : vector<8x128xf32>
    %257 = math.tanh %256 : vector<8x128xf32>
    %cst_66 = arith.constant 1.000000e+00 : f32
    %258 = vector.broadcast %cst_66 : f32 to vector<8x128xf32>
    %259 = arith.subf %258, %254 : vector<8x128xf32>
    %260 = arith.mulf %259, %257 : vector<8x128xf32>
    %261 = arith.mulf %254, %231 : vector<8x128xf32>
    %262 = arith.addf %260, %261 : vector<8x128xf32>
    %c0_67 = arith.constant 0 : index
    %c0_68 = arith.constant 0 : index
    %263 = vector.load %arg2[%c0_67, %c0_68] : memref<8x128xf32, #tpu.memory_space<vmem>>, vector<8x128xf32>
    %c0_69 = arith.constant 0 : index
    %c0_70 = arith.constant 0 : index
    %264 = vector.load %arg7[%c0_69, %c0_70] : memref<128x128xf32, #tpu.memory_space<vmem>>, vector<128x128xf32>
    %cst_71 = arith.constant dense<0.000000e+00> : vector<8x128xf32>
    %265 = tpu.matmul %263, %264, %cst_71 {dimension_numbers = #tpu.dot_dimension_numbers<[1], [0], [0], [1], [0, 0, 1, 1], [], []>} : vector<8x128xf32>, vector<128x128xf32>, vector<8x128xf32> -> vector<8x128xf32>
    %c0_72 = arith.constant 0 : index
    %c0_73 = arith.constant 0 : index
    %266 = vector.load %arg8[%c0_72, %c0_73] : memref<1x128xf32, #tpu.memory_space<vmem>>, vector<1x128xf32>
    %267 = vector.broadcast %266 : vector<1x128xf32> to vector<8x128xf32>
    %268 = arith.addf %265, %267 : vector<8x128xf32>
    %269 = arith.addf %268, %262 : vector<8x128xf32>
    %c0_i32_74 = arith.constant 0 : i32
    %270 = tpu.memref_slice %arg22[%c0_i32_74] : memref<3x!tpu.dma_semaphore, #tpu.memory_space<semaphore_mem>> -> memref<1x!tpu.dma_semaphore, #tpu.memory_space<semaphore_mem>>
    %271 = tpu.memref_squeeze %270 : memref<1x!tpu.dma_semaphore, #tpu.memory_space<semaphore_mem>> -> memref<!tpu.dma_semaphore, #tpu.memory_space<semaphore_mem>>
    tpu.wait_dma2 semaphore(%271 : memref<!tpu.dma_semaphore, #tpu.memory_space<semaphore_mem>>) src(%arg9 : memref<128x384xbf16, #tpu.memory_space<any>>) dst(%arg19 : memref<128x384xbf16, #tpu.memory_space<vmem>>)
    %c0_75 = arith.constant 0 : index
    %c0_76 = arith.constant 0 : index
    %272 = vector.load %arg1[%c0_75, %c0_76] : memref<64x128xbf16, #tpu.memory_space<vmem>>, vector<64x128xbf16>
    %c0_77 = arith.constant 0 : index
    %c0_78 = arith.constant 0 : index
    %273 = vector.load %arg19[%c0_77, %c0_78] : memref<128x384xbf16, #tpu.memory_space<vmem>>, vector<128x384xbf16>
    %cst_79 = arith.constant dense<0.000000e+00> : vector<64x384xf32>
    %274 = tpu.matmul %272, %273, %cst_79 {dimension_numbers = #tpu.dot_dimension_numbers<[1], [0], [0], [1], [0, 0, 1, 1], [], []>} : vector<64x128xbf16>, vector<128x384xbf16>, vector<64x384xf32> -> vector<64x384xf32>
    %c0_80 = arith.constant 0 : index
    %c0_81 = arith.constant 0 : index
    %275 = vector.load %arg11[%c0_80, %c0_81] : memref<1x384xf32, #tpu.memory_space<vmem>>, vector<1x384xf32>
    %276 = vector.broadcast %275 : vector<1x384xf32> to vector<64x384xf32>
    %277 = arith.addf %274, %276 : vector<64x384xf32>
    %c0_82 = arith.constant 0 : index
    %c0_83 = arith.constant 0 : index
    %278 = vector.load %arg17[%c0_82, %c0_83] : memref<64x384xf32, #tpu.memory_space<vmem>>, vector<64x384xf32>
    tpu.vector_store %arg17[%c0_82, %c0_83], %277 {strides = array<i32>} : memref<64x384xf32, #tpu.memory_space<vmem>>, vector<64x384xf32>,
    %c1_i32_84 = arith.constant 1 : i32
    %279 = tpu.memref_slice %arg22[%c1_i32_84] : memref<3x!tpu.dma_semaphore, #tpu.memory_space<semaphore_mem>> -> memref<1x!tpu.dma_semaphore, #tpu.memory_space<semaphore_mem>>
    %280 = tpu.memref_squeeze %279 : memref<1x!tpu.dma_semaphore, #tpu.memory_space<semaphore_mem>> -> memref<!tpu.dma_semaphore, #tpu.memory_space<semaphore_mem>>
    tpu.wait_dma2 semaphore(%280 : memref<!tpu.dma_semaphore, #tpu.memory_space<semaphore_mem>>) src(%arg10 : memref<128x384xbf16, #tpu.memory_space<any>>) dst(%arg20 : memref<128x384xbf16, #tpu.memory_space<vmem>>)
    %c0_85 = arith.constant 0 : index
    %c0_86 = arith.constant 0 : index
    %281 = vector.load %arg12[%c0_85, %c0_86] : memref<8x384xf32, #tpu.memory_space<vmem>>, vector<8x384xf32>
    %c0_87 = arith.constant 0 : index
    %c0_88 = arith.constant 0 : index
    %282 = vector.load %arg17[%c0_87, %c0_88] : memref<64x384xf32, #tpu.memory_space<vmem>>, vector<8x384xf32>
    %283 = arith.truncf %269 : vector<8x128xf32> to vector<8x128xbf16>
    %c0_89 = arith.constant 0 : index
    %c0_90 = arith.constant 0 : index
    %284 = vector.load %arg20[%c0_89, %c0_90] : memref<128x384xbf16, #tpu.memory_space<vmem>>, vector<128x384xbf16>
    %cst_91 = arith.constant dense<0.000000e+00> : vector<8x384xf32>
    %285 = tpu.matmul %283, %284, %cst_91 {dimension_numbers = #tpu.dot_dimension_numbers<[1], [0], [0], [1], [0, 0, 1, 1], [], []>} : vector<8x128xbf16>, vector<128x384xbf16>, vector<8x384xf32> -> vector<8x384xf32>
    %286 = arith.addf %285, %281 : vector<8x384xf32>
    %287 = vector.extract_strided_slice %282 {offsets = [0, 0], sizes = [8, 128], strides = [1, 1]} : vector<8x384xf32> to vector<8x128xf32>
    %288 = vector.extract_strided_slice %282 {offsets = [0, 128], sizes = [8, 128], strides = [1, 1]} : vector<8x384xf32> to vector<8x128xf32>
    %289 = vector.extract_strided_slice %282 {offsets = [0, 256], sizes = [8, 128], strides = [1, 1]} : vector<8x384xf32> to vector<8x128xf32>
    %290 = vector.extract_strided_slice %286 {offsets = [0, 0], sizes = [8, 128], strides = [1, 1]} : vector<8x384xf32> to vector<8x128xf32>
    %291 = vector.extract_strided_slice %286 {offsets = [0, 128], sizes = [8, 128], strides = [1, 1]} : vector<8x384xf32> to vector<8x128xf32>
    %292 = vector.extract_strided_slice %286 {offsets = [0, 256], sizes = [8, 128], strides = [1, 1]} : vector<8x384xf32> to vector<8x128xf32>
    %293 = arith.addf %287, %290 : vector<8x128xf32>
    %294 = arith.negf %293 : vector<8x128xf32>
    %295 = math.exp %294 : vector<8x128xf32>
    %cst_92 = arith.constant 1.000000e+00 : f32
    %296 = vector.broadcast %cst_92 : f32 to vector<8x128xf32>
    %297 = arith.addf %296, %295 : vector<8x128xf32>
    %298 = arith.divf %296, %297 : vector<8x128xf32>
    %299 = arith.addf %288, %291 : vector<8x128xf32>
    %300 = arith.negf %299 : vector<8x128xf32>
    %301 = math.exp %300 : vector<8x128xf32>
    %cst_93 = arith.constant 1.000000e+00 : f32
    %302 = vector.broadcast %cst_93 : f32 to vector<8x128xf32>
    %303 = arith.addf %302, %301 : vector<8x128xf32>
    %304 = arith.divf %302, %303 : vector<8x128xf32>
    %305 = arith.mulf %298, %292 : vector<8x128xf32>
    %306 = arith.addf %289, %305 : vector<8x128xf32>
    %307 = math.tanh %306 : vector<8x128xf32>
    %cst_94 = arith.constant 1.000000e+00 : f32
    %308 = vector.broadcast %cst_94 : f32 to vector<8x128xf32>
    %309 = arith.subf %308, %304 : vector<8x128xf32>
    %310 = arith.mulf %309, %307 : vector<8x128xf32>
    %311 = arith.mulf %304, %269 : vector<8x128xf32>
    %312 = arith.addf %310, %311 : vector<8x128xf32>
    %c0_95 = arith.constant 0 : index
    %c0_96 = arith.constant 0 : index
    %313 = vector.load %arg18[%c0_95, %c0_96] : memref<64x128xf32, #tpu.memory_space<vmem>>, vector<8x128xf32>
    tpu.vector_store %arg18[%c0_95, %c0_96], %312 {strides = array<i32>} : memref<64x128xf32, #tpu.memory_space<vmem>>, vector<8x128xf32>,
    %c8_97 = arith.constant 8 : index
    %c0_98 = arith.constant 0 : index
    %314 = vector.load %arg17[%c8_97, %c0_98] : memref<64x384xf32, #tpu.memory_space<vmem>>, vector<8x384xf32>
    %315 = arith.truncf %312 : vector<8x128xf32> to vector<8x128xbf16>
    %c0_99 = arith.constant 0 : index
    %c0_100 = arith.constant 0 : index
    %316 = vector.load %arg20[%c0_99, %c0_100] : memref<128x384xbf16, #tpu.memory_space<vmem>>, vector<128x384xbf16>
    %cst_101 = arith.constant dense<0.000000e+00> : vector<8x384xf32>
    %317 = tpu.matmul %315, %316, %cst_101 {dimension_numbers = #tpu.dot_dimension_numbers<[1], [0], [0], [1], [0, 0, 1, 1], [], []>} : vector<8x128xbf16>, vector<128x384xbf16>, vector<8x384xf32> -> vector<8x384xf32>
    %318 = arith.addf %317, %281 : vector<8x384xf32>
    %319 = vector.extract_strided_slice %314 {offsets = [0, 0], sizes = [8, 128], strides = [1, 1]} : vector<8x384xf32> to vector<8x128xf32>
    %320 = vector.extract_strided_slice %314 {offsets = [0, 128], sizes = [8, 128], strides = [1, 1]} : vector<8x384xf32> to vector<8x128xf32>
    %321 = vector.extract_strided_slice %314 {offsets = [0, 256], sizes = [8, 128], strides = [1, 1]} : vector<8x384xf32> to vector<8x128xf32>
    %322 = vector.extract_strided_slice %318 {offsets = [0, 0], sizes = [8, 128], strides = [1, 1]} : vector<8x384xf32> to vector<8x128xf32>
    %323 = vector.extract_strided_slice %318 {offsets = [0, 128], sizes = [8, 128], strides = [1, 1]} : vector<8x384xf32> to vector<8x128xf32>
    %324 = vector.extract_strided_slice %318 {offsets = [0, 256], sizes = [8, 128], strides = [1, 1]} : vector<8x384xf32> to vector<8x128xf32>
    %325 = arith.addf %319, %322 : vector<8x128xf32>
    %326 = arith.negf %325 : vector<8x128xf32>
    %327 = math.exp %326 : vector<8x128xf32>
    %cst_102 = arith.constant 1.000000e+00 : f32
    %328 = vector.broadcast %cst_102 : f32 to vector<8x128xf32>
    %329 = arith.addf %328, %327 : vector<8x128xf32>
    %330 = arith.divf %328, %329 : vector<8x128xf32>
    %331 = arith.addf %320, %323 : vector<8x128xf32>
    %332 = arith.negf %331 : vector<8x128xf32>
    %333 = math.exp %332 : vector<8x128xf32>
    %cst_103 = arith.constant 1.000000e+00 : f32
    %334 = vector.broadcast %cst_103 : f32 to vector<8x128xf32>
    %335 = arith.addf %334, %333 : vector<8x128xf32>
    %336 = arith.divf %334, %335 : vector<8x128xf32>
    %337 = arith.mulf %330, %324 : vector<8x128xf32>
    %338 = arith.addf %321, %337 : vector<8x128xf32>
    %339 = math.tanh %338 : vector<8x128xf32>
    %cst_104 = arith.constant 1.000000e+00 : f32
    %340 = vector.broadcast %cst_104 : f32 to vector<8x128xf32>
    %341 = arith.subf %340, %336 : vector<8x128xf32>
    %342 = arith.mulf %341, %339 : vector<8x128xf32>
    %343 = arith.mulf %336, %312 : vector<8x128xf32>
    %344 = arith.addf %342, %343 : vector<8x128xf32>
    %c8_105 = arith.constant 8 : index
    %c0_106 = arith.constant 0 : index
    %345 = vector.load %arg18[%c8_105, %c0_106] : memref<64x128xf32, #tpu.memory_space<vmem>>, vector<8x128xf32>
    tpu.vector_store %arg18[%c8_105, %c0_106], %344 {strides = array<i32>} : memref<64x128xf32, #tpu.memory_space<vmem>>, vector<8x128xf32>,
    %c16_107 = arith.constant 16 : index
    %c0_108 = arith.constant 0 : index
    %346 = vector.load %arg17[%c16_107, %c0_108] : memref<64x384xf32, #tpu.memory_space<vmem>>, vector<8x384xf32>
    %347 = arith.truncf %344 : vector<8x128xf32> to vector<8x128xbf16>
    %c0_109 = arith.constant 0 : index
    %c0_110 = arith.constant 0 : index
    %348 = vector.load %arg20[%c0_109, %c0_110] : memref<128x384xbf16, #tpu.memory_space<vmem>>, vector<128x384xbf16>
    %cst_111 = arith.constant dense<0.000000e+00> : vector<8x384xf32>
    %349 = tpu.matmul %347, %348, %cst_111 {dimension_numbers = #tpu.dot_dimension_numbers<[1], [0], [0], [1], [0, 0, 1, 1], [], []>} : vector<8x128xbf16>, vector<128x384xbf16>, vector<8x384xf32> -> vector<8x384xf32>
    %350 = arith.addf %349, %281 : vector<8x384xf32>
    %351 = vector.extract_strided_slice %346 {offsets = [0, 0], sizes = [8, 128], strides = [1, 1]} : vector<8x384xf32> to vector<8x128xf32>
    %352 = vector.extract_strided_slice %346 {offsets = [0, 128], sizes = [8, 128], strides = [1, 1]} : vector<8x384xf32> to vector<8x128xf32>
    %353 = vector.extract_strided_slice %346 {offsets = [0, 256], sizes = [8, 128], strides = [1, 1]} : vector<8x384xf32> to vector<8x128xf32>
    %354 = vector.extract_strided_slice %350 {offsets = [0, 0], sizes = [8, 128], strides = [1, 1]} : vector<8x384xf32> to vector<8x128xf32>
    %355 = vector.extract_strided_slice %350 {offsets = [0, 128], sizes = [8, 128], strides = [1, 1]} : vector<8x384xf32> to vector<8x128xf32>
    %356 = vector.extract_strided_slice %350 {offsets = [0, 256], sizes = [8, 128], strides = [1, 1]} : vector<8x384xf32> to vector<8x128xf32>
    %357 = arith.addf %351, %354 : vector<8x128xf32>
    %358 = arith.negf %357 : vector<8x128xf32>
    %359 = math.exp %358 : vector<8x128xf32>
    %cst_112 = arith.constant 1.000000e+00 : f32
    %360 = vector.broadcast %cst_112 : f32 to vector<8x128xf32>
    %361 = arith.addf %360, %359 : vector<8x128xf32>
    %362 = arith.divf %360, %361 : vector<8x128xf32>
    %363 = arith.addf %352, %355 : vector<8x128xf32>
    %364 = arith.negf %363 : vector<8x128xf32>
    %365 = math.exp %364 : vector<8x128xf32>
    %cst_113 = arith.constant 1.000000e+00 : f32
    %366 = vector.broadcast %cst_113 : f32 to vector<8x128xf32>
    %367 = arith.addf %366, %365 : vector<8x128xf32>
    %368 = arith.divf %366, %367 : vector<8x128xf32>
    %369 = arith.mulf %362, %356 : vector<8x128xf32>
    %370 = arith.addf %353, %369 : vector<8x128xf32>
    %371 = math.tanh %370 : vector<8x128xf32>
    %cst_114 = arith.constant 1.000000e+00 : f32
    %372 = vector.broadcast %cst_114 : f32 to vector<8x128xf32>
    %373 = arith.subf %372, %368 : vector<8x128xf32>
    %374 = arith.mulf %373, %371 : vector<8x128xf32>
    %375 = arith.mulf %368, %344 : vector<8x128xf32>
    %376 = arith.addf %374, %375 : vector<8x128xf32>
    %c16_115 = arith.constant 16 : index
    %c0_116 = arith.constant 0 : index
    %377 = vector.load %arg18[%c16_115, %c0_116] : memref<64x128xf32, #tpu.memory_space<vmem>>, vector<8x128xf32>
    tpu.vector_store %arg18[%c16_115, %c0_116], %376 {strides = array<i32>} : memref<64x128xf32, #tpu.memory_space<vmem>>, vector<8x128xf32>,
    %c24_117 = arith.constant 24 : index
    %c0_118 = arith.constant 0 : index
    %378 = vector.load %arg17[%c24_117, %c0_118] : memref<64x384xf32, #tpu.memory_space<vmem>>, vector<8x384xf32>
    %379 = arith.truncf %376 : vector<8x128xf32> to vector<8x128xbf16>
    %c0_119 = arith.constant 0 : index
    %c0_120 = arith.constant 0 : index
    %380 = vector.load %arg20[%c0_119, %c0_120] : memref<128x384xbf16, #tpu.memory_space<vmem>>, vector<128x384xbf16>
    %cst_121 = arith.constant dense<0.000000e+00> : vector<8x384xf32>
    %381 = tpu.matmul %379, %380, %cst_121 {dimension_numbers = #tpu.dot_dimension_numbers<[1], [0], [0], [1], [0, 0, 1, 1], [], []>} : vector<8x128xbf16>, vector<128x384xbf16>, vector<8x384xf32> -> vector<8x384xf32>
    %382 = arith.addf %381, %281 : vector<8x384xf32>
    %383 = vector.extract_strided_slice %378 {offsets = [0, 0], sizes = [8, 128], strides = [1, 1]} : vector<8x384xf32> to vector<8x128xf32>
    %384 = vector.extract_strided_slice %378 {offsets = [0, 128], sizes = [8, 128], strides = [1, 1]} : vector<8x384xf32> to vector<8x128xf32>
    %385 = vector.extract_strided_slice %378 {offsets = [0, 256], sizes = [8, 128], strides = [1, 1]} : vector<8x384xf32> to vector<8x128xf32>
    %386 = vector.extract_strided_slice %382 {offsets = [0, 0], sizes = [8, 128], strides = [1, 1]} : vector<8x384xf32> to vector<8x128xf32>
    %387 = vector.extract_strided_slice %382 {offsets = [0, 128], sizes = [8, 128], strides = [1, 1]} : vector<8x384xf32> to vector<8x128xf32>
    %388 = vector.extract_strided_slice %382 {offsets = [0, 256], sizes = [8, 128], strides = [1, 1]} : vector<8x384xf32> to vector<8x128xf32>
    %389 = arith.addf %383, %386 : vector<8x128xf32>
    %390 = arith.negf %389 : vector<8x128xf32>
    %391 = math.exp %390 : vector<8x128xf32>
    %cst_122 = arith.constant 1.000000e+00 : f32
    %392 = vector.broadcast %cst_122 : f32 to vector<8x128xf32>
    %393 = arith.addf %392, %391 : vector<8x128xf32>
    %394 = arith.divf %392, %393 : vector<8x128xf32>
    %395 = arith.addf %384, %387 : vector<8x128xf32>
    %396 = arith.negf %395 : vector<8x128xf32>
    %397 = math.exp %396 : vector<8x128xf32>
    %cst_123 = arith.constant 1.000000e+00 : f32
    %398 = vector.broadcast %cst_123 : f32 to vector<8x128xf32>
    %399 = arith.addf %398, %397 : vector<8x128xf32>
    %400 = arith.divf %398, %399 : vector<8x128xf32>
    %401 = arith.mulf %394, %388 : vector<8x128xf32>
    %402 = arith.addf %385, %401 : vector<8x128xf32>
    %403 = math.tanh %402 : vector<8x128xf32>
    %cst_124 = arith.constant 1.000000e+00 : f32
    %404 = vector.broadcast %cst_124 : f32 to vector<8x128xf32>
    %405 = arith.subf %404, %400 : vector<8x128xf32>
    %406 = arith.mulf %405, %403 : vector<8x128xf32>
    %407 = arith.mulf %400, %376 : vector<8x128xf32>
    %408 = arith.addf %406, %407 : vector<8x128xf32>
    %c24_125 = arith.constant 24 : index
    %c0_126 = arith.constant 0 : index
    %409 = vector.load %arg18[%c24_125, %c0_126] : memref<64x128xf32, #tpu.memory_space<vmem>>, vector<8x128xf32>
    tpu.vector_store %arg18[%c24_125, %c0_126], %408 {strides = array<i32>} : memref<64x128xf32, #tpu.memory_space<vmem>>, vector<8x128xf32>,
    %c32_127 = arith.constant 32 : index
    %c0_128 = arith.constant 0 : index
    %410 = vector.load %arg17[%c32_127, %c0_128] : memref<64x384xf32, #tpu.memory_space<vmem>>, vector<8x384xf32>
    %411 = arith.truncf %408 : vector<8x128xf32> to vector<8x128xbf16>
    %c0_129 = arith.constant 0 : index
    %c0_130 = arith.constant 0 : index
    %412 = vector.load %arg20[%c0_129, %c0_130] : memref<128x384xbf16, #tpu.memory_space<vmem>>, vector<128x384xbf16>
    %cst_131 = arith.constant dense<0.000000e+00> : vector<8x384xf32>
    %413 = tpu.matmul %411, %412, %cst_131 {dimension_numbers = #tpu.dot_dimension_numbers<[1], [0], [0], [1], [0, 0, 1, 1], [], []>} : vector<8x128xbf16>, vector<128x384xbf16>, vector<8x384xf32> -> vector<8x384xf32>
    %414 = arith.addf %413, %281 : vector<8x384xf32>
    %415 = vector.extract_strided_slice %410 {offsets = [0, 0], sizes = [8, 128], strides = [1, 1]} : vector<8x384xf32> to vector<8x128xf32>
    %416 = vector.extract_strided_slice %410 {offsets = [0, 128], sizes = [8, 128], strides = [1, 1]} : vector<8x384xf32> to vector<8x128xf32>
    %417 = vector.extract_strided_slice %410 {offsets = [0, 256], sizes = [8, 128], strides = [1, 1]} : vector<8x384xf32> to vector<8x128xf32>
    %418 = vector.extract_strided_slice %414 {offsets = [0, 0], sizes = [8, 128], strides = [1, 1]} : vector<8x384xf32> to vector<8x128xf32>
    %419 = vector.extract_strided_slice %414 {offsets = [0, 128], sizes = [8, 128], strides = [1, 1]} : vector<8x384xf32> to vector<8x128xf32>
    %420 = vector.extract_strided_slice %414 {offsets = [0, 256], sizes = [8, 128], strides = [1, 1]} : vector<8x384xf32> to vector<8x128xf32>
    %421 = arith.addf %415, %418 : vector<8x128xf32>
    %422 = arith.negf %421 : vector<8x128xf32>
    %423 = math.exp %422 : vector<8x128xf32>
    %cst_132 = arith.constant 1.000000e+00 : f32
    %424 = vector.broadcast %cst_132 : f32 to vector<8x128xf32>
    %425 = arith.addf %424, %423 : vector<8x128xf32>
    %426 = arith.divf %424, %425 : vector<8x128xf32>
    %427 = arith.addf %416, %419 : vector<8x128xf32>
    %428 = arith.negf %427 : vector<8x128xf32>
    %429 = math.exp %428 : vector<8x128xf32>
    %cst_133 = arith.constant 1.000000e+00 : f32
    %430 = vector.broadcast %cst_133 : f32 to vector<8x128xf32>
    %431 = arith.addf %430, %429 : vector<8x128xf32>
    %432 = arith.divf %430, %431 : vector<8x128xf32>
    %433 = arith.mulf %426, %420 : vector<8x128xf32>
    %434 = arith.addf %417, %433 : vector<8x128xf32>
    %435 = math.tanh %434 : vector<8x128xf32>
    %cst_134 = arith.constant 1.000000e+00 : f32
    %436 = vector.broadcast %cst_134 : f32 to vector<8x128xf32>
    %437 = arith.subf %436, %432 : vector<8x128xf32>
    %438 = arith.mulf %437, %435 : vector<8x128xf32>
    %439 = arith.mulf %432, %408 : vector<8x128xf32>
    %440 = arith.addf %438, %439 : vector<8x128xf32>
    %c32_135 = arith.constant 32 : index
    %c0_136 = arith.constant 0 : index
    %441 = vector.load %arg18[%c32_135, %c0_136] : memref<64x128xf32, #tpu.memory_space<vmem>>, vector<8x128xf32>
    tpu.vector_store %arg18[%c32_135, %c0_136], %440 {strides = array<i32>} : memref<64x128xf32, #tpu.memory_space<vmem>>, vector<8x128xf32>,
    %c40_137 = arith.constant 40 : index
    %c0_138 = arith.constant 0 : index
    %442 = vector.load %arg17[%c40_137, %c0_138] : memref<64x384xf32, #tpu.memory_space<vmem>>, vector<8x384xf32>
    %443 = arith.truncf %440 : vector<8x128xf32> to vector<8x128xbf16>
    %c0_139 = arith.constant 0 : index
    %c0_140 = arith.constant 0 : index
    %444 = vector.load %arg20[%c0_139, %c0_140] : memref<128x384xbf16, #tpu.memory_space<vmem>>, vector<128x384xbf16>
    %cst_141 = arith.constant dense<0.000000e+00> : vector<8x384xf32>
    %445 = tpu.matmul %443, %444, %cst_141 {dimension_numbers = #tpu.dot_dimension_numbers<[1], [0], [0], [1], [0, 0, 1, 1], [], []>} : vector<8x128xbf16>, vector<128x384xbf16>, vector<8x384xf32> -> vector<8x384xf32>
    %446 = arith.addf %445, %281 : vector<8x384xf32>
    %447 = vector.extract_strided_slice %442 {offsets = [0, 0], sizes = [8, 128], strides = [1, 1]} : vector<8x384xf32> to vector<8x128xf32>
    %448 = vector.extract_strided_slice %442 {offsets = [0, 128], sizes = [8, 128], strides = [1, 1]} : vector<8x384xf32> to vector<8x128xf32>
    %449 = vector.extract_strided_slice %442 {offsets = [0, 256], sizes = [8, 128], strides = [1, 1]} : vector<8x384xf32> to vector<8x128xf32>
    %450 = vector.extract_strided_slice %446 {offsets = [0, 0], sizes = [8, 128], strides = [1, 1]} : vector<8x384xf32> to vector<8x128xf32>
    %451 = vector.extract_strided_slice %446 {offsets = [0, 128], sizes = [8, 128], strides = [1, 1]} : vector<8x384xf32> to vector<8x128xf32>
    %452 = vector.extract_strided_slice %446 {offsets = [0, 256], sizes = [8, 128], strides = [1, 1]} : vector<8x384xf32> to vector<8x128xf32>
    %453 = arith.addf %447, %450 : vector<8x128xf32>
    %454 = arith.negf %453 : vector<8x128xf32>
    %455 = math.exp %454 : vector<8x128xf32>
    %cst_142 = arith.constant 1.000000e+00 : f32
    %456 = vector.broadcast %cst_142 : f32 to vector<8x128xf32>
    %457 = arith.addf %456, %455 : vector<8x128xf32>
    %458 = arith.divf %456, %457 : vector<8x128xf32>
    %459 = arith.addf %448, %451 : vector<8x128xf32>
    %460 = arith.negf %459 : vector<8x128xf32>
    %461 = math.exp %460 : vector<8x128xf32>
    %cst_143 = arith.constant 1.000000e+00 : f32
    %462 = vector.broadcast %cst_143 : f32 to vector<8x128xf32>
    %463 = arith.addf %462, %461 : vector<8x128xf32>
    %464 = arith.divf %462, %463 : vector<8x128xf32>
    %465 = arith.mulf %458, %452 : vector<8x128xf32>
    %466 = arith.addf %449, %465 : vector<8x128xf32>
    %467 = math.tanh %466 : vector<8x128xf32>
    %cst_144 = arith.constant 1.000000e+00 : f32
    %468 = vector.broadcast %cst_144 : f32 to vector<8x128xf32>
    %469 = arith.subf %468, %464 : vector<8x128xf32>
    %470 = arith.mulf %469, %467 : vector<8x128xf32>
    %471 = arith.mulf %464, %440 : vector<8x128xf32>
    %472 = arith.addf %470, %471 : vector<8x128xf32>
    %c40_145 = arith.constant 40 : index
    %c0_146 = arith.constant 0 : index
    %473 = vector.load %arg18[%c40_145, %c0_146] : memref<64x128xf32, #tpu.memory_space<vmem>>, vector<8x128xf32>
    tpu.vector_store %arg18[%c40_145, %c0_146], %472 {strides = array<i32>} : memref<64x128xf32, #tpu.memory_space<vmem>>, vector<8x128xf32>,
    %c48_147 = arith.constant 48 : index
    %c0_148 = arith.constant 0 : index
    %474 = vector.load %arg17[%c48_147, %c0_148] : memref<64x384xf32, #tpu.memory_space<vmem>>, vector<8x384xf32>
    %475 = arith.truncf %472 : vector<8x128xf32> to vector<8x128xbf16>
    %c0_149 = arith.constant 0 : index
    %c0_150 = arith.constant 0 : index
    %476 = vector.load %arg20[%c0_149, %c0_150] : memref<128x384xbf16, #tpu.memory_space<vmem>>, vector<128x384xbf16>
    %cst_151 = arith.constant dense<0.000000e+00> : vector<8x384xf32>
    %477 = tpu.matmul %475, %476, %cst_151 {dimension_numbers = #tpu.dot_dimension_numbers<[1], [0], [0], [1], [0, 0, 1, 1], [], []>} : vector<8x128xbf16>, vector<128x384xbf16>, vector<8x384xf32> -> vector<8x384xf32>
    %478 = arith.addf %477, %281 : vector<8x384xf32>
    %479 = vector.extract_strided_slice %474 {offsets = [0, 0], sizes = [8, 128], strides = [1, 1]} : vector<8x384xf32> to vector<8x128xf32>
    %480 = vector.extract_strided_slice %474 {offsets = [0, 128], sizes = [8, 128], strides = [1, 1]} : vector<8x384xf32> to vector<8x128xf32>
    %481 = vector.extract_strided_slice %474 {offsets = [0, 256], sizes = [8, 128], strides = [1, 1]} : vector<8x384xf32> to vector<8x128xf32>
    %482 = vector.extract_strided_slice %478 {offsets = [0, 0], sizes = [8, 128], strides = [1, 1]} : vector<8x384xf32> to vector<8x128xf32>
    %483 = vector.extract_strided_slice %478 {offsets = [0, 128], sizes = [8, 128], strides = [1, 1]} : vector<8x384xf32> to vector<8x128xf32>
    %484 = vector.extract_strided_slice %478 {offsets = [0, 256], sizes = [8, 128], strides = [1, 1]} : vector<8x384xf32> to vector<8x128xf32>
    %485 = arith.addf %479, %482 : vector<8x128xf32>
    %486 = arith.negf %485 : vector<8x128xf32>
    %487 = math.exp %486 : vector<8x128xf32>
    %cst_152 = arith.constant 1.000000e+00 : f32
    %488 = vector.broadcast %cst_152 : f32 to vector<8x128xf32>
    %489 = arith.addf %488, %487 : vector<8x128xf32>
    %490 = arith.divf %488, %489 : vector<8x128xf32>
    %491 = arith.addf %480, %483 : vector<8x128xf32>
    %492 = arith.negf %491 : vector<8x128xf32>
    %493 = math.exp %492 : vector<8x128xf32>
    %cst_153 = arith.constant 1.000000e+00 : f32
    %494 = vector.broadcast %cst_153 : f32 to vector<8x128xf32>
    %495 = arith.addf %494, %493 : vector<8x128xf32>
    %496 = arith.divf %494, %495 : vector<8x128xf32>
    %497 = arith.mulf %490, %484 : vector<8x128xf32>
    %498 = arith.addf %481, %497 : vector<8x128xf32>
    %499 = math.tanh %498 : vector<8x128xf32>
    %cst_154 = arith.constant 1.000000e+00 : f32
    %500 = vector.broadcast %cst_154 : f32 to vector<8x128xf32>
    %501 = arith.subf %500, %496 : vector<8x128xf32>
    %502 = arith.mulf %501, %499 : vector<8x128xf32>
    %503 = arith.mulf %496, %472 : vector<8x128xf32>
    %504 = arith.addf %502, %503 : vector<8x128xf32>
    %c48_155 = arith.constant 48 : index
    %c0_156 = arith.constant 0 : index
    %505 = vector.load %arg18[%c48_155, %c0_156] : memref<64x128xf32, #tpu.memory_space<vmem>>, vector<8x128xf32>
    tpu.vector_store %arg18[%c48_155, %c0_156], %504 {strides = array<i32>} : memref<64x128xf32, #tpu.memory_space<vmem>>, vector<8x128xf32>,
    %c56_157 = arith.constant 56 : index
    %c0_158 = arith.constant 0 : index
    %506 = vector.load %arg17[%c56_157, %c0_158] : memref<64x384xf32, #tpu.memory_space<vmem>>, vector<8x384xf32>
    %507 = arith.truncf %504 : vector<8x128xf32> to vector<8x128xbf16>
    %c0_159 = arith.constant 0 : index
    %c0_160 = arith.constant 0 : index
    %508 = vector.load %arg20[%c0_159, %c0_160] : memref<128x384xbf16, #tpu.memory_space<vmem>>, vector<128x384xbf16>
    %cst_161 = arith.constant dense<0.000000e+00> : vector<8x384xf32>
    %509 = tpu.matmul %507, %508, %cst_161 {dimension_numbers = #tpu.dot_dimension_numbers<[1], [0], [0], [1], [0, 0, 1, 1], [], []>} : vector<8x128xbf16>, vector<128x384xbf16>, vector<8x384xf32> -> vector<8x384xf32>
    %510 = arith.addf %509, %281 : vector<8x384xf32>
    %511 = vector.extract_strided_slice %506 {offsets = [0, 0], sizes = [8, 128], strides = [1, 1]} : vector<8x384xf32> to vector<8x128xf32>
    %512 = vector.extract_strided_slice %506 {offsets = [0, 128], sizes = [8, 128], strides = [1, 1]} : vector<8x384xf32> to vector<8x128xf32>
    %513 = vector.extract_strided_slice %506 {offsets = [0, 256], sizes = [8, 128], strides = [1, 1]} : vector<8x384xf32> to vector<8x128xf32>
    %514 = vector.extract_strided_slice %510 {offsets = [0, 0], sizes = [8, 128], strides = [1, 1]} : vector<8x384xf32> to vector<8x128xf32>
    %515 = vector.extract_strided_slice %510 {offsets = [0, 128], sizes = [8, 128], strides = [1, 1]} : vector<8x384xf32> to vector<8x128xf32>
    %516 = vector.extract_strided_slice %510 {offsets = [0, 256], sizes = [8, 128], strides = [1, 1]} : vector<8x384xf32> to vector<8x128xf32>
    %517 = arith.addf %511, %514 : vector<8x128xf32>
    %518 = arith.negf %517 : vector<8x128xf32>
    %519 = math.exp %518 : vector<8x128xf32>
    %cst_162 = arith.constant 1.000000e+00 : f32
    %520 = vector.broadcast %cst_162 : f32 to vector<8x128xf32>
    %521 = arith.addf %520, %519 : vector<8x128xf32>
    %522 = arith.divf %520, %521 : vector<8x128xf32>
    %523 = arith.addf %512, %515 : vector<8x128xf32>
    %524 = arith.negf %523 : vector<8x128xf32>
    %525 = math.exp %524 : vector<8x128xf32>
    %cst_163 = arith.constant 1.000000e+00 : f32
    %526 = vector.broadcast %cst_163 : f32 to vector<8x128xf32>
    %527 = arith.addf %526, %525 : vector<8x128xf32>
    %528 = arith.divf %526, %527 : vector<8x128xf32>
    %529 = arith.mulf %522, %516 : vector<8x128xf32>
    %530 = arith.addf %513, %529 : vector<8x128xf32>
    %531 = math.tanh %530 : vector<8x128xf32>
    %cst_164 = arith.constant 1.000000e+00 : f32
    %532 = vector.broadcast %cst_164 : f32 to vector<8x128xf32>
    %533 = arith.subf %532, %528 : vector<8x128xf32>
    %534 = arith.mulf %533, %531 : vector<8x128xf32>
    %535 = arith.mulf %528, %504 : vector<8x128xf32>
    %536 = arith.addf %534, %535 : vector<8x128xf32>
    %c56_165 = arith.constant 56 : index
    %c0_166 = arith.constant 0 : index
    %537 = vector.load %arg18[%c56_165, %c0_166] : memref<64x128xf32, #tpu.memory_space<vmem>>, vector<8x128xf32>
    tpu.vector_store %arg18[%c56_165, %c0_166], %536 {strides = array<i32>} : memref<64x128xf32, #tpu.memory_space<vmem>>, vector<8x128xf32>,
    %c2_i32_167 = arith.constant 2 : i32
    %538 = tpu.memref_slice %arg22[%c2_i32_167] : memref<3x!tpu.dma_semaphore, #tpu.memory_space<semaphore_mem>> -> memref<1x!tpu.dma_semaphore, #tpu.memory_space<semaphore_mem>>
    %539 = tpu.memref_squeeze %538 : memref<1x!tpu.dma_semaphore, #tpu.memory_space<semaphore_mem>> -> memref<!tpu.dma_semaphore, #tpu.memory_space<semaphore_mem>>
    tpu.wait_dma2 semaphore(%539 : memref<!tpu.dma_semaphore, #tpu.memory_space<semaphore_mem>>) src(%arg13 : memref<128x128xbf16, #tpu.memory_space<any>>) dst(%arg21 : memref<128x128xbf16, #tpu.memory_space<vmem>>)
    %c0_168 = arith.constant 0 : index
    %c0_169 = arith.constant 0 : index
    %540 = vector.load %arg18[%c0_168, %c0_169] : memref<64x128xf32, #tpu.memory_space<vmem>>, vector<64x128xf32>
    %541 = arith.truncf %540 : vector<64x128xf32> to vector<64x128xbf16>
    %c0_170 = arith.constant 0 : index
    %c0_171 = arith.constant 0 : index
    %542 = vector.load %arg21[%c0_170, %c0_171] : memref<128x128xbf16, #tpu.memory_space<vmem>>, vector<128x128xbf16>
    %cst_172 = arith.constant dense<0.000000e+00> : vector<64x128xf32>
    %543 = tpu.matmul %541, %542, %cst_172 {dimension_numbers = #tpu.dot_dimension_numbers<[1], [0], [0], [1], [0, 0, 1, 1], [], []>} : vector<64x128xbf16>, vector<128x128xbf16>, vector<64x128xf32> -> vector<64x128xf32>
    %c0_173 = arith.constant 0 : index
    %c0_174 = arith.constant 0 : index
    %544 = vector.load %arg14[%c0_173, %c0_174] : memref<1x128xf32, #tpu.memory_space<vmem>>, vector<1x128xf32>
    %545 = vector.broadcast %544 : vector<1x128xf32> to vector<64x128xf32>
    %546 = arith.addf %543, %545 : vector<64x128xf32>
    %c0_175 = arith.constant 0 : index
    %c0_176 = arith.constant 0 : index
    %547 = vector.load %arg15[%c0_175, %c0_176] : memref<64x128xf32, #tpu.memory_space<vmem>>, vector<64x128xf32>
    tpu.vector_store %arg15[%c0_175, %c0_176], %546 {strides = array<i32>} : memref<64x128xf32, #tpu.memory_space<vmem>>, vector<64x128xf32>,
    %c0_177 = arith.constant 0 : index
    %c0_178 = arith.constant 0 : index
    %548 = vector.load %arg16[%c0_177, %c0_178] : memref<8x128xf32, #tpu.memory_space<vmem>>, vector<8x128xf32>
    tpu.vector_store %arg16[%c0_177, %c0_178], %536 {strides = array<i32>} : memref<8x128xf32, #tpu.memory_space<vmem>>, vector<8x128xf32>,
    return
  }
}

</mosaic_0001>

<llo_original>
// kernel: seq2seq_forward.1
$region0: #{seq2seq_forward.1}
  #allocation0 [shape = 'u32[]', space=smem, size = 0x4, offset = 0x4, fixed_abs, tag = 'smem constant byte address 0x4 - core index']
  #allocation1 [shape = 'u32[144,128]{1,0:T(1,128)}', space=vmem, size = 0x12000, scoped, tag = 'internal scratch']
  #allocation2 [shape = 'f32[64,384]{1,0:T(8,128)}', space=vmem, size = 0x18000, scoped, tag = 'scratch operand']
  #allocation3 [shape = 'f32[64,128]{1,0:T(8,128)}', space=vmem, size = 0x8000, scoped, tag = 'scratch operand']
  #allocation4 [shape = 'bf16[128,384]{1,0:T(8,128)(2,1)}', space=vmem, size = 0x18000, scoped, tag = 'scratch operand']
  #allocation5 [shape = 'bf16[128,384]{1,0:T(8,128)(2,1)}', space=vmem, size = 0x18000, scoped, tag = 'scratch operand']
  #allocation6 [shape = 'bf16[128,128]{1,0:T(8,128)(2,1)}', space=vmem, size = 0x8000, scoped, tag = 'scratch operand']
  #allocation7 [shape = 's32[3]{0}', space=sflag, size = 0xc, scoped, tag = 'scratch operand']
  #allocation13 [shape = 's32[]', space=sflag, size = 0x4, offset = 0, fixed_abs, tag = 'sflag constant byte address 0x0 - dummy sync flag']
  #allocation14 [shape = 's32[]', space=sflag, size = 0x4, offset = 0, fixed_abs, tag = 'sflag constant byte address 0x0 - dummy sync flag']
  #allocation15 [shape = 's32[]', space=sflag, size = 0x4, offset = 0, fixed_abs, tag = 'sflag constant byte address 0x0 - dummy sync flag']
  %s0 = inlined_call_operand.vmem [shape: bf16[64,128], index: 0, kind: input, shape index: {}]
  %s1 = inlined_call_operand.vmem [shape: bf16[64,128], index: 1, kind: input, shape index: {}]
  %s2 = inlined_call_operand.vmem [shape: f32[8,128], index: 2, kind: input, shape index: {}]
  %s3 = inlined_call_operand.hbm [shape: bf16[128,384], index: 3, kind: input, shape index: {}]
  %s4 = inlined_call_operand.hbm [shape: bf16[128,384], index: 4, kind: input, shape index: {}]
  %s5 = inlined_call_operand.vmem [shape: f32[1,384], index: 5, kind: input, shape index: {}]
  %s6 = inlined_call_operand.hbm [shape: f32[8,384], index: 6, kind: input, shape index: {}]
  %s7 = inlined_call_operand.vmem [shape: f32[128,128], index: 7, kind: input, shape index: {}]
  %s8 = inlined_call_operand.vmem [shape: f32[1,128], index: 8, kind: input, shape index: {}]
  %s9 = inlined_call_operand.vmem [shape: bf16[128,384], index: 9, kind: input, shape index: {}]
  %s10 = inlined_call_operand.vmem [shape: bf16[128,384], index: 10, kind: input, shape index: {}]
  %s11 = inlined_call_operand.vmem [shape: f32[1,384], index: 11, kind: input, shape index: {}]
  %s12 = inlined_call_operand.vmem [shape: f32[8,384], index: 12, kind: input, shape index: {}]
  %s13 = inlined_call_operand.vmem [shape: bf16[128,128], index: 13, kind: input, shape index: {}]
  %s14 = inlined_call_operand.vmem [shape: f32[1,128], index: 14, kind: input, shape index: {}]
  %s15 = inlined_call_operand.vmem [shape: f32[64,128], index: 15, kind: output, shape index: {0}]
  %s16 = inlined_call_operand.vmem [shape: f32[8,128], index: 16, kind: output, shape index: {1}]
  %17 = xla_tuple %s15, %s16
  %s18 = sld [smem:[#allocation0]]
  $region180: #{seq2seq_forward.1} parent=0
    _
  %s20 = ssub.s32 1, %s18
  %s21 = scalar_select 0, %s20, %s18
  $region1: #{seq2seq_forward.1} parent=0
    #allocation8 [shape = 'u8[98304]{0}', space=vmem, size = 0x18000, scoped, tag = 'input window, operand 3, single buffered']
    #allocation9 [shape = 's32[1]{0}', space=sflag, size = 0x4, scoped, tag = 'scoped memory for seq2seq_forward.1']
    #allocation10 [shape = 'u8[98304]{0}', space=vmem, size = 0x18000, scoped, tag = 'input window, operand 4, single buffered']
    #allocation11 [shape = 's32[1]{0}', space=sflag, size = 0x4, scoped, tag = 'scoped memory for seq2seq_forward.1']
    #allocation12 [shape = 'u8[12288]{0}', space=vmem, size = 0x3000, scoped, tag = 'input window, operand 6, single buffered']
    %22 = vsyncpa [#allocation9], 0
    %23 = vsyncpa [#allocation11], 0
    // Predicated region
    $region2: #{seq2seq_forward.1} parent=1 // pred_check
      _
    $region3: #{seq2seq_forward.1} parent=1 // pred_check_branch
      %25 = sbr.rel (0) target = $region5
    $region4: #{seq2seq_forward.1} parent=1 // pred_region
      _
    $region5: #{seq2seq_forward.1} parent=1 // pred_fallthru
      _
    // Predicated region
    $region6: #{seq2seq_forward.1} parent=1 // pred_check
      _
    $region7: #{seq2seq_forward.1} parent=1 // pred_check_branch
      %27 = sbr.rel (0) target = $region9
    $region8: #{seq2seq_forward.1} parent=1 // pred_region
      _
    $region9: #{seq2seq_forward.1} parent=1 // pred_fallthru
      _
    // Predicated region
    $region10: #{seq2seq_forward.1} parent=1 // pred_check
      _
    $region11: #{seq2seq_forward.1} parent=1 // pred_check_branch
      %29 = sbr.rel (0) target = $region13
    $region12: #{seq2seq_forward.1} parent=1 // pred_region
      _
    $region13: #{seq2seq_forward.1} parent=1 // pred_fallthru
      _
    // Predicated region
    $region14: #{seq2seq_forward.1} parent=1 // pred_check
      _
    $region15: #{seq2seq_forward.1} parent=1 // pred_check_branch
      %31 = sbr.rel (0) target = $region17
    $region16: #{seq2seq_forward.1} parent=1 // pred_region
      %s33 = ssub.s32 3072, 3072
      %34 = vsyncadd [#allocation9], %s33
      %s35 = sshll.u32 [#allocation8], 4
      %s36 = int_to_ptr.vmem [resolvable:$true] %s35
      %41 = dma.hbm_to_vmem [thread:$0]  %s3, 3072, %s36, [#allocation9], 192, 192, 12
    $region17: #{seq2seq_forward.1} parent=1 // pred_fallthru
      _
    // Predicated region
    $region18: #{seq2seq_forward.1} parent=1 // pred_check
      _
    $region19: #{seq2seq_forward.1} parent=1 // pred_check_branch
      %43 = sbr.rel (0) target = $region21
    $region20: #{seq2seq_forward.1} parent=1 // pred_region
      %s45 = ssub.s32 3072, 3072
      %46 = vsyncadd [#allocation11], %s45
      %s47 = sshll.u32 [#allocation10], 4
      %s48 = int_to_ptr.vmem [resolvable:$true] %s47
      %53 = dma.hbm_to_vmem [thread:$0]  %s4, 3072, %s48, [#allocation11], 192, 192, 12
    $region21: #{seq2seq_forward.1} parent=1 // pred_fallthru
      _
    // Predicated region
    $region22: #{seq2seq_forward.1} parent=1 // pred_check
      _
    $region23: #{seq2seq_forward.1} parent=1 // pred_check_branch
      %55 = sbr.rel (0) target = $region25
    $region24: #{seq2seq_forward.1} parent=1 // pred_region
      _
    $region25: #{seq2seq_forward.1} parent=1 // pred_fallthru
      _
    // Predicated region
    $region26: #{seq2seq_forward.1} parent=1 // pred_check
      _
    $region27: #{seq2seq_forward.1} parent=1 // pred_check_branch
      %57 = sbr.rel (0) target = $region29
    $region28: #{seq2seq_forward.1} parent=1 // pred_region
      %s59 = ssub.s32 384, 384
      %60 = vsyncadd [#allocation11], %s59
      %s62 = sshll.u32 [#allocation12], 4
      %s63 = int_to_ptr.vmem [resolvable:$true] %s62
      %65 = dma.hbm_to_vmem [thread:$0]  %s6, 384, %s63, [#allocation11]
    $region29: #{seq2seq_forward.1} parent=1 // pred_fallthru
      _
    // Predicated region
    $region30: #{seq2seq_forward.1} parent=1 // pred_check
      _
    $region31: #{seq2seq_forward.1} parent=1 // pred_check_branch
      %67 = sbr.rel (0) target = $region33
    $region32: #{seq2seq_forward.1} parent=1 // pred_region
      _
    $region33: #{seq2seq_forward.1} parent=1 // pred_fallthru
      _
    // Predicated region
    $region34: #{seq2seq_forward.1} parent=1 // pred_check
      _
    $region35: #{seq2seq_forward.1} parent=1 // pred_check_branch
      %69 = sbr.rel (0) target = $region37
    $region36: #{seq2seq_forward.1} parent=1 // pred_region
      _
    $region37: #{seq2seq_forward.1} parent=1 // pred_fallthru
      _
    // Predicated region
    $region38: #{seq2seq_forward.1} parent=1 // pred_check
      _
    $region39: #{seq2seq_forward.1} parent=1 // pred_check_branch
      %71 = sbr.rel (0) target = $region41
    $region40: #{seq2seq_forward.1} parent=1 // pred_region
      _
    $region41: #{seq2seq_forward.1} parent=1 // pred_fallthru
      _
    // Predicated region
    $region42: #{seq2seq_forward.1} parent=1 // pred_check
      _
    $region43: #{seq2seq_forward.1} parent=1 // pred_check_branch
      %73 = sbr.rel (0) target = $region45
    $region44: #{seq2seq_forward.1} parent=1 // pred_region
      _
    $region45: #{seq2seq_forward.1} parent=1 // pred_fallthru
      _
    // Predicated region
    $region46: #{seq2seq_forward.1} parent=1 // pred_check
      _
    $region47: #{seq2seq_forward.1} parent=1 // pred_check_branch
      %75 = sbr.rel (0) target = $region49
    $region48: #{seq2seq_forward.1} parent=1 // pred_region
      _
    $region49: #{seq2seq_forward.1} parent=1 // pred_fallthru
      _
    // Predicated region
    $region50: #{seq2seq_forward.1} parent=1 // pred_check
      _
    $region51: #{seq2seq_forward.1} parent=1 // pred_check_branch
      %77 = sbr.rel (0) target = $region53
    $region52: #{seq2seq_forward.1} parent=1 // pred_region
      %78 = dma.done [#allocation9], 3072
    $region53: #{seq2seq_forward.1} parent=1 // pred_fallthru
      _
    // Predicated region
    $region54: #{seq2seq_forward.1} parent=1 // pred_check
      _
    $region55: #{seq2seq_forward.1} parent=1 // pred_check_branch
      %80 = sbr.rel (0) target = $region57
    $region56: #{seq2seq_forward.1} parent=1 // pred_region
      %81 = dma.done [#allocation11], 3072
    $region57: #{seq2seq_forward.1} parent=1 // pred_fallthru
      _
    // Predicated region
    $region58: #{seq2seq_forward.1} parent=1 // pred_check
      _
    $region59: #{seq2seq_forward.1} parent=1 // pred_check_branch
      %83 = sbr.rel (0) target = $region61
    $region60: #{seq2seq_forward.1} parent=1 // pred_region
      %84 = dma.done [#allocation11], 384
    $region61: #{seq2seq_forward.1} parent=1 // pred_fallthru
      _
    %p87 = scmp.lt.u32.totalorder 192, 8
    %p88 = pneg %p87
    // Predicated region
    $region62: #{seq2seq_forward.1} parent=1 // pred_check
      _
    $region63: #{seq2seq_forward.1} parent=1 // pred_check_branch
      %90 = sbr.rel (%p87) target = $region65
    $region64: #{seq2seq_forward.1} parent=1 // pred_region
      %s106 = sand.u32 192, 7
      %p107 = scmp.eq.s32.totalorder %s106, 0
      // Predicated region
      $region77: #{seq2seq_forward.1} parent=64 // pred_check
        %p108 = pneg %p107
      $region78: #{seq2seq_forward.1} parent=64 // pred_check_branch
        %110 = sbr.rel (%p108) target = $region80
      $region79: #{seq2seq_forward.1} parent=64 // pred_region
        loop: start=0, step=1, limit=1
        $region81: #{seq2seq_forward.1} parent=79 // loop_pre_header
          _
        $region82: #{seq2seq_forward.1} parent=79 // loop_header
          %s112 = sphi 0, %s116
          %p113 = scmp.ge.s32.totalorder %s112, 1
          %s117 = sphi %s9, %s9
          %s118 = sphi [#allocation4], [#allocation4]
        $region83: #{seq2seq_forward.1} parent=79 // loop_header_branch
          %115 = sbr.rel (%p113) target = $region87
        $region84: #{seq2seq_forward.1} parent=79 // loop_body
          %v119 = vld [vmem:[%s117] sm:$0xff]
          %120 = vst [vmem:[%s118] sm:$0xff] %v119
          %v121 = vld [vmem:[%s117 + $0x8] sm:$0xff]
          %122 = vst [vmem:[%s118 + $0x8] sm:$0xff] %v121
          %v123 = vld [vmem:[%s117 + $0x10] sm:$0xff]
          %124 = vst [vmem:[%s118 + $0x10] sm:$0xff] %v123
          %v125 = vld [vmem:[%s117 + $0x18] sm:$0xff]
          %126 = vst [vmem:[%s118 + $0x18] sm:$0xff] %v125
          %v127 = vld [vmem:[%s117 + $0x20] sm:$0xff]
          %128 = vst [vmem:[%s118 + $0x20] sm:$0xff] %v127
          %v129 = vld [vmem:[%s117 + $0x28] sm:$0xff]
          %130 = vst [vmem:[%s118 + $0x28] sm:$0xff] %v129
          %v131 = vld [vmem:[%s117 + $0x30] sm:$0xff]
          %132 = vst [vmem:[%s118 + $0x30] sm:$0xff] %v131
          %v133 = vld [vmem:[%s117 + $0x38] sm:$0xff]
          %134 = vst [vmem:[%s118 + $0x38] sm:$0xff] %v133
          %v135 = vld [vmem:[%s117 + $0x40] sm:$0xff]
          %136 = vst [vmem:[%s118 + $0x40] sm:$0xff] %v135
          %v137 = vld [vmem:[%s117 + $0x48] sm:$0xff]
          %138 = vst [vmem:[%s118 + $0x48] sm:$0xff] %v137
          %v139 = vld [vmem:[%s117 + $0x50] sm:$0xff]
          %140 = vst [vmem:[%s118 + $0x50] sm:$0xff] %v139
          %v141 = vld [vmem:[%s117 + $0x58] sm:$0xff]
          %142 = vst [vmem:[%s118 + $0x58] sm:$0xff] %v141
          %v143 = vld [vmem:[%s117 + $0x60] sm:$0xff]
          %144 = vst [vmem:[%s118 + $0x60] sm:$0xff] %v143
          %v145 = vld [vmem:[%s117 + $0x68] sm:$0xff]
          %146 = vst [vmem:[%s118 + $0x68] sm:$0xff] %v145
          %v147 = vld [vmem:[%s117 + $0x70] sm:$0xff]
          %148 = vst [vmem:[%s118 + $0x70] sm:$0xff] %v147
          %v149 = vld [vmem:[%s117 + $0x78] sm:$0xff]
          %150 = vst [vmem:[%s118 + $0x78] sm:$0xff] %v149
          %v151 = vld [vmem:[%s117 + $0x80] sm:$0xff]
          %152 = vst [vmem:[%s118 + $0x80] sm:$0xff] %v151
          %v153 = vld [vmem:[%s117 + $0x88] sm:$0xff]
          %154 = vst [vmem:[%s118 + $0x88] sm:$0xff] %v153
          %v155 = vld [vmem:[%s117 + $0x90] sm:$0xff]
          %156 = vst [vmem:[%s118 + $0x90] sm:$0xff] %v155
          %v157 = vld [vmem:[%s117 + $0x98] sm:$0xff]
          %158 = vst [vmem:[%s118 + $0x98] sm:$0xff] %v157
          %v159 = vld [vmem:[%s117 + $0xa0] sm:$0xff]
          %160 = vst [vmem:[%s118 + $0xa0] sm:$0xff] %v159
          %v161 = vld [vmem:[%s117 + $0xa8] sm:$0xff]
          %162 = vst [vmem:[%s118 + $0xa8] sm:$0xff] %v161
          %v163 = vld [vmem:[%s117 + $0xb0] sm:$0xff]
          %164 = vst [vmem:[%s118 + $0xb0] sm:$0xff] %v163
          %v165 = vld [vmem:[%s117 + $0xb8] sm:$0xff]
          %166 = vst [vmem:[%s118 + $0xb8] sm:$0xff] %v165
        $region85: #{seq2seq_forward.1} parent=79 // loop_footer
          %s116 = sadd.s32 1, %s112
        $region86: #{seq2seq_forward.1} parent=79 // loop_footer_branch
          %111 = sbr.rel target = $region82
        $region87: #{seq2seq_forward.1} parent=79 // loop_exit
          _
      $region80: #{seq2seq_forward.1} parent=64 // pred_fallthru
        _
      %p167 = pneg %p107
      // Predicated region
      $region88: #{seq2seq_forward.1} parent=64 // pred_check
        _
      $region89: #{seq2seq_forward.1} parent=64 // pred_check_branch
        %169 = sbr.rel (%p107) target = $region91
      $region90: #{seq2seq_forward.1} parent=64 // pred_region
        %s170 = sand.u32 192, 7
      $region91: #{seq2seq_forward.1} parent=64 // pred_fallthru
        _
    $region65: #{seq2seq_forward.1} parent=1 // pred_fallthru
      _
    // Predicated region
    $region66: #{seq2seq_forward.1} parent=1 // pred_check
      %p91 = pneg %p87
    $region67: #{seq2seq_forward.1} parent=1 // pred_check_branch
      %93 = sbr.rel (%p91) target = $region69
    $region68: #{seq2seq_forward.1} parent=1 // pred_region
      %s94 = sshll.u32 1, 192
      %s95 = ssub.s32 %s94, 1
      loop: start=0, step=1, limit=1
      $region70: #{seq2seq_forward.1} parent=68 // loop_pre_header
        _
      $region71: #{seq2seq_forward.1} parent=68 // loop_header
        %s97 = sphi 0, %s101
        %p98 = scmp.ge.s32.totalorder %s97, 1
        %s102 = sphi %s9, %s9
        %s103 = sphi [#allocation4], [#allocation4]
      $region72: #{seq2seq_forward.1} parent=68 // loop_header_branch
        %100 = sbr.rel (%p98) target = $region76
      $region73: #{seq2seq_forward.1} parent=68 // loop_body
        %v104 = vld [vmem:[%s102] sm:%s95]
        %105 = vst [vmem:[%s103] sm:%s95] %v104
      $region74: #{seq2seq_forward.1} parent=68 // loop_footer
        %s101 = sadd.s32 1, %s97
      $region75: #{seq2seq_forward.1} parent=68 // loop_footer_branch
        %96 = sbr.rel target = $region71
      $region76: #{seq2seq_forward.1} parent=68 // loop_exit
        _
    $region69: #{seq2seq_forward.1} parent=1 // pred_fallthru
      _
    // Predicated region
    $region92: #{seq2seq_forward.1} parent=1 // pred_check
      _
    $region93: #{seq2seq_forward.1} parent=1 // pred_check_branch
      %173 = sbr.rel (0) target = $region95
    $region94: #{seq2seq_forward.1} parent=1 // pred_region
      %174 = vsyncadd [#allocation7], 3072
    $region95: #{seq2seq_forward.1} parent=1 // pred_fallthru
      _
    %s175 = scalar_lea.sflag [#allocation7], 1
    %p177 = scmp.lt.u32.totalorder 192, 8
    %p178 = pneg %p177
    // Predicated region
    $region96: #{seq2seq_forward.1} parent=1 // pred_check
      _
    $region97: #{seq2seq_forward.1} parent=1 // pred_check_branch
      %180 = sbr.rel (%p177) target = $region99
    $region98: #{seq2seq_forward.1} parent=1 // pred_region
      %s196 = sand.u32 192, 7
      %p197 = scmp.eq.s32.totalorder %s196, 0
      // Predicated region
      $region111: #{seq2seq_forward.1} parent=98 // pred_check
        %p198 = pneg %p197
      $region112: #{seq2seq_forward.1} parent=98 // pred_check_branch
        %200 = sbr.rel (%p198) target = $region114
      $region113: #{seq2seq_forward.1} parent=98 // pred_region
        loop: start=0, step=1, limit=1
        $region115: #{seq2seq_forward.1} parent=113 // loop_pre_header
          _
        $region116: #{seq2seq_forward.1} parent=113 // loop_header
          %s202 = sphi 0, %s206
          %p203 = scmp.ge.s32.totalorder %s202, 1
          %s207 = sphi %s10, %s10
          %s208 = sphi [#allocation5], [#allocation5]
        $region117: #{seq2seq_forward.1} parent=113 // loop_header_branch
          %205 = sbr.rel (%p203) target = $region121
        $region118: #{seq2seq_forward.1} parent=113 // loop_body
          %v209 = vld [vmem:[%s207] sm:$0xff]
          %210 = vst [vmem:[%s208] sm:$0xff] %v209
          %v211 = vld [vmem:[%s207 + $0x8] sm:$0xff]
          %212 = vst [vmem:[%s208 + $0x8] sm:$0xff] %v211
          %v213 = vld [vmem:[%s207 + $0x10] sm:$0xff]
          %214 = vst [vmem:[%s208 + $0x10] sm:$0xff] %v213
          %v215 = vld [vmem:[%s207 + $0x18] sm:$0xff]
          %216 = vst [vmem:[%s208 + $0x18] sm:$0xff] %v215
          %v217 = vld [vmem:[%s207 + $0x20] sm:$0xff]
          %218 = vst [vmem:[%s208 + $0x20] sm:$0xff] %v217
          %v219 = vld [vmem:[%s207 + $0x28] sm:$0xff]
          %220 = vst [vmem:[%s208 + $0x28] sm:$0xff] %v219
          %v221 = vld [vmem:[%s207 + $0x30] sm:$0xff]
          %222 = vst [vmem:[%s208 + $0x30] sm:$0xff] %v221
          %v223 = vld [vmem:[%s207 + $0x38] sm:$0xff]
          %224 = vst [vmem:[%s208 + $0x38] sm:$0xff] %v223
          %v225 = vld [vmem:[%s207 + $0x40] sm:$0xff]
          %226 = vst [vmem:[%s208 + $0x40] sm:$0xff] %v225
          %v227 = vld [vmem:[%s207 + $0x48] sm:$0xff]
          %228 = vst [vmem:[%s208 + $0x48] sm:$0xff] %v227
          %v229 = vld [vmem:[%s207 + $0x50] sm:$0xff]
          %230 = vst [vmem:[%s208 + $0x50] sm:$0xff] %v229
          %v231 = vld [vmem:[%s207 + $0x58] sm:$0xff]
          %232 = vst [vmem:[%s208 + $0x58] sm:$0xff] %v231
          %v233 = vld [vmem:[%s207 + $0x60] sm:$0xff]
          %234 = vst [vmem:[%s208 + $0x60] sm:$0xff] %v233
          %v235 = vld [vmem:[%s207 + $0x68] sm:$0xff]
          %236 = vst [vmem:[%s208 + $0x68] sm:$0xff] %v235
          %v237 = vld [vmem:[%s207 + $0x70] sm:$0xff]
          %238 = vst [vmem:[%s208 + $0x70] sm:$0xff] %v237
          %v239 = vld [vmem:[%s207 + $0x78] sm:$0xff]
          %240 = vst [vmem:[%s208 + $0x78] sm:$0xff] %v239
          %v241 = vld [vmem:[%s207 + $0x80] sm:$0xff]
          %242 = vst [vmem:[%s208 + $0x80] sm:$0xff] %v241
          %v243 = vld [vmem:[%s207 + $0x88] sm:$0xff]
          %244 = vst [vmem:[%s208 + $0x88] sm:$0xff] %v243
          %v245 = vld [vmem:[%s207 + $0x90] sm:$0xff]
          %246 = vst [vmem:[%s208 + $0x90] sm:$0xff] %v245
          %v247 = vld [vmem:[%s207 + $0x98] sm:$0xff]
          %248 = vst [vmem:[%s208 + $0x98] sm:$0xff] %v247
          %v249 = vld [vmem:[%s207 + $0xa0] sm:$0xff]
          %250 = vst [vmem:[%s208 + $0xa0] sm:$0xff] %v249
          %v251 = vld [vmem:[%s207 + $0xa8] sm:$0xff]
          %252 = vst [vmem:[%s208 + $0xa8] sm:$0xff] %v251
          %v253 = vld [vmem:[%s207 + $0xb0] sm:$0xff]
          %254 = vst [vmem:[%s208 + $0xb0] sm:$0xff] %v253
          %v255 = vld [vmem:[%s207 + $0xb8] sm:$0xff]
          %256 = vst [vmem:[%s208 + $0xb8] sm:$0xff] %v255
        $region119: #{seq2seq_forward.1} parent=113 // loop_footer
          %s206 = sadd.s32 1, %s202
        $region120: #{seq2seq_forward.1} parent=113 // loop_footer_branch
          %201 = sbr.rel target = $region116
        $region121: #{seq2seq_forward.1} parent=113 // loop_exit
          _
      $region114: #{seq2seq_forward.1} parent=98 // pred_fallthru
        _
      %p257 = pneg %p197
      // Predicated region
      $region122: #{seq2seq_forward.1} parent=98 // pred_check
        _
      $region123: #{seq2seq_forward.1} parent=98 // pred_check_branch
        %259 = sbr.rel (%p197) target = $region125
      $region124: #{seq2seq_forward.1} parent=98 // pred_region
        %s260 = sand.u32 192, 7
      $region125: #{seq2seq_forward.1} parent=98 // pred_fallthru
        _
    $region99: #{seq2seq_forward.1} parent=1 // pred_fallthru
      _
    // Predicated region
    $region100: #{seq2seq_forward.1} parent=1 // pred_check
      %p181 = pneg %p177
    $region101: #{seq2seq_forward.1} parent=1 // pred_check_branch
      %183 = sbr.rel (%p181) target = $region103
    $region102: #{seq2seq_forward.1} parent=1 // pred_region
      %s184 = sshll.u32 1, 192
      %s185 = ssub.s32 %s184, 1
      loop: start=0, step=1, limit=1
      $region104: #{seq2seq_forward.1} parent=102 // loop_pre_header
        _
      $region105: #{seq2seq_forward.1} parent=102 // loop_header
        %s187 = sphi 0, %s191
        %p188 = scmp.ge.s32.totalorder %s187, 1
        %s192 = sphi %s10, %s10
        %s193 = sphi [#allocation5], [#allocation5]
      $region106: #{seq2seq_forward.1} parent=102 // loop_header_branch
        %190 = sbr.rel (%p188) target = $region110
      $region107: #{seq2seq_forward.1} parent=102 // loop_body
        %v194 = vld [vmem:[%s192] sm:%s185]
        %195 = vst [vmem:[%s193] sm:%s185] %v194
      $region108: #{seq2seq_forward.1} parent=102 // loop_footer
        %s191 = sadd.s32 1, %s187
      $region109: #{seq2seq_forward.1} parent=102 // loop_footer_branch
        %186 = sbr.rel target = $region105
      $region110: #{seq2seq_forward.1} parent=102 // loop_exit
        _
    $region103: #{seq2seq_forward.1} parent=1 // pred_fallthru
      _
    // Predicated region
    $region126: #{seq2seq_forward.1} parent=1 // pred_check
      _
    $region127: #{seq2seq_forward.1} parent=1 // pred_check_branch
      %263 = sbr.rel (0) target = $region129
    $region128: #{seq2seq_forward.1} parent=1 // pred_region
      %264 = vsyncadd %s175, 3072
    $region129: #{seq2seq_forward.1} parent=1 // pred_fallthru
      _
    %s265 = scalar_lea.sflag [#allocation7], 2
    %p267 = scmp.lt.u32.totalorder 64, 8
    %p268 = pneg %p267
    // Predicated region
    $region130: #{seq2seq_forward.1} parent=1 // pred_check
      _
    $region131: #{seq2seq_forward.1} parent=1 // pred_check_branch
      %270 = sbr.rel (%p267) target = $region133
    $region132: #{seq2seq_forward.1} parent=1 // pred_region
      %s286 = sand.u32 64, 7
      %p287 = scmp.eq.s32.totalorder %s286, 0
      // Predicated region
      $region145: #{seq2seq_forward.1} parent=132 // pred_check
        %p288 = pneg %p287
      $region146: #{seq2seq_forward.1} parent=132 // pred_check_branch
        %290 = sbr.rel (%p288) target = $region148
      $region147: #{seq2seq_forward.1} parent=132 // pred_region
        loop: start=0, step=1, limit=1
        $region149: #{seq2seq_forward.1} parent=147 // loop_pre_header
          _
        $region150: #{seq2seq_forward.1} parent=147 // loop_header
          %s292 = sphi 0, %s296
          %p293 = scmp.ge.s32.totalorder %s292, 1
          %s297 = sphi %s13, %s13
          %s298 = sphi [#allocation6], [#allocation6]
        $region151: #{seq2seq_forward.1} parent=147 // loop_header_branch
          %295 = sbr.rel (%p293) target = $region155
        $region152: #{seq2seq_forward.1} parent=147 // loop_body
          %v299 = vld [vmem:[%s297] sm:$0xff]
          %300 = vst [vmem:[%s298] sm:$0xff] %v299
          %v301 = vld [vmem:[%s297 + $0x8] sm:$0xff]
          %302 = vst [vmem:[%s298 + $0x8] sm:$0xff] %v301
          %v303 = vld [vmem:[%s297 + $0x10] sm:$0xff]
          %304 = vst [vmem:[%s298 + $0x10] sm:$0xff] %v303
          %v305 = vld [vmem:[%s297 + $0x18] sm:$0xff]
          %306 = vst [vmem:[%s298 + $0x18] sm:$0xff] %v305
          %v307 = vld [vmem:[%s297 + $0x20] sm:$0xff]
          %308 = vst [vmem:[%s298 + $0x20] sm:$0xff] %v307
          %v309 = vld [vmem:[%s297 + $0x28] sm:$0xff]
          %310 = vst [vmem:[%s298 + $0x28] sm:$0xff] %v309
          %v311 = vld [vmem:[%s297 + $0x30] sm:$0xff]
          %312 = vst [vmem:[%s298 + $0x30] sm:$0xff] %v311
          %v313 = vld [vmem:[%s297 + $0x38] sm:$0xff]
          %314 = vst [vmem:[%s298 + $0x38] sm:$0xff] %v313
        $region153: #{seq2seq_forward.1} parent=147 // loop_footer
          %s296 = sadd.s32 1, %s292
        $region154: #{seq2seq_forward.1} parent=147 // loop_footer_branch
          %291 = sbr.rel target = $region150
        $region155: #{seq2seq_forward.1} parent=147 // loop_exit
          _
      $region148: #{seq2seq_forward.1} parent=132 // pred_fallthru
        _
      %p315 = pneg %p287
      // Predicated region
      $region156: #{seq2seq_forward.1} parent=132 // pred_check
        _
      $region157: #{seq2seq_forward.1} parent=132 // pred_check_branch
        %317 = sbr.rel (%p287) target = $region159
      $region158: #{seq2seq_forward.1} parent=132 // pred_region
        %s318 = sand.u32 64, 7
      $region159: #{seq2seq_forward.1} parent=132 // pred_fallthru
        _
    $region133: #{seq2seq_forward.1} parent=1 // pred_fallthru
      _
    // Predicated region
    $region134: #{seq2seq_forward.1} parent=1 // pred_check
      %p271 = pneg %p267
    $region135: #{seq2seq_forward.1} parent=1 // pred_check_branch
      %273 = sbr.rel (%p271) target = $region137
    $region136: #{seq2seq_forward.1} parent=1 // pred_region
      %s274 = sshll.u32 1, 64
      %s275 = ssub.s32 %s274, 1
      loop: start=0, step=1, limit=1
      $region138: #{seq2seq_forward.1} parent=136 // loop_pre_header
        _
      $region139: #{seq2seq_forward.1} parent=136 // loop_header
        %s277 = sphi 0, %s281
        %p278 = scmp.ge.s32.totalorder %s277, 1
        %s282 = sphi %s13, %s13
        %s283 = sphi [#allocation6], [#allocation6]
      $region140: #{seq2seq_forward.1} parent=136 // loop_header_branch
        %280 = sbr.rel (%p278) target = $region144
      $region141: #{seq2seq_forward.1} parent=136 // loop_body
        %v284 = vld [vmem:[%s282] sm:%s275]
        %285 = vst [vmem:[%s283] sm:%s275] %v284
      $region142: #{seq2seq_forward.1} parent=136 // loop_footer
        %s281 = sadd.s32 1, %s277
      $region143: #{seq2seq_forward.1} parent=136 // loop_footer_branch
        %276 = sbr.rel target = $region139
      $region144: #{seq2seq_forward.1} parent=136 // loop_exit
        _
    $region137: #{seq2seq_forward.1} parent=1 // pred_fallthru
      _
    // Predicated region
    $region160: #{seq2seq_forward.1} parent=1 // pred_check
      _
    $region161: #{seq2seq_forward.1} parent=1 // pred_check_branch
      %321 = sbr.rel (0) target = $region163
    $region162: #{seq2seq_forward.1} parent=1 // pred_region
      %322 = vsyncadd %s265, 1024
    $region163: #{seq2seq_forward.1} parent=1 // pred_fallthru
      _
    %v323 = vld [vmem:[%s0] sm:$0xf]
    %v324 = vld [vmem:[%s0 + $0x4] sm:$0xf]
    %v325 = vld [vmem:[%s0 + $0x8] sm:$0xf]
    %v326 = vld [vmem:[%s0 + $0xc] sm:$0xf]
    %v327 = vld [vmem:[%s0 + $0x10] sm:$0xf]
    %v328 = vld [vmem:[%s0 + $0x14] sm:$0xf]
    %v329 = vld [vmem:[%s0 + $0x18] sm:$0xf]
    %v330 = vld [vmem:[%s0 + $0x1c] sm:$0xf]
    %v331 = vld [vmem:[#allocation8] sm:$0xff]
    %v332 = vld [vmem:[#allocation8 + $0x8] sm:$0xf]
    %v333 = vld [vmem:[#allocation8 + $0xc] sm:$0xff]
    %v334 = vld [vmem:[#allocation8 + $0x14] sm:$0xf]
    %v335 = vld [vmem:[#allocation8 + $0x18] sm:$0xff]
    %v336 = vld [vmem:[#allocation8 + $0x20] sm:$0xf]
    %v337 = vld [vmem:[#allocation8 + $0x24] sm:$0xff]
    %v338 = vld [vmem:[#allocation8 + $0x2c] sm:$0xf]
    %v339 = vld [vmem:[#allocation8 + $0x30] sm:$0xff]
    %v340 = vld [vmem:[#allocation8 + $0x38] sm:$0xf]
    %v341 = vld [vmem:[#allocation8 + $0x3c] sm:$0xff]
    %v342 = vld [vmem:[#allocation8 + $0x44] sm:$0xf]
    %v343 = vld [vmem:[#allocation8 + $0x48] sm:$0xff]
    %v344 = vld [vmem:[#allocation8 + $0x50] sm:$0xf]
    %v345 = vld [vmem:[#allocation8 + $0x54] sm:$0xff]
    %v346 = vld [vmem:[#allocation8 + $0x5c] sm:$0xf]
    %v347 = vld [vmem:[#allocation8 + $0x60] sm:$0xff]
    %v348 = vld [vmem:[#allocation8 + $0x68] sm:$0xf]
    %v349 = vld [vmem:[#allocation8 + $0x6c] sm:$0xff]
    %v350 = vld [vmem:[#allocation8 + $0x74] sm:$0xf]
    %v351 = vld [vmem:[#allocation8 + $0x78] sm:$0xff]
    %v352 = vld [vmem:[#allocation8 + $0x80] sm:$0xf]
    %v353 = vld [vmem:[#allocation8 + $0x84] sm:$0xff]
    %v354 = vld [vmem:[#allocation8 + $0x8c] sm:$0xf]
    %v355 = vld [vmem:[#allocation8 + $0x90] sm:$0xff]
    %v356 = vld [vmem:[#allocation8 + $0x98] sm:$0xf]
    %v357 = vld [vmem:[#allocation8 + $0x9c] sm:$0xff]
    %v358 = vld [vmem:[#allocation8 + $0xa4] sm:$0xf]
    %v359 = vld [vmem:[#allocation8 + $0xa8] sm:$0xff]
    %v360 = vld [vmem:[#allocation8 + $0xb0] sm:$0xf]
    %v361 = vld [vmem:[#allocation8 + $0xb4] sm:$0xff]
    %v362 = vld [vmem:[#allocation8 + $0xbc] sm:$0xf]
    %v363 = vld [vmem:[%s5] sm:$0x7]
    %v365 = vlaneseq
    %v366 = vshrl.u32 %v365, 7
    %v367 = vsub.s32 0, %v366
    %v368 = vrot.slane %v363, %v367
    %v369 = vlaneseq
    %v370 = vshrl.u32 %v369, 7
    %v371 = vsub.s32 1, %v370
    %v372 = vrot.slane %v363, %v371
    %v373 = vlaneseq
    %v374 = vshrl.u32 %v373, 7
    %v375 = vsub.s32 2, %v374
    %v376 = vrot.slane %v363, %v375
    %v388 = vunpack.c.l.b16 %v323
    %v389 = vunpack.c.l.b16 %v324
    %v390 = vunpack.c.l.b16 %v325
    %v391 = vunpack.c.l.b16 %v326
    %v392 = vunpack.c.l.b16 %v327
    %v393 = vunpack.c.l.b16 %v328
    %v394 = vunpack.c.l.b16 %v329
    %v395 = vunpack.c.l.b16 %v330
    %v396 = vpack.c.b16 %v389, %v388
    %v397 = vpack.c.b16 %v391, %v390
    %v398 = vpack.c.b16 %v393, %v392
    %v399 = vpack.c.b16 %v395, %v394
    %v436 = vunpack.c.l.b16 %v331
    %v437 = vunpack.c.h.b16 %v331
    %v438 = vunpack.c.l.b16 %v332
    %v439 = vunpack.c.l.b16 %v333
    %v440 = vunpack.c.h.b16 %v333
    %v441 = vunpack.c.l.b16 %v334
    %v442 = vunpack.c.l.b16 %v335
    %v443 = vunpack.c.h.b16 %v335
    %v444 = vunpack.c.l.b16 %v336
    %v445 = vunpack.c.l.b16 %v337
    %v446 = vunpack.c.h.b16 %v337
    %v447 = vunpack.c.l.b16 %v338
    %v448 = vunpack.c.l.b16 %v339
    %v449 = vunpack.c.h.b16 %v339
    %v450 = vunpack.c.l.b16 %v340
    %v451 = vunpack.c.l.b16 %v341
    %v452 = vunpack.c.h.b16 %v341
    %v453 = vunpack.c.l.b16 %v342
    %v454 = vunpack.c.l.b16 %v343
    %v455 = vunpack.c.h.b16 %v343
    %v456 = vunpack.c.l.b16 %v344
    %v457 = vunpack.c.l.b16 %v345
    %v458 = vunpack.c.h.b16 %v345
    %v459 = vunpack.c.l.b16 %v346
    %v460 = vunpack.c.l.b16 %v347
    %v461 = vunpack.c.h.b16 %v347
    %v462 = vunpack.c.l.b16 %v348
    %v463 = vunpack.c.l.b16 %v349
    %v464 = vunpack.c.h.b16 %v349
    %v465 = vunpack.c.l.b16 %v350
    %v466 = vunpack.c.l.b16 %v351
    %v467 = vunpack.c.h.b16 %v351
    %v468 = vunpack.c.l.b16 %v352
    %v469 = vunpack.c.l.b16 %v353
    %v470 = vunpack.c.h.b16 %v353
    %v471 = vunpack.c.l.b16 %v354
    %v472 = vunpack.c.l.b16 %v355
    %v473 = vunpack.c.h.b16 %v355
    %v474 = vunpack.c.l.b16 %v356
    %v475 = vunpack.c.l.b16 %v357
    %v476 = vunpack.c.h.b16 %v357
    %v477 = vunpack.c.l.b16 %v358
    %v478 = vunpack.c.l.b16 %v359
    %v479 = vunpack.c.h.b16 %v359
    %v480 = vunpack.c.l.b16 %v360
    %v481 = vunpack.c.l.b16 %v361
    %v482 = vunpack.c.h.b16 %v361
    %v483 = vunpack.c.l.b16 %v362
    %v484 = vpack.c.b16 %v439, %v436
    %v485 = vpack.c.b16 %v440, %v437
    %v486 = vpack.c.b16 %v441, %v438
    %v487 = vpack.c.b16 %v445, %v442
    %v488 = vpack.c.b16 %v446, %v443
    %v489 = vpack.c.b16 %v447, %v444
    %v490 = vpack.c.b16 %v451, %v448
    %v491 = vpack.c.b16 %v452, %v449
    %v492 = vpack.c.b16 %v453, %v450
    %v493 = vpack.c.b16 %v457, %v454
    %v494 = vpack.c.b16 %v458, %v455
    %v495 = vpack.c.b16 %v459, %v456
    %v496 = vpack.c.b16 %v463, %v460
    %v497 = vpack.c.b16 %v464, %v461
    %v498 = vpack.c.b16 %v465, %v462
    %v499 = vpack.c.b16 %v469, %v466
    %v500 = vpack.c.b16 %v470, %v467
    %v501 = vpack.c.b16 %v471, %v468
    %v502 = vpack.c.b16 %v475, %v472
    %v503 = vpack.c.b16 %v476, %v473
    %v504 = vpack.c.b16 %v477, %v474
    %v505 = vpack.c.b16 %v481, %v478
    %v506 = vpack.c.b16 %v482, %v479
    %v507 = vpack.c.b16 %v483, %v480
    %532 = vmatprep.subr.bf16.mxu0 %v506
    %533 = vmatpush1.bf16.msra.mxu0 %v505
    %534 = vmatprep.subr.bf16.mxu0 %v503
    %535 = vmatpush1.bf16.msra.mxu0 %v502
    %536 = vmatprep.subr.bf16.mxu0 %v500
    %537 = vmatpush1.bf16.msra.mxu0 %v499
    %538 = vmatprep.subr.bf16.mxu0 %v497
    %539 = vmatpush1.bf16.msra.mxu0 %v496
    %540 = vmatprep.subr.bf16.mxu0 %v494
    %541 = vmatpush1.bf16.msra.mxu0 %v493
    %542 = vmatprep.subr.bf16.mxu0 %v491
    %543 = vmatpush1.bf16.msra.mxu0 %v490
    %544 = vmatprep.subr.bf16.mxu0 %v488
    %545 = vmatpush1.bf16.msra.mxu0 %v487
    %546 = vmatprep.subr.bf16.mxu0 %v485
    %547 = vmatpush1.bf16.msra.mxu0 %v484
    %548 = vmatprep.subr.bf16.mxu0 0
    %549 = vmatpush2.bf16.msra.mxu0 0
    %550 = vmatprep.subr.bf16.mxu0 0
    %551 = vmatpush2.bf16.msra.mxu0 0
    %552 = vmatprep.subr.bf16.mxu0 0
    %553 = vmatpush2.bf16.msra.mxu0 0
    %554 = vmatprep.subr.bf16.mxu0 0
    %555 = vmatpush2.bf16.msra.mxu0 0
    %556 = vmatprep.subr.bf16.mxu0 0
    %557 = vmatpush2.bf16.msra.mxu0 0
    %558 = vmatprep.subr.bf16.mxu0 0
    %559 = vmatpush2.bf16.msra.mxu0 0
    %560 = vmatprep.subr.bf16.mxu0 0
    %561 = vmatpush2.bf16.msra.mxu0 0
    %562 = vmatprep.subr.bf16.mxu0 0
    %563 = vmatpush2.bf16.msra.mxu0 0
    %564 = vmatprep.mubr.bf16.mxu0 0
    %565 = vmatmul.mubr.bf16.gmra.mxu0 %v396
    %v566 = vpop.f32.mrf.mxu0
    %v567 = vadd.f32 %v368, %v566
    %v568 = vpop.f32.mrf.mxu0
    %v569 = vadd.f32 %v372, %v568
    %v570 = vpop.f32.mrf.mxu0
    %v571 = vadd.f32 %v368, %v570
    %v572 = vpop.f32.mrf.mxu0
    %v573 = vadd.f32 %v372, %v572
    %574 = vmatprep.mubr.bf16.mxu0 0
    %575 = vmatmul.mubr.bf16.gmra.mxu0 %v397
    %v576 = vpop.f32.mrf.mxu0
    %v577 = vadd.f32 %v368, %v576
    %v578 = vpop.f32.mrf.mxu0
    %v579 = vadd.f32 %v372, %v578
    %v580 = vpop.f32.mrf.mxu0
    %v581 = vadd.f32 %v368, %v580
    %v582 = vpop.f32.mrf.mxu0
    %v583 = vadd.f32 %v372, %v582
    %584 = vmatprep.mubr.bf16.mxu0 0
    %585 = vmatmul.mubr.bf16.gmra.mxu0 %v398
    %v586 = vpop.f32.mrf.mxu0
    %v587 = vadd.f32 %v368, %v586
    %v588 = vpop.f32.mrf.mxu0
    %v589 = vadd.f32 %v372, %v588
    %v590 = vpop.f32.mrf.mxu0
    %v591 = vadd.f32 %v368, %v590
    %v592 = vpop.f32.mrf.mxu0
    %v593 = vadd.f32 %v372, %v592
    %594 = vmatprep.mubr.bf16.mxu0 0
    %595 = vmatmul.mubr.bf16.gmra.mxu0 %v399
    %v596 = vpop.f32.mrf.mxu0
    %v597 = vadd.f32 %v368, %v596
    %v598 = vpop.f32.mrf.mxu0
    %v599 = vadd.f32 %v372, %v598
    %v600 = vpop.f32.mrf.mxu0
    %v601 = vadd.f32 %v368, %v600
    %v602 = vpop.f32.mrf.mxu0
    %v603 = vadd.f32 %v372, %v602
    %604 = vdwg.mxu0
    %605 = vmatprep.subr.bf16.mxu0 0
    %606 = vmatpush1.bf16.msra.mxu0 %v507
    %607 = vmatprep.subr.bf16.mxu0 0
    %608 = vmatpush1.bf16.msra.mxu0 %v504
    %609 = vmatprep.subr.bf16.mxu0 0
    %610 = vmatpush1.bf16.msra.mxu0 %v501
    %611 = vmatprep.subr.bf16.mxu0 0
    %612 = vmatpush1.bf16.msra.mxu0 %v498
    %613 = vmatprep.subr.bf16.mxu0 0
    %614 = vmatpush1.bf16.msra.mxu0 %v495
    %615 = vmatprep.subr.bf16.mxu0 0
    %616 = vmatpush1.bf16.msra.mxu0 %v492
    %617 = vmatprep.subr.bf16.mxu0 0
    %618 = vmatpush1.bf16.msra.mxu0 %v489
    %619 = vmatprep.subr.bf16.mxu0 0
    %620 = vmatpush1.bf16.msra.mxu0 %v486
    %621 = vmatprep.subr.bf16.mxu0 0
    %622 = vmatpush2.bf16.msra.mxu0 0
    %623 = vmatprep.subr.bf16.mxu0 0
    %624 = vmatpush2.bf16.msra.mxu0 0
    %625 = vmatprep.subr.bf16.mxu0 0
    %626 = vmatpush2.bf16.msra.mxu0 0
    %627 = vmatprep.subr.bf16.mxu0 0
    %628 = vmatpush2.bf16.msra.mxu0 0
    %629 = vmatprep.subr.bf16.mxu0 0
    %630 = vmatpush2.bf16.msra.mxu0 0
    %631 = vmatprep.subr.bf16.mxu0 0
    %632 = vmatpush2.bf16.msra.mxu0 0
    %633 = vmatprep.subr.bf16.mxu0 0
    %634 = vmatpush2.bf16.msra.mxu0 0
    %635 = vmatprep.subr.bf16.mxu0 0
    %636 = vmatpush2.bf16.msra.mxu0 0
    %637 = vmatprep.mubr.bf16.mxu0 0
    %638 = vmatmul.mubr.bf16.gmra.mxu0 %v396
    %v639 = vpop.f32.mrf.mxu0
    %v640 = vadd.f32 %v376, %v639
    %v641 = vpop.f32.mrf.mxu0
    %v642 = vpop.f32.mrf.mxu0
    %v643 = vadd.f32 %v376, %v642
    %v644 = vpop.f32.mrf.mxu0
    %645 = vmatprep.mubr.bf16.mxu0 0
    %646 = vmatmul.mubr.bf16.gmra.mxu0 %v397
    %v647 = vpop.f32.mrf.mxu0
    %v648 = vadd.f32 %v376, %v647
    %v649 = vpop.f32.mrf.mxu0
    %v650 = vpop.f32.mrf.mxu0
    %v651 = vadd.f32 %v376, %v650
    %v652 = vpop.f32.mrf.mxu0
    %653 = vmatprep.mubr.bf16.mxu0 0
    %654 = vmatmul.mubr.bf16.gmra.mxu0 %v398
    %v655 = vpop.f32.mrf.mxu0
    %v656 = vadd.f32 %v376, %v655
    %v657 = vpop.f32.mrf.mxu0
    %v658 = vpop.f32.mrf.mxu0
    %v659 = vadd.f32 %v376, %v658
    %v660 = vpop.f32.mrf.mxu0
    %661 = vmatprep.mubr.bf16.mxu0 0
    %662 = vmatmul.mubr.bf16.gmra.mxu0 %v399
    %v663 = vpop.f32.mrf.mxu0
    %v664 = vadd.f32 %v376, %v663
    %v665 = vpop.f32.mrf.mxu0
    %v666 = vpop.f32.mrf.mxu0
    %v667 = vadd.f32 %v376, %v666
    %v668 = vpop.f32.mrf.mxu0
    %669 = vdwg.mxu0
    %670 = vst [vmem:[#allocation2] sm:$0xff] %v567
    %671 = vst [vmem:[#allocation2 + $0x8] sm:$0xff] %v569
    %672 = vst [vmem:[#allocation2 + $0x10] sm:$0xff] %v640
    %673 = vst [vmem:[#allocation2 + $0x18] sm:$0xff] %v571
    %674 = vst [vmem:[#allocation2 + $0x20] sm:$0xff] %v573
    %675 = vst [vmem:[#allocation2 + $0x28] sm:$0xff] %v643
    %676 = vst [vmem:[#allocation2 + $0x30] sm:$0xff] %v577
    %677 = vst [vmem:[#allocation2 + $0x38] sm:$0xff] %v579
    %678 = vst [vmem:[#allocation2 + $0x40] sm:$0xff] %v648
    %679 = vst [vmem:[#allocation2 + $0x48] sm:$0xff] %v581
    %680 = vst [vmem:[#allocation2 + $0x50] sm:$0xff] %v583
    %681 = vst [vmem:[#allocation2 + $0x58] sm:$0xff] %v651
    %682 = vst [vmem:[#allocation2 + $0x60] sm:$0xff] %v587
    %683 = vst [vmem:[#allocation2 + $0x68] sm:$0xff] %v589
    %684 = vst [vmem:[#allocation2 + $0x70] sm:$0xff] %v656
    %685 = vst [vmem:[#allocation2 + $0x78] sm:$0xff] %v591
    %686 = vst [vmem:[#allocation2 + $0x80] sm:$0xff] %v593
    %687 = vst [vmem:[#allocation2 + $0x88] sm:$0xff] %v659
    %688 = vst [vmem:[#allocation2 + $0x90] sm:$0xff] %v597
    %689 = vst [vmem:[#allocation2 + $0x98] sm:$0xff] %v599
    %690 = vst [vmem:[#allocation2 + $0xa0] sm:$0xff] %v664
    %691 = vst [vmem:[#allocation2 + $0xa8] sm:$0xff] %v601
    %692 = vst [vmem:[#allocation2 + $0xb0] sm:$0xff] %v603
    %693 = vst [vmem:[#allocation2 + $0xb8] sm:$0xff] %v667
    %v694 = vld [vmem:[#allocation12] sm:$0xff]
    %v695 = vld [vmem:[#allocation12 + $0x8] sm:$0xff]
    %v696 = vld [vmem:[#allocation12 + $0x10] sm:$0xff]
    %v697 = vld [vmem:[#allocation2] sm:$0xff]
    %v698 = vld [vmem:[#allocation2 + $0x8] sm:$0xff]
    %v699 = vld [vmem:[#allocation2 + $0x10] sm:$0xff]
    %v700 = vld [vmem:[#allocation10] sm:$0xff]
    %v701 = vld [vmem:[#allocation10 + $0x8] sm:$0xf]
    %v702 = vld [vmem:[#allocation10 + $0xc] sm:$0xff]
    %v703 = vld [vmem:[#allocation10 + $0x14] sm:$0xf]
    %v704 = vld [vmem:[#allocation10 + $0x18] sm:$0xff]
    %v705 = vld [vmem:[#allocation10 + $0x20] sm:$0xf]
    %v706 = vld [vmem:[#allocation10 + $0x24] sm:$0xff]
    %v707 = vld [vmem:[#allocation10 + $0x2c] sm:$0xf]
    %v708 = vld [vmem:[#allocation10 + $0x30] sm:$0xff]
    %v709 = vld [vmem:[#allocation10 + $0x38] sm:$0xf]
    %v710 = vld [vmem:[#allocation10 + $0x3c] sm:$0xff]
    %v711 = vld [vmem:[#allocation10 + $0x44] sm:$0xf]
    %v712 = vld [vmem:[#allocation10 + $0x48] sm:$0xff]
    %v713 = vld [vmem:[#allocation10 + $0x50] sm:$0xf]
    %v714 = vld [vmem:[#allocation10 + $0x54] sm:$0xff]
    %v715 = vld [vmem:[#allocation10 + $0x5c] sm:$0xf]
    %v716 = vld [vmem:[#allocation10 + $0x60] sm:$0xff]
    %v717 = vld [vmem:[#allocation10 + $0x68] sm:$0xf]
    %v718 = vld [vmem:[#allocation10 + $0x6c] sm:$0xff]
    %v719 = vld [vmem:[#allocation10 + $0x74] sm:$0xf]
    %v720 = vld [vmem:[#allocation10 + $0x78] sm:$0xff]
    %v721 = vld [vmem:[#allocation10 + $0x80] sm:$0xf]
    %v722 = vld [vmem:[#allocation10 + $0x84] sm:$0xff]
    %v723 = vld [vmem:[#allocation10 + $0x8c] sm:$0xf]
    %v724 = vld [vmem:[#allocation10 + $0x90] sm:$0xff]
    %v725 = vld [vmem:[#allocation10 + $0x98] sm:$0xf]
    %v726 = vld [vmem:[#allocation10 + $0x9c] sm:$0xff]
    %v727 = vld [vmem:[#allocation10 + $0xa4] sm:$0xf]
    %v728 = vld [vmem:[#allocation10 + $0xa8] sm:$0xff]
    %v729 = vld [vmem:[#allocation10 + $0xb0] sm:$0xf]
    %v730 = vld [vmem:[#allocation10 + $0xb4] sm:$0xff]
    %v731 = vld [vmem:[#allocation10 + $0xbc] sm:$0xf]
    %v764 = vunpack.c.l.b16 %v700
    %v765 = vunpack.c.h.b16 %v700
    %v766 = vunpack.c.l.b16 %v701
    %v767 = vunpack.c.l.b16 %v702
    %v768 = vunpack.c.h.b16 %v702
    %v769 = vunpack.c.l.b16 %v703
    %v770 = vunpack.c.l.b16 %v704
    %v771 = vunpack.c.h.b16 %v704
    %v772 = vunpack.c.l.b16 %v705
    %v773 = vunpack.c.l.b16 %v706
    %v774 = vunpack.c.h.b16 %v706
    %v775 = vunpack.c.l.b16 %v707
    %v776 = vunpack.c.l.b16 %v708
    %v777 = vunpack.c.h.b16 %v708
    %v778 = vunpack.c.l.b16 %v709
    %v779 = vunpack.c.l.b16 %v710
    %v780 = vunpack.c.h.b16 %v710
    %v781 = vunpack.c.l.b16 %v711
    %v782 = vunpack.c.l.b16 %v712
    %v783 = vunpack.c.h.b16 %v712
    %v784 = vunpack.c.l.b16 %v713
    %v785 = vunpack.c.l.b16 %v714
    %v786 = vunpack.c.h.b16 %v714
    %v787 = vunpack.c.l.b16 %v715
    %v788 = vunpack.c.l.b16 %v716
    %v789 = vunpack.c.h.b16 %v716
    %v790 = vunpack.c.l.b16 %v717
    %v791 = vunpack.c.l.b16 %v718
    %v792 = vunpack.c.h.b16 %v718
    %v793 = vunpack.c.l.b16 %v719
    %v794 = vunpack.c.l.b16 %v720
    %v795 = vunpack.c.h.b16 %v720
    %v796 = vunpack.c.l.b16 %v721
    %v797 = vunpack.c.l.b16 %v722
    %v798 = vunpack.c.h.b16 %v722
    %v799 = vunpack.c.l.b16 %v723
    %v800 = vunpack.c.l.b16 %v724
    %v801 = vunpack.c.h.b16 %v724
    %v802 = vunpack.c.l.b16 %v725
    %v803 = vunpack.c.l.b16 %v726
    %v804 = vunpack.c.h.b16 %v726
    %v805 = vunpack.c.l.b16 %v727
    %v806 = vunpack.c.l.b16 %v728
    %v807 = vunpack.c.h.b16 %v728
    %v808 = vunpack.c.l.b16 %v729
    %v809 = vunpack.c.l.b16 %v730
    %v810 = vunpack.c.h.b16 %v730
    %v811 = vunpack.c.l.b16 %v731
    %v812 = vpack.c.b16 %v767, %v764
    %v813 = vpack.c.b16 %v768, %v765
    %v814 = vpack.c.b16 %v769, %v766
    %v815 = vpack.c.b16 %v773, %v770
    %v816 = vpack.c.b16 %v774, %v771
    %v817 = vpack.c.b16 %v775, %v772
    %v818 = vpack.c.b16 %v779, %v776
    %v819 = vpack.c.b16 %v780, %v777
    %v820 = vpack.c.b16 %v781, %v778
    %v821 = vpack.c.b16 %v785, %v782
    %v822 = vpack.c.b16 %v786, %v783
    %v823 = vpack.c.b16 %v787, %v784
    %v824 = vpack.c.b16 %v791, %v788
    %v825 = vpack.c.b16 %v792, %v789
    %v826 = vpack.c.b16 %v793, %v790
    %v827 = vpack.c.b16 %v797, %v794
    %v828 = vpack.c.b16 %v798, %v795
    %v829 = vpack.c.b16 %v799, %v796
    %v830 = vpack.c.b16 %v803, %v800
    %v831 = vpack.c.b16 %v804, %v801
    %v832 = vpack.c.b16 %v805, %v802
    %v833 = vpack.c.b16 %v809, %v806
    %v834 = vpack.c.b16 %v810, %v807
    %v835 = vpack.c.b16 %v811, %v808
    %860 = vmatprep.subr.bf16.mxu0 %v834
    %861 = vmatpush1.bf16.msra.mxu0 %v833
    %862 = vmatprep.subr.bf16.mxu0 %v831
    %863 = vmatpush1.bf16.msra.mxu0 %v830
    %864 = vmatprep.subr.bf16.mxu0 %v828
    %865 = vmatpush1.bf16.msra.mxu0 %v827
    %866 = vmatprep.subr.bf16.mxu0 %v825
    %867 = vmatpush1.bf16.msra.mxu0 %v824
    %868 = vmatprep.subr.bf16.mxu0 %v822
    %869 = vmatpush1.bf16.msra.mxu0 %v821
    %870 = vmatprep.subr.bf16.mxu0 %v819
    %871 = vmatpush1.bf16.msra.mxu0 %v818
    %872 = vmatprep.subr.bf16.mxu0 %v816
    %873 = vmatpush1.bf16.msra.mxu0 %v815
    %874 = vmatprep.subr.bf16.mxu0 %v813
    %875 = vmatpush1.bf16.msra.mxu0 %v812
    %876 = vmatprep.subr.bf16.mxu0 0
    %877 = vmatpush2.bf16.msra.mxu0 0
    %878 = vmatprep.subr.bf16.mxu0 0
    %879 = vmatpush2.bf16.msra.mxu0 0
    %880 = vmatprep.subr.bf16.mxu0 0
    %881 = vmatpush2.bf16.msra.mxu0 0
    %882 = vmatprep.subr.bf16.mxu0 0
    %883 = vmatpush2.bf16.msra.mxu0 0
    %884 = vmatprep.subr.bf16.mxu0 0
    %885 = vmatpush2.bf16.msra.mxu0 0
    %886 = vmatprep.subr.bf16.mxu0 0
    %887 = vmatpush2.bf16.msra.mxu0 0
    %888 = vmatprep.subr.bf16.mxu0 0
    %889 = vmatpush2.bf16.msra.mxu0 0
    %890 = vmatprep.subr.bf16.mxu0 0
    %891 = vmatpush2.bf16.msra.mxu0 0
    %892 = vmatprep.mubr.bf16.mxu0 0
    %893 = vmatmul.mubr.bf16.gmra.mxu0 0
    %v894 = vpop.f32.mrf.mxu0
    %v895 = vadd.f32 %v694, %v894
    %v896 = vpop.f32.mrf.mxu0
    %v897 = vadd.f32 %v695, %v896
    %v898 = vpop.f32.mrf.mxu0
    %v899 = vpop.f32.mrf.mxu0
    %900 = vdwg.mxu0
    %901 = vmatprep.subr.bf16.mxu0 0
    %902 = vmatpush1.bf16.msra.mxu0 %v835
    %903 = vmatprep.subr.bf16.mxu0 0
    %904 = vmatpush1.bf16.msra.mxu0 %v832
    %905 = vmatprep.subr.bf16.mxu0 0
    %906 = vmatpush1.bf16.msra.mxu0 %v829
    %907 = vmatprep.subr.bf16.mxu0 0
    %908 = vmatpush1.bf16.msra.mxu0 %v826
    %909 = vmatprep.subr.bf16.mxu0 0
    %910 = vmatpush1.bf16.msra.mxu0 %v823
    %911 = vmatprep.subr.bf16.mxu0 0
    %912 = vmatpush1.bf16.msra.mxu0 %v820
    %913 = vmatprep.subr.bf16.mxu0 0
    %914 = vmatpush1.bf16.msra.mxu0 %v817
    %915 = vmatprep.subr.bf16.mxu0 0
    %916 = vmatpush1.bf16.msra.mxu0 %v814
    %917 = vmatprep.subr.bf16.mxu0 0
    %918 = vmatpush2.bf16.msra.mxu0 0
    %919 = vmatprep.subr.bf16.mxu0 0
    %920 = vmatpush2.bf16.msra.mxu0 0
    %921 = vmatprep.subr.bf16.mxu0 0
    %922 = vmatpush2.bf16.msra.mxu0 0
    %923 = vmatprep.subr.bf16.mxu0 0
    %924 = vmatpush2.bf16.msra.mxu0 0
    %925 = vmatprep.subr.bf16.mxu0 0
    %926 = vmatpush2.bf16.msra.mxu0 0
    %927 = vmatprep.subr.bf16.mxu0 0
    %928 = vmatpush2.bf16.msra.mxu0 0
    %929 = vmatprep.subr.bf16.mxu0 0
    %930 = vmatpush2.bf16.msra.mxu0 0
    %931 = vmatprep.subr.bf16.mxu0 0
    %932 = vmatpush2.bf16.msra.mxu0 0
    %933 = vmatprep.mubr.bf16.mxu0 0
    %934 = vmatmul.mubr.bf16.gmra.mxu0 0
    %v935 = vpop.f32.mrf.mxu0
    %v936 = vadd.f32 %v696, %v935
    %v937 = vpop.f32.mrf.mxu0
    %v938 = vpop.f32.mrf.mxu0
    %v939 = vpop.f32.mrf.mxu0
    %940 = vdwg.mxu0
    %v941 = vadd.f32 %v697, %v895
    %v942 = vxor.u32 %v941, 2147483648
    %v943 = vmul.f32 %v942, 1.442695
    %v944 = vpow.pop %v943
    %v945 = vadd.f32 %v944, 1.0
    %v946 = vrcp.pop %v945
    %v947 = vmul.f32 1.0, %v946
    %v948 = vadd.f32 %v698, %v897
    %v949 = vxor.u32 %v948, 2147483648
    %v950 = vmul.f32 %v949, 1.442695
    %v951 = vpow.pop %v950
    %v952 = vadd.f32 %v951, 1.0
    %v953 = vrcp.pop %v952
    %v954 = vmul.f32 1.0, %v953
    %v955 = vmul.f32 %v947, %v936
    %v956 = vadd.f32 %v699, %v955
    %v957 = vtanh.pop %v956
    %v958 = vsub.f32 1.0, %v954
    %v959 = vmul.f32 %v958, %v957
    %v960 = vmul.f32 %v954, 0.0
    %v961 = vadd.f32 %v959, %v960
    %v962 = vld [vmem:[#allocation2 + $0x18] sm:$0xff]
    %v963 = vld [vmem:[#allocation2 + $0x20] sm:$0xff]
    %v964 = vld [vmem:[#allocation2 + $0x28] sm:$0xff]
    %v965 = vpack.c.bf16 %v961, %v961
    %966 = vmatprep.subr.bf16.mxu0 %v834
    %967 = vmatpush1.bf16.msra.mxu0 %v833
    %968 = vmatprep.subr.bf16.mxu0 %v831
    %969 = vmatpush1.bf16.msra.mxu0 %v830
    %970 = vmatprep.subr.bf16.mxu0 %v828
    %971 = vmatpush1.bf16.msra.mxu0 %v827
    %972 = vmatprep.subr.bf16.mxu0 %v825
    %973 = vmatpush1.bf16.msra.mxu0 %v824
    %974 = vmatprep.subr.bf16.mxu0 %v822
    %975 = vmatpush1.bf16.msra.mxu0 %v821
    %976 = vmatprep.subr.bf16.mxu0 %v819
    %977 = vmatpush1.bf16.msra.mxu0 %v818
    %978 = vmatprep.subr.bf16.mxu0 %v816
    %979 = vmatpush1.bf16.msra.mxu0 %v815
    %980 = vmatprep.subr.bf16.mxu0 %v813
    %981 = vmatpush1.bf16.msra.mxu0 %v812
    %982 = vmatprep.subr.bf16.mxu0 0
    %983 = vmatpush2.bf16.msra.mxu0 0
    %984 = vmatprep.subr.bf16.mxu0 0
    %985 = vmatpush2.bf16.msra.mxu0 0
    %986 = vmatprep.subr.bf16.mxu0 0
    %987 = vmatpush2.bf16.msra.mxu0 0
    %988 = vmatprep.subr.bf16.mxu0 0
    %989 = vmatpush2.bf16.msra.mxu0 0
    %990 = vmatprep.subr.bf16.mxu0 0
    %991 = vmatpush2.bf16.msra.mxu0 0
    %992 = vmatprep.subr.bf16.mxu0 0
    %993 = vmatpush2.bf16.msra.mxu0 0
    %994 = vmatprep.subr.bf16.mxu0 0
    %995 = vmatpush2.bf16.msra.mxu0 0
    %996 = vmatprep.subr.bf16.mxu0 0
    %997 = vmatpush2.bf16.msra.mxu0 0
    %998 = vmatprep.mubr.bf16.mxu0 0
    %999 = vmatmul.mubr.bf16.gmra.mxu0 %v965
    %v1000 = vpop.f32.mrf.mxu0
    %v1001 = vadd.f32 %v694, %v1000
    %v1002 = vpop.f32.mrf.mxu0
    %v1003 = vadd.f32 %v695, %v1002
    %v1004 = vpop.f32.mrf.mxu0
    %v1005 = vpop.f32.mrf.mxu0
    %1006 = vdwg.mxu0
    %1007 = vmatprep.subr.bf16.mxu0 0
    %1008 = vmatpush1.bf16.msra.mxu0 %v835
    %1009 = vmatprep.subr.bf16.mxu0 0
    %1010 = vmatpush1.bf16.msra.mxu0 %v832
    %1011 = vmatprep.subr.bf16.mxu0 0
    %1012 = vmatpush1.bf16.msra.mxu0 %v829
    %1013 = vmatprep.subr.bf16.mxu0 0
    %1014 = vmatpush1.bf16.msra.mxu0 %v826
    %1015 = vmatprep.subr.bf16.mxu0 0
    %1016 = vmatpush1.bf16.msra.mxu0 %v823
    %1017 = vmatprep.subr.bf16.mxu0 0
    %1018 = vmatpush1.bf16.msra.mxu0 %v820
    %1019 = vmatprep.subr.bf16.mxu0 0
    %1020 = vmatpush1.bf16.msra.mxu0 %v817
    %1021 = vmatprep.subr.bf16.mxu0 0
    %1022 = vmatpush1.bf16.msra.mxu0 %v814
    %1023 = vmatprep.subr.bf16.mxu0 0
    %1024 = vmatpush2.bf16.msra.mxu0 0
    %1025 = vmatprep.subr.bf16.mxu0 0
    %1026 = vmatpush2.bf16.msra.mxu0 0
    %1027 = vmatprep.subr.bf16.mxu0 0
    %1028 = vmatpush2.bf16.msra.mxu0 0
    %1029 = vmatprep.subr.bf16.mxu0 0
    %1030 = vmatpush2.bf16.msra.mxu0 0
    %1031 = vmatprep.subr.bf16.mxu0 0
    %1032 = vmatpush2.bf16.msra.mxu0 0
    %1033 = vmatprep.subr.bf16.mxu0 0
    %1034 = vmatpush2.bf16.msra.mxu0 0
    %1035 = vmatprep.subr.bf16.mxu0 0
    %1036 = vmatpush2.bf16.msra.mxu0 0
    %1037 = vmatprep.subr.bf16.mxu0 0
    %1038 = vmatpush2.bf16.msra.mxu0 0
    %1039 = vmatprep.mubr.bf16.mxu0 0
    %1040 = vmatmul.mubr.bf16.gmra.mxu0 %v965
    %v1041 = vpop.f32.mrf.mxu0
    %v1042 = vadd.f32 %v696, %v1041
    %v1043 = vpop.f32.mrf.mxu0
    %v1044 = vpop.f32.mrf.mxu0
    %v1045 = vpop.f32.mrf.mxu0
    %1046 = vdwg.mxu0
    %v1047 = vadd.f32 %v962, %v1001
    %v1048 = vxor.u32 %v1047, 2147483648
    %v1049 = vmul.f32 %v1048, 1.442695
    %v1050 = vpow.pop %v1049
    %v1051 = vadd.f32 %v1050, 1.0
    %v1052 = vrcp.pop %v1051
    %v1053 = vmul.f32 1.0, %v1052
    %v1054 = vadd.f32 %v963, %v1003
    %v1055 = vxor.u32 %v1054, 2147483648
    %v1056 = vmul.f32 %v1055, 1.442695
    %v1057 = vpow.pop %v1056
    %v1058 = vadd.f32 %v1057, 1.0
    %v1059 = vrcp.pop %v1058
    %v1060 = vmul.f32 1.0, %v1059
    %v1061 = vmul.f32 %v1053, %v1042
    %v1062 = vadd.f32 %v964, %v1061
    %v1063 = vtanh.pop %v1062
    %v1064 = vsub.f32 1.0, %v1060
    %v1065 = vmul.f32 %v1064, %v1063
    %v1066 = vmul.f32 %v1060, %v961
    %v1067 = vadd.f32 %v1065, %v1066
    %v1068 = vld [vmem:[#allocation2 + $0x30] sm:$0xff]
    %v1069 = vld [vmem:[#allocation2 + $0x38] sm:$0xff]
    %v1070 = vld [vmem:[#allocation2 + $0x40] sm:$0xff]
    %v1071 = vpack.c.bf16 %v1067, %v1067
    %1072 = vmatprep.subr.bf16.mxu0 %v834
    %1073 = vmatpush1.bf16.msra.mxu0 %v833
    %1074 = vmatprep.subr.bf16.mxu0 %v831
    %1075 = vmatpush1.bf16.msra.mxu0 %v830
    %1076 = vmatprep.subr.bf16.mxu0 %v828
    %1077 = vmatpush1.bf16.msra.mxu0 %v827
    %1078 = vmatprep.subr.bf16.mxu0 %v825
    %1079 = vmatpush1.bf16.msra.mxu0 %v824
    %1080 = vmatprep.subr.bf16.mxu0 %v822
    %1081 = vmatpush1.bf16.msra.mxu0 %v821
    %1082 = vmatprep.subr.bf16.mxu0 %v819
    %1083 = vmatpush1.bf16.msra.mxu0 %v818
    %1084 = vmatprep.subr.bf16.mxu0 %v816
    %1085 = vmatpush1.bf16.msra.mxu0 %v815
    %1086 = vmatprep.subr.bf16.mxu0 %v813
    %1087 = vmatpush1.bf16.msra.mxu0 %v812
    %1088 = vmatprep.subr.bf16.mxu0 0
    %1089 = vmatpush2.bf16.msra.mxu0 0
    %1090 = vmatprep.subr.bf16.mxu0 0
    %1091 = vmatpush2.bf16.msra.mxu0 0
    %1092 = vmatprep.subr.bf16.mxu0 0
    %1093 = vmatpush2.bf16.msra.mxu0 0
    %1094 = vmatprep.subr.bf16.mxu0 0
    %1095 = vmatpush2.bf16.msra.mxu0 0
    %1096 = vmatprep.subr.bf16.mxu0 0
    %1097 = vmatpush2.bf16.msra.mxu0 0
    %1098 = vmatprep.subr.bf16.mxu0 0
    %1099 = vmatpush2.bf16.msra.mxu0 0
    %1100 = vmatprep.subr.bf16.mxu0 0
    %1101 = vmatpush2.bf16.msra.mxu0 0
    %1102 = vmatprep.subr.bf16.mxu0 0
    %1103 = vmatpush2.bf16.msra.mxu0 0
    %1104 = vmatprep.mubr.bf16.mxu0 0
    %1105 = vmatmul.mubr.bf16.gmra.mxu0 %v1071
    %v1106 = vpop.f32.mrf.mxu0
    %v1107 = vadd.f32 %v694, %v1106
    %v1108 = vpop.f32.mrf.mxu0
    %v1109 = vadd.f32 %v695, %v1108
    %v1110 = vpop.f32.mrf.mxu0
    %v1111 = vpop.f32.mrf.mxu0
    %1112 = vdwg.mxu0
    %1113 = vmatprep.subr.bf16.mxu0 0
    %1114 = vmatpush1.bf16.msra.mxu0 %v835
    %1115 = vmatprep.subr.bf16.mxu0 0
    %1116 = vmatpush1.bf16.msra.mxu0 %v832
    %1117 = vmatprep.subr.bf16.mxu0 0
    %1118 = vmatpush1.bf16.msra.mxu0 %v829
    %1119 = vmatprep.subr.bf16.mxu0 0
    %1120 = vmatpush1.bf16.msra.mxu0 %v826
    %1121 = vmatprep.subr.bf16.mxu0 0
    %1122 = vmatpush1.bf16.msra.mxu0 %v823
    %1123 = vmatprep.subr.bf16.mxu0 0
    %1124 = vmatpush1.bf16.msra.mxu0 %v820
    %1125 = vmatprep.subr.bf16.mxu0 0
    %1126 = vmatpush1.bf16.msra.mxu0 %v817
    %1127 = vmatprep.subr.bf16.mxu0 0
    %1128 = vmatpush1.bf16.msra.mxu0 %v814
    %1129 = vmatprep.subr.bf16.mxu0 0
    %1130 = vmatpush2.bf16.msra.mxu0 0
    %1131 = vmatprep.subr.bf16.mxu0 0
    %1132 = vmatpush2.bf16.msra.mxu0 0
    %1133 = vmatprep.subr.bf16.mxu0 0
    %1134 = vmatpush2.bf16.msra.mxu0 0
    %1135 = vmatprep.subr.bf16.mxu0 0
    %1136 = vmatpush2.bf16.msra.mxu0 0
    %1137 = vmatprep.subr.bf16.mxu0 0
    %1138 = vmatpush2.bf16.msra.mxu0 0
    %1139 = vmatprep.subr.bf16.mxu0 0
    %1140 = vmatpush2.bf16.msra.mxu0 0
    %1141 = vmatprep.subr.bf16.mxu0 0
    %1142 = vmatpush2.bf16.msra.mxu0 0
    %1143 = vmatprep.subr.bf16.mxu0 0
    %1144 = vmatpush2.bf16.msra.mxu0 0
    %1145 = vmatprep.mubr.bf16.mxu0 0
    %1146 = vmatmul.mubr.bf16.gmra.mxu0 %v1071
    %v1147 = vpop.f32.mrf.mxu0
    %v1148 = vadd.f32 %v696, %v1147
    %v1149 = vpop.f32.mrf.mxu0
    %v1150 = vpop.f32.mrf.mxu0
    %v1151 = vpop.f32.mrf.mxu0
    %1152 = vdwg.mxu0
    %v1153 = vadd.f32 %v1068, %v1107
    %v1154 = vxor.u32 %v1153, 2147483648
    %v1155 = vmul.f32 %v1154, 1.442695
    %v1156 = vpow.pop %v1155
    %v1157 = vadd.f32 %v1156, 1.0
    %v1158 = vrcp.pop %v1157
    %v1159 = vmul.f32 1.0, %v1158
    %v1160 = vadd.f32 %v1069, %v1109
    %v1161 = vxor.u32 %v1160, 2147483648
    %v1162 = vmul.f32 %v1161, 1.442695
    %v1163 = vpow.pop %v1162
    %v1164 = vadd.f32 %v1163, 1.0
    %v1165 = vrcp.pop %v1164
    %v1166 = vmul.f32 1.0, %v1165
    %v1167 = vmul.f32 %v1159, %v1148
    %v1168 = vadd.f32 %v1070, %v1167
    %v1169 = vtanh.pop %v1168
    %v1170 = vsub.f32 1.0, %v1166
    %v1171 = vmul.f32 %v1170, %v1169
    %v1172 = vmul.f32 %v1166, %v1067
    %v1173 = vadd.f32 %v1171, %v1172
    %v1174 = vld [vmem:[#allocation2 + $0x48] sm:$0xff]
    %v1175 = vld [vmem:[#allocation2 + $0x50] sm:$0xff]
    %v1176 = vld [vmem:[#allocation2 + $0x58] sm:$0xff]
    %v1177 = vpack.c.bf16 %v1173, %v1173
    %1178 = vmatprep.subr.bf16.mxu0 %v834
    %1179 = vmatpush1.bf16.msra.mxu0 %v833
    %1180 = vmatprep.subr.bf16.mxu0 %v831
    %1181 = vmatpush1.bf16.msra.mxu0 %v830
    %1182 = vmatprep.subr.bf16.mxu0 %v828
    %1183 = vmatpush1.bf16.msra.mxu0 %v827
    %1184 = vmatprep.subr.bf16.mxu0 %v825
    %1185 = vmatpush1.bf16.msra.mxu0 %v824
    %1186 = vmatprep.subr.bf16.mxu0 %v822
    %1187 = vmatpush1.bf16.msra.mxu0 %v821
    %1188 = vmatprep.subr.bf16.mxu0 %v819
    %1189 = vmatpush1.bf16.msra.mxu0 %v818
    %1190 = vmatprep.subr.bf16.mxu0 %v816
    %1191 = vmatpush1.bf16.msra.mxu0 %v815
    %1192 = vmatprep.subr.bf16.mxu0 %v813
    %1193 = vmatpush1.bf16.msra.mxu0 %v812
    %1194 = vmatprep.subr.bf16.mxu0 0
    %1195 = vmatpush2.bf16.msra.mxu0 0
    %1196 = vmatprep.subr.bf16.mxu0 0
    %1197 = vmatpush2.bf16.msra.mxu0 0
    %1198 = vmatprep.subr.bf16.mxu0 0
    %1199 = vmatpush2.bf16.msra.mxu0 0
    %1200 = vmatprep.subr.bf16.mxu0 0
    %1201 = vmatpush2.bf16.msra.mxu0 0
    %1202 = vmatprep.subr.bf16.mxu0 0
    %1203 = vmatpush2.bf16.msra.mxu0 0
    %1204 = vmatprep.subr.bf16.mxu0 0
    %1205 = vmatpush2.bf16.msra.mxu0 0
    %1206 = vmatprep.subr.bf16.mxu0 0
    %1207 = vmatpush2.bf16.msra.mxu0 0
    %1208 = vmatprep.subr.bf16.mxu0 0
    %1209 = vmatpush2.bf16.msra.mxu0 0
    %1210 = vmatprep.mubr.bf16.mxu0 0
    %1211 = vmatmul.mubr.bf16.gmra.mxu0 %v1177
    %v1212 = vpop.f32.mrf.mxu0
    %v1213 = vadd.f32 %v694, %v1212
    %v1214 = vpop.f32.mrf.mxu0
    %v1215 = vadd.f32 %v695, %v1214
    %v1216 = vpop.f32.mrf.mxu0
    %v1217 = vpop.f32.mrf.mxu0
    %1218 = vdwg.mxu0
    %1219 = vmatprep.subr.bf16.mxu0 0
    %1220 = vmatpush1.bf16.msra.mxu0 %v835
    %1221 = vmatprep.subr.bf16.mxu0 0
    %1222 = vmatpush1.bf16.msra.mxu0 %v832
    %1223 = vmatprep.subr.bf16.mxu0 0
    %1224 = vmatpush1.bf16.msra.mxu0 %v829
    %1225 = vmatprep.subr.bf16.mxu0 0
    %1226 = vmatpush1.bf16.msra.mxu0 %v826
    %1227 = vmatprep.subr.bf16.mxu0 0
    %1228 = vmatpush1.bf16.msra.mxu0 %v823
    %1229 = vmatprep.subr.bf16.mxu0 0
    %1230 = vmatpush1.bf16.msra.mxu0 %v820
    %1231 = vmatprep.subr.bf16.mxu0 0
    %1232 = vmatpush1.bf16.msra.mxu0 %v817
    %1233 = vmatprep.subr.bf16.mxu0 0
    %1234 = vmatpush1.bf16.msra.mxu0 %v814
    %1235 = vmatprep.subr.bf16.mxu0 0
    %1236 = vmatpush2.bf16.msra.mxu0 0
    %1237 = vmatprep.subr.bf16.mxu0 0
    %1238 = vmatpush2.bf16.msra.mxu0 0
    %1239 = vmatprep.subr.bf16.mxu0 0
    %1240 = vmatpush2.bf16.msra.mxu0 0
    %1241 = vmatprep.subr.bf16.mxu0 0
    %1242 = vmatpush2.bf16.msra.mxu0 0
    %1243 = vmatprep.subr.bf16.mxu0 0
    %1244 = vmatpush2.bf16.msra.mxu0 0
    %1245 = vmatprep.subr.bf16.mxu0 0
    %1246 = vmatpush2.bf16.msra.mxu0 0
    %1247 = vmatprep.subr.bf16.mxu0 0
    %1248 = vmatpush2.bf16.msra.mxu0 0
    %1249 = vmatprep.subr.bf16.mxu0 0
    %1250 = vmatpush2.bf16.msra.mxu0 0
    %1251 = vmatprep.mubr.bf16.mxu0 0
    %1252 = vmatmul.mubr.bf16.gmra.mxu0 %v1177
    %v1253 = vpop.f32.mrf.mxu0
    %v1254 = vadd.f32 %v696, %v1253
    %v1255 = vpop.f32.mrf.mxu0
    %v1256 = vpop.f32.mrf.mxu0
    %v1257 = vpop.f32.mrf.mxu0
    %1258 = vdwg.mxu0
    %v1259 = vadd.f32 %v1174, %v1213
    %v1260 = vxor.u32 %v1259, 2147483648
    %v1261 = vmul.f32 %v1260, 1.442695
    %v1262 = vpow.pop %v1261
    %v1263 = vadd.f32 %v1262, 1.0
    %v1264 = vrcp.pop %v1263
    %v1265 = vmul.f32 1.0, %v1264
    %v1266 = vadd.f32 %v1175, %v1215
    %v1267 = vxor.u32 %v1266, 2147483648
    %v1268 = vmul.f32 %v1267, 1.442695
    %v1269 = vpow.pop %v1268
    %v1270 = vadd.f32 %v1269, 1.0
    %v1271 = vrcp.pop %v1270
    %v1272 = vmul.f32 1.0, %v1271
    %v1273 = vmul.f32 %v1265, %v1254
    %v1274 = vadd.f32 %v1176, %v1273
    %v1275 = vtanh.pop %v1274
    %v1276 = vsub.f32 1.0, %v1272
    %v1277 = vmul.f32 %v1276, %v1275
    %v1278 = vmul.f32 %v1272, %v1173
    %v1279 = vadd.f32 %v1277, %v1278
    %v1280 = vld [vmem:[#allocation2 + $0x60] sm:$0xff]
    %v1281 = vld [vmem:[#allocation2 + $0x68] sm:$0xff]
    %v1282 = vld [vmem:[#allocation2 + $0x70] sm:$0xff]
    %v1283 = vpack.c.bf16 %v1279, %v1279
    %1284 = vmatprep.subr.bf16.mxu0 %v834
    %1285 = vmatpush1.bf16.msra.mxu0 %v833
    %1286 = vmatprep.subr.bf16.mxu0 %v831
    %1287 = vmatpush1.bf16.msra.mxu0 %v830
    %1288 = vmatprep.subr.bf16.mxu0 %v828
    %1289 = vmatpush1.bf16.msra.mxu0 %v827
    %1290 = vmatprep.subr.bf16.mxu0 %v825
    %1291 = vmatpush1.bf16.msra.mxu0 %v824
    %1292 = vmatprep.subr.bf16.mxu0 %v822
    %1293 = vmatpush1.bf16.msra.mxu0 %v821
    %1294 = vmatprep.subr.bf16.mxu0 %v819
    %1295 = vmatpush1.bf16.msra.mxu0 %v818
    %1296 = vmatprep.subr.bf16.mxu0 %v816
    %1297 = vmatpush1.bf16.msra.mxu0 %v815
    %1298 = vmatprep.subr.bf16.mxu0 %v813
    %1299 = vmatpush1.bf16.msra.mxu0 %v812
    %1300 = vmatprep.subr.bf16.mxu0 0
    %1301 = vmatpush2.bf16.msra.mxu0 0
    %1302 = vmatprep.subr.bf16.mxu0 0
    %1303 = vmatpush2.bf16.msra.mxu0 0
    %1304 = vmatprep.subr.bf16.mxu0 0
    %1305 = vmatpush2.bf16.msra.mxu0 0
    %1306 = vmatprep.subr.bf16.mxu0 0
    %1307 = vmatpush2.bf16.msra.mxu0 0
    %1308 = vmatprep.subr.bf16.mxu0 0
    %1309 = vmatpush2.bf16.msra.mxu0 0
    %1310 = vmatprep.subr.bf16.mxu0 0
    %1311 = vmatpush2.bf16.msra.mxu0 0
    %1312 = vmatprep.subr.bf16.mxu0 0
    %1313 = vmatpush2.bf16.msra.mxu0 0
    %1314 = vmatprep.subr.bf16.mxu0 0
    %1315 = vmatpush2.bf16.msra.mxu0 0
    %1316 = vmatprep.mubr.bf16.mxu0 0
    %1317 = vmatmul.mubr.bf16.gmra.mxu0 %v1283
    %v1318 = vpop.f32.mrf.mxu0
    %v1319 = vadd.f32 %v694, %v1318
    %v1320 = vpop.f32.mrf.mxu0
    %v1321 = vadd.f32 %v695, %v1320
    %v1322 = vpop.f32.mrf.mxu0
    %v1323 = vpop.f32.mrf.mxu0
    %1324 = vdwg.mxu0
    %1325 = vmatprep.subr.bf16.mxu0 0
    %1326 = vmatpush1.bf16.msra.mxu0 %v835
    %1327 = vmatprep.subr.bf16.mxu0 0
    %1328 = vmatpush1.bf16.msra.mxu0 %v832
    %1329 = vmatprep.subr.bf16.mxu0 0
    %1330 = vmatpush1.bf16.msra.mxu0 %v829
    %1331 = vmatprep.subr.bf16.mxu0 0
    %1332 = vmatpush1.bf16.msra.mxu0 %v826
    %1333 = vmatprep.subr.bf16.mxu0 0
    %1334 = vmatpush1.bf16.msra.mxu0 %v823
    %1335 = vmatprep.subr.bf16.mxu0 0
    %1336 = vmatpush1.bf16.msra.mxu0 %v820
    %1337 = vmatprep.subr.bf16.mxu0 0
    %1338 = vmatpush1.bf16.msra.mxu0 %v817
    %1339 = vmatprep.subr.bf16.mxu0 0
    %1340 = vmatpush1.bf16.msra.mxu0 %v814
    %1341 = vmatprep.subr.bf16.mxu0 0
    %1342 = vmatpush2.bf16.msra.mxu0 0
    %1343 = vmatprep.subr.bf16.mxu0 0
    %1344 = vmatpush2.bf16.msra.mxu0 0
    %1345 = vmatprep.subr.bf16.mxu0 0
    %1346 = vmatpush2.bf16.msra.mxu0 0
    %1347 = vmatprep.subr.bf16.mxu0 0
    %1348 = vmatpush2.bf16.msra.mxu0 0
    %1349 = vmatprep.subr.bf16.mxu0 0
    %1350 = vmatpush2.bf16.msra.mxu0 0
    %1351 = vmatprep.subr.bf16.mxu0 0
    %1352 = vmatpush2.bf16.msra.mxu0 0
    %1353 = vmatprep.subr.bf16.mxu0 0
    %1354 = vmatpush2.bf16.msra.mxu0 0
    %1355 = vmatprep.subr.bf16.mxu0 0
    %1356 = vmatpush2.bf16.msra.mxu0 0
    %1357 = vmatprep.mubr.bf16.mxu0 0
    %1358 = vmatmul.mubr.bf16.gmra.mxu0 %v1283
    %v1359 = vpop.f32.mrf.mxu0
    %v1360 = vadd.f32 %v696, %v1359
    %v1361 = vpop.f32.mrf.mxu0
    %v1362 = vpop.f32.mrf.mxu0
    %v1363 = vpop.f32.mrf.mxu0
    %1364 = vdwg.mxu0
    %v1365 = vadd.f32 %v1280, %v1319
    %v1366 = vxor.u32 %v1365, 2147483648
    %v1367 = vmul.f32 %v1366, 1.442695
    %v1368 = vpow.pop %v1367
    %v1369 = vadd.f32 %v1368, 1.0
    %v1370 = vrcp.pop %v1369
    %v1371 = vmul.f32 1.0, %v1370
    %v1372 = vadd.f32 %v1281, %v1321
    %v1373 = vxor.u32 %v1372, 2147483648
    %v1374 = vmul.f32 %v1373, 1.442695
    %v1375 = vpow.pop %v1374
    %v1376 = vadd.f32 %v1375, 1.0
    %v1377 = vrcp.pop %v1376
    %v1378 = vmul.f32 1.0, %v1377
    %v1379 = vmul.f32 %v1371, %v1360
    %v1380 = vadd.f32 %v1282, %v1379
    %v1381 = vtanh.pop %v1380
    %v1382 = vsub.f32 1.0, %v1378
    %v1383 = vmul.f32 %v1382, %v1381
    %v1384 = vmul.f32 %v1378, %v1279
    %v1385 = vadd.f32 %v1383, %v1384
    %v1386 = vld [vmem:[#allocation2 + $0x78] sm:$0xff]
    %v1387 = vld [vmem:[#allocation2 + $0x80] sm:$0xff]
    %v1388 = vld [vmem:[#allocation2 + $0x88] sm:$0xff]
    %v1389 = vpack.c.bf16 %v1385, %v1385
    %1390 = vmatprep.subr.bf16.mxu0 %v834
    %1391 = vmatpush1.bf16.msra.mxu0 %v833
    %1392 = vmatprep.subr.bf16.mxu0 %v831
    %1393 = vmatpush1.bf16.msra.mxu0 %v830
    %1394 = vmatprep.subr.bf16.mxu0 %v828
    %1395 = vmatpush1.bf16.msra.mxu0 %v827
    %1396 = vmatprep.subr.bf16.mxu0 %v825
    %1397 = vmatpush1.bf16.msra.mxu0 %v824
    %1398 = vmatprep.subr.bf16.mxu0 %v822
    %1399 = vmatpush1.bf16.msra.mxu0 %v821
    %1400 = vmatprep.subr.bf16.mxu0 %v819
    %1401 = vmatpush1.bf16.msra.mxu0 %v818
    %1402 = vmatprep.subr.bf16.mxu0 %v816
    %1403 = vmatpush1.bf16.msra.mxu0 %v815
    %1404 = vmatprep.subr.bf16.mxu0 %v813
    %1405 = vmatpush1.bf16.msra.mxu0 %v812
    %1406 = vmatprep.subr.bf16.mxu0 0
    %1407 = vmatpush2.bf16.msra.mxu0 0
    %1408 = vmatprep.subr.bf16.mxu0 0
    %1409 = vmatpush2.bf16.msra.mxu0 0
    %1410 = vmatprep.subr.bf16.mxu0 0
    %1411 = vmatpush2.bf16.msra.mxu0 0
    %1412 = vmatprep.subr.bf16.mxu0 0
    %1413 = vmatpush2.bf16.msra.mxu0 0
    %1414 = vmatprep.subr.bf16.mxu0 0
    %1415 = vmatpush2.bf16.msra.mxu0 0
    %1416 = vmatprep.subr.bf16.mxu0 0
    %1417 = vmatpush2.bf16.msra.mxu0 0
    %1418 = vmatprep.subr.bf16.mxu0 0
    %1419 = vmatpush2.bf16.msra.mxu0 0
    %1420 = vmatprep.subr.bf16.mxu0 0
    %1421 = vmatpush2.bf16.msra.mxu0 0
    %1422 = vmatprep.mubr.bf16.mxu0 0
    %1423 = vmatmul.mubr.bf16.gmra.mxu0 %v1389
    %v1424 = vpop.f32.mrf.mxu0
    %v1425 = vadd.f32 %v694, %v1424
    %v1426 = vpop.f32.mrf.mxu0
    %v1427 = vadd.f32 %v695, %v1426
    %v1428 = vpop.f32.mrf.mxu0
    %v1429 = vpop.f32.mrf.mxu0
    %1430 = vdwg.mxu0
    %1431 = vmatprep.subr.bf16.mxu0 0
    %1432 = vmatpush1.bf16.msra.mxu0 %v835
    %1433 = vmatprep.subr.bf16.mxu0 0
    %1434 = vmatpush1.bf16.msra.mxu0 %v832
    %1435 = vmatprep.subr.bf16.mxu0 0
    %1436 = vmatpush1.bf16.msra.mxu0 %v829
    %1437 = vmatprep.subr.bf16.mxu0 0
    %1438 = vmatpush1.bf16.msra.mxu0 %v826
    %1439 = vmatprep.subr.bf16.mxu0 0
    %1440 = vmatpush1.bf16.msra.mxu0 %v823
    %1441 = vmatprep.subr.bf16.mxu0 0
    %1442 = vmatpush1.bf16.msra.mxu0 %v820
    %1443 = vmatprep.subr.bf16.mxu0 0
    %1444 = vmatpush1.bf16.msra.mxu0 %v817
    %1445 = vmatprep.subr.bf16.mxu0 0
    %1446 = vmatpush1.bf16.msra.mxu0 %v814
    %1447 = vmatprep.subr.bf16.mxu0 0
    %1448 = vmatpush2.bf16.msra.mxu0 0
    %1449 = vmatprep.subr.bf16.mxu0 0
    %1450 = vmatpush2.bf16.msra.mxu0 0
    %1451 = vmatprep.subr.bf16.mxu0 0
    %1452 = vmatpush2.bf16.msra.mxu0 0
    %1453 = vmatprep.subr.bf16.mxu0 0
    %1454 = vmatpush2.bf16.msra.mxu0 0
    %1455 = vmatprep.subr.bf16.mxu0 0
    %1456 = vmatpush2.bf16.msra.mxu0 0
    %1457 = vmatprep.subr.bf16.mxu0 0
    %1458 = vmatpush2.bf16.msra.mxu0 0
    %1459 = vmatprep.subr.bf16.mxu0 0
    %1460 = vmatpush2.bf16.msra.mxu0 0
    %1461 = vmatprep.subr.bf16.mxu0 0
    %1462 = vmatpush2.bf16.msra.mxu0 0
    %1463 = vmatprep.mubr.bf16.mxu0 0
    %1464 = vmatmul.mubr.bf16.gmra.mxu0 %v1389
    %v1465 = vpop.f32.mrf.mxu0
    %v1466 = vadd.f32 %v696, %v1465
    %v1467 = vpop.f32.mrf.mxu0
    %v1468 = vpop.f32.mrf.mxu0
    %v1469 = vpop.f32.mrf.mxu0
    %1470 = vdwg.mxu0
    %v1471 = vadd.f32 %v1386, %v1425
    %v1472 = vxor.u32 %v1471, 2147483648
    %v1473 = vmul.f32 %v1472, 1.442695
    %v1474 = vpow.pop %v1473
    %v1475 = vadd.f32 %v1474, 1.0
    %v1476 = vrcp.pop %v1475
    %v1477 = vmul.f32 1.0, %v1476
    %v1478 = vadd.f32 %v1387, %v1427
    %v1479 = vxor.u32 %v1478, 2147483648
    %v1480 = vmul.f32 %v1479, 1.442695
    %v1481 = vpow.pop %v1480
    %v1482 = vadd.f32 %v1481, 1.0
    %v1483 = vrcp.pop %v1482
    %v1484 = vmul.f32 1.0, %v1483
    %v1485 = vmul.f32 %v1477, %v1466
    %v1486 = vadd.f32 %v1388, %v1485
    %v1487 = vtanh.pop %v1486
    %v1488 = vsub.f32 1.0, %v1484
    %v1489 = vmul.f32 %v1488, %v1487
    %v1490 = vmul.f32 %v1484, %v1385
    %v1491 = vadd.f32 %v1489, %v1490
    %v1492 = vld [vmem:[#allocation2 + $0x90] sm:$0xff]
    %v1493 = vld [vmem:[#allocation2 + $0x98] sm:$0xff]
    %v1494 = vld [vmem:[#allocation2 + $0xa0] sm:$0xff]
    %v1495 = vpack.c.bf16 %v1491, %v1491
    %1496 = vmatprep.subr.bf16.mxu0 %v834
    %1497 = vmatpush1.bf16.msra.mxu0 %v833
    %1498 = vmatprep.subr.bf16.mxu0 %v831
    %1499 = vmatpush1.bf16.msra.mxu0 %v830
    %1500 = vmatprep.subr.bf16.mxu0 %v828
    %1501 = vmatpush1.bf16.msra.mxu0 %v827
    %1502 = vmatprep.subr.bf16.mxu0 %v825
    %1503 = vmatpush1.bf16.msra.mxu0 %v824
    %1504 = vmatprep.subr.bf16.mxu0 %v822
    %1505 = vmatpush1.bf16.msra.mxu0 %v821
    %1506 = vmatprep.subr.bf16.mxu0 %v819
    %1507 = vmatpush1.bf16.msra.mxu0 %v818
    %1508 = vmatprep.subr.bf16.mxu0 %v816
    %1509 = vmatpush1.bf16.msra.mxu0 %v815
    %1510 = vmatprep.subr.bf16.mxu0 %v813
    %1511 = vmatpush1.bf16.msra.mxu0 %v812
    %1512 = vmatprep.subr.bf16.mxu0 0
    %1513 = vmatpush2.bf16.msra.mxu0 0
    %1514 = vmatprep.subr.bf16.mxu0 0
    %1515 = vmatpush2.bf16.msra.mxu0 0
    %1516 = vmatprep.subr.bf16.mxu0 0
    %1517 = vmatpush2.bf16.msra.mxu0 0
    %1518 = vmatprep.subr.bf16.mxu0 0
    %1519 = vmatpush2.bf16.msra.mxu0 0
    %1520 = vmatprep.subr.bf16.mxu0 0
    %1521 = vmatpush2.bf16.msra.mxu0 0
    %1522 = vmatprep.subr.bf16.mxu0 0
    %1523 = vmatpush2.bf16.msra.mxu0 0
    %1524 = vmatprep.subr.bf16.mxu0 0
    %1525 = vmatpush2.bf16.msra.mxu0 0
    %1526 = vmatprep.subr.bf16.mxu0 0
    %1527 = vmatpush2.bf16.msra.mxu0 0
    %1528 = vmatprep.mubr.bf16.mxu0 0
    %1529 = vmatmul.mubr.bf16.gmra.mxu0 %v1495
    %v1530 = vpop.f32.mrf.mxu0
    %v1531 = vadd.f32 %v694, %v1530
    %v1532 = vpop.f32.mrf.mxu0
    %v1533 = vadd.f32 %v695, %v1532
    %v1534 = vpop.f32.mrf.mxu0
    %v1535 = vpop.f32.mrf.mxu0
    %1536 = vdwg.mxu0
    %1537 = vmatprep.subr.bf16.mxu0 0
    %1538 = vmatpush1.bf16.msra.mxu0 %v835
    %1539 = vmatprep.subr.bf16.mxu0 0
    %1540 = vmatpush1.bf16.msra.mxu0 %v832
    %1541 = vmatprep.subr.bf16.mxu0 0
    %1542 = vmatpush1.bf16.msra.mxu0 %v829
    %1543 = vmatprep.subr.bf16.mxu0 0
    %1544 = vmatpush1.bf16.msra.mxu0 %v826
    %1545 = vmatprep.subr.bf16.mxu0 0
    %1546 = vmatpush1.bf16.msra.mxu0 %v823
    %1547 = vmatprep.subr.bf16.mxu0 0
    %1548 = vmatpush1.bf16.msra.mxu0 %v820
    %1549 = vmatprep.subr.bf16.mxu0 0
    %1550 = vmatpush1.bf16.msra.mxu0 %v817
    %1551 = vmatprep.subr.bf16.mxu0 0
    %1552 = vmatpush1.bf16.msra.mxu0 %v814
    %1553 = vmatprep.subr.bf16.mxu0 0
    %1554 = vmatpush2.bf16.msra.mxu0 0
    %1555 = vmatprep.subr.bf16.mxu0 0
    %1556 = vmatpush2.bf16.msra.mxu0 0
    %1557 = vmatprep.subr.bf16.mxu0 0
    %1558 = vmatpush2.bf16.msra.mxu0 0
    %1559 = vmatprep.subr.bf16.mxu0 0
    %1560 = vmatpush2.bf16.msra.mxu0 0
    %1561 = vmatprep.subr.bf16.mxu0 0
    %1562 = vmatpush2.bf16.msra.mxu0 0
    %1563 = vmatprep.subr.bf16.mxu0 0
    %1564 = vmatpush2.bf16.msra.mxu0 0
    %1565 = vmatprep.subr.bf16.mxu0 0
    %1566 = vmatpush2.bf16.msra.mxu0 0
    %1567 = vmatprep.subr.bf16.mxu0 0
    %1568 = vmatpush2.bf16.msra.mxu0 0
    %1569 = vmatprep.mubr.bf16.mxu0 0
    %1570 = vmatmul.mubr.bf16.gmra.mxu0 %v1495
    %v1571 = vpop.f32.mrf.mxu0
    %v1572 = vadd.f32 %v696, %v1571
    %v1573 = vpop.f32.mrf.mxu0
    %v1574 = vpop.f32.mrf.mxu0
    %v1575 = vpop.f32.mrf.mxu0
    %1576 = vdwg.mxu0
    %v1577 = vadd.f32 %v1492, %v1531
    %v1578 = vxor.u32 %v1577, 2147483648
    %v1579 = vmul.f32 %v1578, 1.442695
    %v1580 = vpow.pop %v1579
    %v1581 = vadd.f32 %v1580, 1.0
    %v1582 = vrcp.pop %v1581
    %v1583 = vmul.f32 1.0, %v1582
    %v1584 = vadd.f32 %v1493, %v1533
    %v1585 = vxor.u32 %v1584, 2147483648
    %v1586 = vmul.f32 %v1585, 1.442695
    %v1587 = vpow.pop %v1586
    %v1588 = vadd.f32 %v1587, 1.0
    %v1589 = vrcp.pop %v1588
    %v1590 = vmul.f32 1.0, %v1589
    %v1591 = vmul.f32 %v1583, %v1572
    %v1592 = vadd.f32 %v1494, %v1591
    %v1593 = vtanh.pop %v1592
    %v1594 = vsub.f32 1.0, %v1590
    %v1595 = vmul.f32 %v1594, %v1593
    %v1596 = vmul.f32 %v1590, %v1491
    %v1597 = vadd.f32 %v1595, %v1596
    %v1598 = vld [vmem:[#allocation2 + $0xa8] sm:$0xff]
    %v1599 = vld [vmem:[#allocation2 + $0xb0] sm:$0xff]
    %v1600 = vld [vmem:[#allocation2 + $0xb8] sm:$0xff]
    %v1601 = vpack.c.bf16 %v1597, %v1597
    %1602 = vmatprep.subr.bf16.mxu0 %v834
    %1603 = vmatpush1.bf16.msra.mxu0 %v833
    %1604 = vmatprep.subr.bf16.mxu0 %v831
    %1605 = vmatpush1.bf16.msra.mxu0 %v830
    %1606 = vmatprep.subr.bf16.mxu0 %v828
    %1607 = vmatpush1.bf16.msra.mxu0 %v827
    %1608 = vmatprep.subr.bf16.mxu0 %v825
    %1609 = vmatpush1.bf16.msra.mxu0 %v824
    %1610 = vmatprep.subr.bf16.mxu0 %v822
    %1611 = vmatpush1.bf16.msra.mxu0 %v821
    %1612 = vmatprep.subr.bf16.mxu0 %v819
    %1613 = vmatpush1.bf16.msra.mxu0 %v818
    %1614 = vmatprep.subr.bf16.mxu0 %v816
    %1615 = vmatpush1.bf16.msra.mxu0 %v815
    %1616 = vmatprep.subr.bf16.mxu0 %v813
    %1617 = vmatpush1.bf16.msra.mxu0 %v812
    %1618 = vmatprep.subr.bf16.mxu0 0
    %1619 = vmatpush2.bf16.msra.mxu0 0
    %1620 = vmatprep.subr.bf16.mxu0 0
    %1621 = vmatpush2.bf16.msra.mxu0 0
    %1622 = vmatprep.subr.bf16.mxu0 0
    %1623 = vmatpush2.bf16.msra.mxu0 0
    %1624 = vmatprep.subr.bf16.mxu0 0
    %1625 = vmatpush2.bf16.msra.mxu0 0
    %1626 = vmatprep.subr.bf16.mxu0 0
    %1627 = vmatpush2.bf16.msra.mxu0 0
    %1628 = vmatprep.subr.bf16.mxu0 0
    %1629 = vmatpush2.bf16.msra.mxu0 0
    %1630 = vmatprep.subr.bf16.mxu0 0
    %1631 = vmatpush2.bf16.msra.mxu0 0
    %1632 = vmatprep.subr.bf16.mxu0 0
    %1633 = vmatpush2.bf16.msra.mxu0 0
    %1634 = vmatprep.mubr.bf16.mxu0 0
    %1635 = vmatmul.mubr.bf16.gmra.mxu0 %v1601
    %v1636 = vpop.f32.mrf.mxu0
    %v1637 = vadd.f32 %v694, %v1636
    %v1638 = vpop.f32.mrf.mxu0
    %v1639 = vadd.f32 %v695, %v1638
    %v1640 = vpop.f32.mrf.mxu0
    %v1641 = vpop.f32.mrf.mxu0
    %1642 = vdwg.mxu0
    %1643 = vmatprep.subr.bf16.mxu0 0
    %1644 = vmatpush1.bf16.msra.mxu0 %v835
    %1645 = vmatprep.subr.bf16.mxu0 0
    %1646 = vmatpush1.bf16.msra.mxu0 %v832
    %1647 = vmatprep.subr.bf16.mxu0 0
    %1648 = vmatpush1.bf16.msra.mxu0 %v829
    %1649 = vmatprep.subr.bf16.mxu0 0
    %1650 = vmatpush1.bf16.msra.mxu0 %v826
    %1651 = vmatprep.subr.bf16.mxu0 0
    %1652 = vmatpush1.bf16.msra.mxu0 %v823
    %1653 = vmatprep.subr.bf16.mxu0 0
    %1654 = vmatpush1.bf16.msra.mxu0 %v820
    %1655 = vmatprep.subr.bf16.mxu0 0
    %1656 = vmatpush1.bf16.msra.mxu0 %v817
    %1657 = vmatprep.subr.bf16.mxu0 0
    %1658 = vmatpush1.bf16.msra.mxu0 %v814
    %1659 = vmatprep.subr.bf16.mxu0 0
    %1660 = vmatpush2.bf16.msra.mxu0 0
    %1661 = vmatprep.subr.bf16.mxu0 0
    %1662 = vmatpush2.bf16.msra.mxu0 0
    %1663 = vmatprep.subr.bf16.mxu0 0
    %1664 = vmatpush2.bf16.msra.mxu0 0
    %1665 = vmatprep.subr.bf16.mxu0 0
    %1666 = vmatpush2.bf16.msra.mxu0 0
    %1667 = vmatprep.subr.bf16.mxu0 0
    %1668 = vmatpush2.bf16.msra.mxu0 0
    %1669 = vmatprep.subr.bf16.mxu0 0
    %1670 = vmatpush2.bf16.msra.mxu0 0
    %1671 = vmatprep.subr.bf16.mxu0 0
    %1672 = vmatpush2.bf16.msra.mxu0 0
    %1673 = vmatprep.subr.bf16.mxu0 0
    %1674 = vmatpush2.bf16.msra.mxu0 0
    %1675 = vmatprep.mubr.bf16.mxu0 0
    %1676 = vmatmul.mubr.bf16.gmra.mxu0 %v1601
    %v1677 = vpop.f32.mrf.mxu0
    %v1678 = vadd.f32 %v696, %v1677
    %v1679 = vpop.f32.mrf.mxu0
    %v1680 = vpop.f32.mrf.mxu0
    %v1681 = vpop.f32.mrf.mxu0
    %1682 = vdwg.mxu0
    %v1683 = vadd.f32 %v1598, %v1637
    %v1684 = vxor.u32 %v1683, 2147483648
    %v1685 = vmul.f32 %v1684, 1.442695
    %v1686 = vpow.pop %v1685
    %v1687 = vadd.f32 %v1686, 1.0
    %v1688 = vrcp.pop %v1687
    %v1689 = vmul.f32 1.0, %v1688
    %v1690 = vadd.f32 %v1599, %v1639
    %v1691 = vxor.u32 %v1690, 2147483648
    %v1692 = vmul.f32 %v1691, 1.442695
    %v1693 = vpow.pop %v1692
    %v1694 = vadd.f32 %v1693, 1.0
    %v1695 = vrcp.pop %v1694
    %v1696 = vmul.f32 1.0, %v1695
    %v1697 = vmul.f32 %v1689, %v1678
    %v1698 = vadd.f32 %v1600, %v1697
    %v1699 = vtanh.pop %v1698
    %v1700 = vsub.f32 1.0, %v1696
    %v1701 = vmul.f32 %v1700, %v1699
    %v1702 = vmul.f32 %v1696, %v1597
    %v1703 = vadd.f32 %v1701, %v1702
    %v1704 = vld [vmem:[%s2] sm:$0xff]
    %v1705 = vld [vmem:[%s7] sm:$0xff]
    %v1706 = vld [vmem:[%s7 + $0x8] sm:$0xff]
    %v1707 = vld [vmem:[%s7 + $0x10] sm:$0xff]
    %v1708 = vld [vmem:[%s7 + $0x18] sm:$0xff]
    %v1709 = vld [vmem:[%s7 + $0x20] sm:$0xff]
    %v1710 = vld [vmem:[%s7 + $0x28] sm:$0xff]
    %v1711 = vld [vmem:[%s7 + $0x30] sm:$0xff]
    %v1712 = vld [vmem:[%s7 + $0x38] sm:$0xff]
    %v1713 = vld [vmem:[%s7 + $0x40] sm:$0xff]
    %v1714 = vld [vmem:[%s7 + $0x48] sm:$0xff]
    %v1715 = vld [vmem:[%s7 + $0x50] sm:$0xff]
    %v1716 = vld [vmem:[%s7 + $0x58] sm:$0xff]
    %v1717 = vld [vmem:[%s7 + $0x60] sm:$0xff]
    %v1718 = vld [vmem:[%s7 + $0x68] sm:$0xff]
    %v1719 = vld [vmem:[%s7 + $0x70] sm:$0xff]
    %v1720 = vld [vmem:[%s7 + $0x78] sm:$0xff]
    %v1721 = vld [vmem:[%s8] sm:$0x1]
    %v1723 = vlaneseq
    %v1724 = vshrl.u32 %v1723, 7
    %v1725 = vsub.s32 0, %v1724
    %v1726 = vrot.slane %v1721, %v1725
    %1728 = vmatprep.subr.mxu0 0.0
    %1729 = vmatpush1.msra.mxu0 %v1720
    %1730 = vmatprep.subr.mxu0 0.0
    %1731 = vmatpush1.msra.mxu0 %v1719
    %1732 = vmatprep.subr.mxu0 0.0
    %1733 = vmatpush1.msra.mxu0 %v1718
    %1734 = vmatprep.subr.mxu0 0.0
    %1735 = vmatpush1.msra.mxu0 %v1717
    %1736 = vmatprep.subr.mxu0 0.0
    %1737 = vmatpush1.msra.mxu0 %v1716
    %1738 = vmatprep.subr.mxu0 0.0
    %1739 = vmatpush1.msra.mxu0 %v1715
    %1740 = vmatprep.subr.mxu0 0.0
    %1741 = vmatpush1.msra.mxu0 %v1714
    %1742 = vmatprep.subr.mxu0 0.0
    %1743 = vmatpush1.msra.mxu0 %v1713
    %1744 = vmatprep.subr.mxu0 0.0
    %1745 = vmatpush1.msra.mxu0 %v1712
    %1746 = vmatprep.subr.mxu0 0.0
    %1747 = vmatpush1.msra.mxu0 %v1711
    %1748 = vmatprep.subr.mxu0 0.0
    %1749 = vmatpush1.msra.mxu0 %v1710
    %1750 = vmatprep.subr.mxu0 0.0
    %1751 = vmatpush1.msra.mxu0 %v1709
    %1752 = vmatprep.subr.mxu0 0.0
    %1753 = vmatpush1.msra.mxu0 %v1708
    %1754 = vmatprep.subr.mxu0 0.0
    %1755 = vmatpush1.msra.mxu0 %v1707
    %1756 = vmatprep.subr.mxu0 0.0
    %1757 = vmatpush1.msra.mxu0 %v1706
    %1758 = vmatprep.subr.mxu0 0.0
    %1759 = vmatpush1.msra.mxu0 %v1705
    %1760 = vmatprep.subr.mxu0 0.0
    %1761 = vmatpush2.msra.mxu0 0.0
    %1762 = vmatprep.subr.mxu0 0.0
    %1763 = vmatpush2.msra.mxu0 0.0
    %1764 = vmatprep.subr.mxu0 0.0
    %1765 = vmatpush2.msra.mxu0 0.0
    %1766 = vmatprep.subr.mxu0 0.0
    %1767 = vmatpush2.msra.mxu0 0.0
    %1768 = vmatprep.subr.mxu0 0.0
    %1769 = vmatpush2.msra.mxu0 0.0
    %1770 = vmatprep.subr.mxu0 0.0
    %1771 = vmatpush2.msra.mxu0 0.0
    %1772 = vmatprep.subr.mxu0 0.0
    %1773 = vmatpush2.msra.mxu0 0.0
    %1774 = vmatprep.subr.mxu0 0.0
    %1775 = vmatpush2.msra.mxu0 0.0
    %1776 = vmatprep.subr.mxu0 0.0
    %1777 = vmatpush2.msra.mxu0 0.0
    %1778 = vmatprep.subr.mxu0 0.0
    %1779 = vmatpush2.msra.mxu0 0.0
    %1780 = vmatprep.subr.mxu0 0.0
    %1781 = vmatpush2.msra.mxu0 0.0
    %1782 = vmatprep.subr.mxu0 0.0
    %1783 = vmatpush2.msra.mxu0 0.0
    %1784 = vmatprep.subr.mxu0 0.0
    %1785 = vmatpush2.msra.mxu0 0.0
    %1786 = vmatprep.subr.mxu0 0.0
    %1787 = vmatpush2.msra.mxu0 0.0
    %1788 = vmatprep.subr.mxu0 0.0
    %1789 = vmatpush2.msra.mxu0 0.0
    %1790 = vmatprep.subr.mxu0 0.0
    %1791 = vmatpush2.msra.mxu0 0.0
    %1792 = vmatprep.mubr.f32.mxu0 0.0
    %1793 = vmatmul.mubr.f32.gmra.mxu0 %v1704
    %v1794 = vpop.f32.mrf.mxu0
    %v1795 = vadd.f32 %v1726, %v1794
    %v1796 = vpop.f32.mrf.mxu0
    %1797 = vdwg.mxu0
    %v1798 = vadd.f32 %v1795, %v1703
    %s1799 = smul.u32 4, 16
    %s1800 = smul.u32 %s1799, 3
    %s1801 = sshll.u32 %s1800, 4
    %1802 = dma.done [#allocation7], %s1801
    %v1803 = vld [vmem:[%s1] sm:$0xf]
    %v1804 = vld [vmem:[%s1 + $0x4] sm:$0xf]
    %v1805 = vld [vmem:[%s1 + $0x8] sm:$0xf]
    %v1806 = vld [vmem:[%s1 + $0xc] sm:$0xf]
    %v1807 = vld [vmem:[%s1 + $0x10] sm:$0xf]
    %v1808 = vld [vmem:[%s1 + $0x14] sm:$0xf]
    %v1809 = vld [vmem:[%s1 + $0x18] sm:$0xf]
    %v1810 = vld [vmem:[%s1 + $0x1c] sm:$0xf]
    %v1811 = vld [vmem:[#allocation4] sm:$0xff]
    %v1812 = vld [vmem:[#allocation4 + $0x8] sm:$0xf]
    %v1813 = vld [vmem:[#allocation4 + $0xc] sm:$0xff]
    %v1814 = vld [vmem:[#allocation4 + $0x14] sm:$0xf]
    %v1815 = vld [vmem:[#allocation4 + $0x18] sm:$0xff]
    %v1816 = vld [vmem:[#allocation4 + $0x20] sm:$0xf]
    %v1817 = vld [vmem:[#allocation4 + $0x24] sm:$0xff]
    %v1818 = vld [vmem:[#allocation4 + $0x2c] sm:$0xf]
    %v1819 = vld [vmem:[#allocation4 + $0x30] sm:$0xff]
    %v1820 = vld [vmem:[#allocation4 + $0x38] sm:$0xf]
    %v1821 = vld [vmem:[#allocation4 + $0x3c] sm:$0xff]
    %v1822 = vld [vmem:[#allocation4 + $0x44] sm:$0xf]
    %v1823 = vld [vmem:[#allocation4 + $0x48] sm:$0xff]
    %v1824 = vld [vmem:[#allocation4 + $0x50] sm:$0xf]
    %v1825 = vld [vmem:[#allocation4 + $0x54] sm:$0xff]
    %v1826 = vld [vmem:[#allocation4 + $0x5c] sm:$0xf]
    %v1827 = vld [vmem:[#allocation4 + $0x60] sm:$0xff]
    %v1828 = vld [vmem:[#allocation4 + $0x68] sm:$0xf]
    %v1829 = vld [vmem:[#allocation4 + $0x6c] sm:$0xff]
    %v1830 = vld [vmem:[#allocation4 + $0x74] sm:$0xf]
    %v1831 = vld [vmem:[#allocation4 + $0x78] sm:$0xff]
    %v1832 = vld [vmem:[#allocation4 + $0x80] sm:$0xf]
    %v1833 = vld [vmem:[#allocation4 + $0x84] sm:$0xff]
    %v1834 = vld [vmem:[#allocation4 + $0x8c] sm:$0xf]
    %v1835 = vld [vmem:[#allocation4 + $0x90] sm:$0xff]
    %v1836 = vld [vmem:[#allocation4 + $0x98] sm:$0xf]
    %v1837 = vld [vmem:[#allocation4 + $0x9c] sm:$0xff]
    %v1838 = vld [vmem:[#allocation4 + $0xa4] sm:$0xf]
    %v1839 = vld [vmem:[#allocation4 + $0xa8] sm:$0xff]
    %v1840 = vld [vmem:[#allocation4 + $0xb0] sm:$0xf]
    %v1841 = vld [vmem:[#allocation4 + $0xb4] sm:$0xff]
    %v1842 = vld [vmem:[#allocation4 + $0xbc] sm:$0xf]
    %v1843 = vld [vmem:[%s11] sm:$0x7]
    %v1845 = vlaneseq
    %v1846 = vshrl.u32 %v1845, 7
    %v1847 = vsub.s32 0, %v1846
    %v1848 = vrot.slane %v1843, %v1847
    %v1849 = vlaneseq
    %v1850 = vshrl.u32 %v1849, 7
    %v1851 = vsub.s32 1, %v1850
    %v1852 = vrot.slane %v1843, %v1851
    %v1853 = vlaneseq
    %v1854 = vshrl.u32 %v1853, 7
    %v1855 = vsub.s32 2, %v1854
    %v1856 = vrot.slane %v1843, %v1855
    %v1868 = vunpack.c.l.b16 %v1803
    %v1869 = vunpack.c.l.b16 %v1804
    %v1870 = vunpack.c.l.b16 %v1805
    %v1871 = vunpack.c.l.b16 %v1806
    %v1872 = vunpack.c.l.b16 %v1807
    %v1873 = vunpack.c.l.b16 %v1808
    %v1874 = vunpack.c.l.b16 %v1809
    %v1875 = vunpack.c.l.b16 %v1810
    %v1876 = vpack.c.b16 %v1869, %v1868
    %v1877 = vpack.c.b16 %v1871, %v1870
    %v1878 = vpack.c.b16 %v1873, %v1872
    %v1879 = vpack.c.b16 %v1875, %v1874
    %v1916 = vunpack.c.l.b16 %v1811
    %v1917 = vunpack.c.h.b16 %v1811
    %v1918 = vunpack.c.l.b16 %v1812
    %v1919 = vunpack.c.l.b16 %v1813
    %v1920 = vunpack.c.h.b16 %v1813
    %v1921 = vunpack.c.l.b16 %v1814
    %v1922 = vunpack.c.l.b16 %v1815
    %v1923 = vunpack.c.h.b16 %v1815
    %v1924 = vunpack.c.l.b16 %v1816
    %v1925 = vunpack.c.l.b16 %v1817
    %v1926 = vunpack.c.h.b16 %v1817
    %v1927 = vunpack.c.l.b16 %v1818
    %v1928 = vunpack.c.l.b16 %v1819
    %v1929 = vunpack.c.h.b16 %v1819
    %v1930 = vunpack.c.l.b16 %v1820
    %v1931 = vunpack.c.l.b16 %v1821
    %v1932 = vunpack.c.h.b16 %v1821
    %v1933 = vunpack.c.l.b16 %v1822
    %v1934 = vunpack.c.l.b16 %v1823
    %v1935 = vunpack.c.h.b16 %v1823
    %v1936 = vunpack.c.l.b16 %v1824
    %v1937 = vunpack.c.l.b16 %v1825
    %v1938 = vunpack.c.h.b16 %v1825
    %v1939 = vunpack.c.l.b16 %v1826
    %v1940 = vunpack.c.l.b16 %v1827
    %v1941 = vunpack.c.h.b16 %v1827
    %v1942 = vunpack.c.l.b16 %v1828
    %v1943 = vunpack.c.l.b16 %v1829
    %v1944 = vunpack.c.h.b16 %v1829
    %v1945 = vunpack.c.l.b16 %v1830
    %v1946 = vunpack.c.l.b16 %v1831
    %v1947 = vunpack.c.h.b16 %v1831
    %v1948 = vunpack.c.l.b16 %v1832
    %v1949 = vunpack.c.l.b16 %v1833
    %v1950 = vunpack.c.h.b16 %v1833
    %v1951 = vunpack.c.l.b16 %v1834
    %v1952 = vunpack.c.l.b16 %v1835
    %v1953 = vunpack.c.h.b16 %v1835
    %v1954 = vunpack.c.l.b16 %v1836
    %v1955 = vunpack.c.l.b16 %v1837
    %v1956 = vunpack.c.h.b16 %v1837
    %v1957 = vunpack.c.l.b16 %v1838
    %v1958 = vunpack.c.l.b16 %v1839
    %v1959 = vunpack.c.h.b16 %v1839
    %v1960 = vunpack.c.l.b16 %v1840
    %v1961 = vunpack.c.l.b16 %v1841
    %v1962 = vunpack.c.h.b16 %v1841
    %v1963 = vunpack.c.l.b16 %v1842
    %v1964 = vpack.c.b16 %v1919, %v1916
    %v1965 = vpack.c.b16 %v1920, %v1917
    %v1966 = vpack.c.b16 %v1921, %v1918
    %v1967 = vpack.c.b16 %v1925, %v1922
    %v1968 = vpack.c.b16 %v1926, %v1923
    %v1969 = vpack.c.b16 %v1927, %v1924
    %v1970 = vpack.c.b16 %v1931, %v1928
    %v1971 = vpack.c.b16 %v1932, %v1929
    %v1972 = vpack.c.b16 %v1933, %v1930
    %v1973 = vpack.c.b16 %v1937, %v1934
    %v1974 = vpack.c.b16 %v1938, %v1935
    %v1975 = vpack.c.b16 %v1939, %v1936
    %v1976 = vpack.c.b16 %v1943, %v1940
    %v1977 = vpack.c.b16 %v1944, %v1941
    %v1978 = vpack.c.b16 %v1945, %v1942
    %v1979 = vpack.c.b16 %v1949, %v1946
    %v1980 = vpack.c.b16 %v1950, %v1947
    %v1981 = vpack.c.b16 %v1951, %v1948
    %v1982 = vpack.c.b16 %v1955, %v1952
    %v1983 = vpack.c.b16 %v1956, %v1953
    %v1984 = vpack.c.b16 %v1957, %v1954
    %v1985 = vpack.c.b16 %v1961, %v1958
    %v1986 = vpack.c.b16 %v1962, %v1959
    %v1987 = vpack.c.b16 %v1963, %v1960
    %2012 = vmatprep.subr.bf16.mxu0 %v1986
    %2013 = vmatpush1.bf16.msra.mxu0 %v1985
    %2014 = vmatprep.subr.bf16.mxu0 %v1983
    %2015 = vmatpush1.bf16.msra.mxu0 %v1982
    %2016 = vmatprep.subr.bf16.mxu0 %v1980
    %2017 = vmatpush1.bf16.msra.mxu0 %v1979
    %2018 = vmatprep.subr.bf16.mxu0 %v1977
    %2019 = vmatpush1.bf16.msra.mxu0 %v1976
    %2020 = vmatprep.subr.bf16.mxu0 %v1974
    %2021 = vmatpush1.bf16.msra.mxu0 %v1973
    %2022 = vmatprep.subr.bf16.mxu0 %v1971
    %2023 = vmatpush1.bf16.msra.mxu0 %v1970
    %2024 = vmatprep.subr.bf16.mxu0 %v1968
    %2025 = vmatpush1.bf16.msra.mxu0 %v1967
    %2026 = vmatprep.subr.bf16.mxu0 %v1965
    %2027 = vmatpush1.bf16.msra.mxu0 %v1964
    %2028 = vmatprep.subr.bf16.mxu0 0
    %2029 = vmatpush2.bf16.msra.mxu0 0
    %2030 = vmatprep.subr.bf16.mxu0 0
    %2031 = vmatpush2.bf16.msra.mxu0 0
    %2032 = vmatprep.subr.bf16.mxu0 0
    %2033 = vmatpush2.bf16.msra.mxu0 0
    %2034 = vmatprep.subr.bf16.mxu0 0
    %2035 = vmatpush2.bf16.msra.mxu0 0
    %2036 = vmatprep.subr.bf16.mxu0 0
    %2037 = vmatpush2.bf16.msra.mxu0 0
    %2038 = vmatprep.subr.bf16.mxu0 0
    %2039 = vmatpush2.bf16.msra.mxu0 0
    %2040 = vmatprep.subr.bf16.mxu0 0
    %2041 = vmatpush2.bf16.msra.mxu0 0
    %2042 = vmatprep.subr.bf16.mxu0 0
    %2043 = vmatpush2.bf16.msra.mxu0 0
    %2044 = vmatprep.mubr.bf16.mxu0 0
    %2045 = vmatmul.mubr.bf16.gmra.mxu0 %v1876
    %v2046 = vpop.f32.mrf.mxu0
    %v2047 = vadd.f32 %v1848, %v2046
    %v2048 = vpop.f32.mrf.mxu0
    %v2049 = vadd.f32 %v1852, %v2048
    %v2050 = vpop.f32.mrf.mxu0
    %v2051 = vadd.f32 %v1848, %v2050
    %v2052 = vpop.f32.mrf.mxu0
    %v2053 = vadd.f32 %v1852, %v2052
    %2054 = vmatprep.mubr.bf16.mxu0 0
    %2055 = vmatmul.mubr.bf16.gmra.mxu0 %v1877
    %v2056 = vpop.f32.mrf.mxu0
    %v2057 = vadd.f32 %v1848, %v2056
    %v2058 = vpop.f32.mrf.mxu0
    %v2059 = vadd.f32 %v1852, %v2058
    %v2060 = vpop.f32.mrf.mxu0
    %v2061 = vadd.f32 %v1848, %v2060
    %v2062 = vpop.f32.mrf.mxu0
    %v2063 = vadd.f32 %v1852, %v2062
    %2064 = vmatprep.mubr.bf16.mxu0 0
    %2065 = vmatmul.mubr.bf16.gmra.mxu0 %v1878
    %v2066 = vpop.f32.mrf.mxu0
    %v2067 = vadd.f32 %v1848, %v2066
    %v2068 = vpop.f32.mrf.mxu0
    %v2069 = vadd.f32 %v1852, %v2068
    %v2070 = vpop.f32.mrf.mxu0
    %v2071 = vadd.f32 %v1848, %v2070
    %v2072 = vpop.f32.mrf.mxu0
    %v2073 = vadd.f32 %v1852, %v2072
    %2074 = vmatprep.mubr.bf16.mxu0 0
    %2075 = vmatmul.mubr.bf16.gmra.mxu0 %v1879
    %v2076 = vpop.f32.mrf.mxu0
    %v2077 = vadd.f32 %v1848, %v2076
    %v2078 = vpop.f32.mrf.mxu0
    %v2079 = vadd.f32 %v1852, %v2078
    %v2080 = vpop.f32.mrf.mxu0
    %v2081 = vadd.f32 %v1848, %v2080
    %v2082 = vpop.f32.mrf.mxu0
    %v2083 = vadd.f32 %v1852, %v2082
    %2084 = vdwg.mxu0
    %2085 = vmatprep.subr.bf16.mxu0 0
    %2086 = vmatpush1.bf16.msra.mxu0 %v1987
    %2087 = vmatprep.subr.bf16.mxu0 0
    %2088 = vmatpush1.bf16.msra.mxu0 %v1984
    %2089 = vmatprep.subr.bf16.mxu0 0
    %2090 = vmatpush1.bf16.msra.mxu0 %v1981
    %2091 = vmatprep.subr.bf16.mxu0 0
    %2092 = vmatpush1.bf16.msra.mxu0 %v1978
    %2093 = vmatprep.subr.bf16.mxu0 0
    %2094 = vmatpush1.bf16.msra.mxu0 %v1975
    %2095 = vmatprep.subr.bf16.mxu0 0
    %2096 = vmatpush1.bf16.msra.mxu0 %v1972
    %2097 = vmatprep.subr.bf16.mxu0 0
    %2098 = vmatpush1.bf16.msra.mxu0 %v1969
    %2099 = vmatprep.subr.bf16.mxu0 0
    %2100 = vmatpush1.bf16.msra.mxu0 %v1966
    %2101 = vmatprep.subr.bf16.mxu0 0
    %2102 = vmatpush2.bf16.msra.mxu0 0
    %2103 = vmatprep.subr.bf16.mxu0 0
    %2104 = vmatpush2.bf16.msra.mxu0 0
    %2105 = vmatprep.subr.bf16.mxu0 0
    %2106 = vmatpush2.bf16.msra.mxu0 0
    %2107 = vmatprep.subr.bf16.mxu0 0
    %2108 = vmatpush2.bf16.msra.mxu0 0
    %2109 = vmatprep.subr.bf16.mxu0 0
    %2110 = vmatpush2.bf16.msra.mxu0 0
    %2111 = vmatprep.subr.bf16.mxu0 0
    %2112 = vmatpush2.bf16.msra.mxu0 0
    %2113 = vmatprep.subr.bf16.mxu0 0
    %2114 = vmatpush2.bf16.msra.mxu0 0
    %2115 = vmatprep.subr.bf16.mxu0 0
    %2116 = vmatpush2.bf16.msra.mxu0 0
    %2117 = vmatprep.mubr.bf16.mxu0 0
    %2118 = vmatmul.mubr.bf16.gmra.mxu0 %v1876
    %v2119 = vpop.f32.mrf.mxu0
    %v2120 = vadd.f32 %v1856, %v2119
    %v2121 = vpop.f32.mrf.mxu0
    %v2122 = vpop.f32.mrf.mxu0
    %v2123 = vadd.f32 %v1856, %v2122
    %v2124 = vpop.f32.mrf.mxu0
    %2125 = vmatprep.mubr.bf16.mxu0 0
    %2126 = vmatmul.mubr.bf16.gmra.mxu0 %v1877
    %v2127 = vpop.f32.mrf.mxu0
    %v2128 = vadd.f32 %v1856, %v2127
    %v2129 = vpop.f32.mrf.mxu0
    %v2130 = vpop.f32.mrf.mxu0
    %v2131 = vadd.f32 %v1856, %v2130
    %v2132 = vpop.f32.mrf.mxu0
    %2133 = vmatprep.mubr.bf16.mxu0 0
    %2134 = vmatmul.mubr.bf16.gmra.mxu0 %v1878
    %v2135 = vpop.f32.mrf.mxu0
    %v2136 = vadd.f32 %v1856, %v2135
    %v2137 = vpop.f32.mrf.mxu0
    %v2138 = vpop.f32.mrf.mxu0
    %v2139 = vadd.f32 %v1856, %v2138
    %v2140 = vpop.f32.mrf.mxu0
    %2141 = vmatprep.mubr.bf16.mxu0 0
    %2142 = vmatmul.mubr.bf16.gmra.mxu0 %v1879
    %v2143 = vpop.f32.mrf.mxu0
    %v2144 = vadd.f32 %v1856, %v2143
    %v2145 = vpop.f32.mrf.mxu0
    %v2146 = vpop.f32.mrf.mxu0
    %v2147 = vadd.f32 %v1856, %v2146
    %v2148 = vpop.f32.mrf.mxu0
    %2149 = vdwg.mxu0
    %2150 = vst [vmem:[#allocation2] sm:$0xff] %v2047
    %2151 = vst [vmem:[#allocation2 + $0x8] sm:$0xff] %v2049
    %2152 = vst [vmem:[#allocation2 + $0x10] sm:$0xff] %v2120
    %2153 = vst [vmem:[#allocation2 + $0x18] sm:$0xff] %v2051
    %2154 = vst [vmem:[#allocation2 + $0x20] sm:$0xff] %v2053
    %2155 = vst [vmem:[#allocation2 + $0x28] sm:$0xff] %v2123
    %2156 = vst [vmem:[#allocation2 + $0x30] sm:$0xff] %v2057
    %2157 = vst [vmem:[#allocation2 + $0x38] sm:$0xff] %v2059
    %2158 = vst [vmem:[#allocation2 + $0x40] sm:$0xff] %v2128
    %2159 = vst [vmem:[#allocation2 + $0x48] sm:$0xff] %v2061
    %2160 = vst [vmem:[#allocation2 + $0x50] sm:$0xff] %v2063
    %2161 = vst [vmem:[#allocation2 + $0x58] sm:$0xff] %v2131
    %2162 = vst [vmem:[#allocation2 + $0x60] sm:$0xff] %v2067
    %2163 = vst [vmem:[#allocation2 + $0x68] sm:$0xff] %v2069
    %2164 = vst [vmem:[#allocation2 + $0x70] sm:$0xff] %v2136
    %2165 = vst [vmem:[#allocation2 + $0x78] sm:$0xff] %v2071
    %2166 = vst [vmem:[#allocation2 + $0x80] sm:$0xff] %v2073
    %2167 = vst [vmem:[#allocation2 + $0x88] sm:$0xff] %v2139
    %2168 = vst [vmem:[#allocation2 + $0x90] sm:$0xff] %v2077
    %2169 = vst [vmem:[#allocation2 + $0x98] sm:$0xff] %v2079
    %2170 = vst [vmem:[#allocation2 + $0xa0] sm:$0xff] %v2144
    %2171 = vst [vmem:[#allocation2 + $0xa8] sm:$0xff] %v2081
    %2172 = vst [vmem:[#allocation2 + $0xb0] sm:$0xff] %v2083
    %2173 = vst [vmem:[#allocation2 + $0xb8] sm:$0xff] %v2147
    %s2174 = sshll.u32 %s1800, 4
    %2175 = dma.done %s175, %s2174
    %v2176 = vld [vmem:[%s12] sm:$0xff]
    %v2177 = vld [vmem:[%s12 + $0x8] sm:$0xff]
    %v2178 = vld [vmem:[%s12 + $0x10] sm:$0xff]
    %v2179 = vld [vmem:[#allocation2] sm:$0xff]
    %v2180 = vld [vmem:[#allocation2 + $0x8] sm:$0xff]
    %v2181 = vld [vmem:[#allocation2 + $0x10] sm:$0xff]
    %v2182 = vpack.c.bf16 %v1798, %v1798
    %v2183 = vld [vmem:[#allocation5] sm:$0xff]
    %v2184 = vld [vmem:[#allocation5 + $0x8] sm:$0xf]
    %v2185 = vld [vmem:[#allocation5 + $0xc] sm:$0xff]
    %v2186 = vld [vmem:[#allocation5 + $0x14] sm:$0xf]
    %v2187 = vld [vmem:[#allocation5 + $0x18] sm:$0xff]
    %v2188 = vld [vmem:[#allocation5 + $0x20] sm:$0xf]
    %v2189 = vld [vmem:[#allocation5 + $0x24] sm:$0xff]
    %v2190 = vld [vmem:[#allocation5 + $0x2c] sm:$0xf]
    %v2191 = vld [vmem:[#allocation5 + $0x30] sm:$0xff]
    %v2192 = vld [vmem:[#allocation5 + $0x38] sm:$0xf]
    %v2193 = vld [vmem:[#allocation5 + $0x3c] sm:$0xff]
    %v2194 = vld [vmem:[#allocation5 + $0x44] sm:$0xf]
    %v2195 = vld [vmem:[#allocation5 + $0x48] sm:$0xff]
    %v2196 = vld [vmem:[#allocation5 + $0x50] sm:$0xf]
    %v2197 = vld [vmem:[#allocation5 + $0x54] sm:$0xff]
    %v2198 = vld [vmem:[#allocation5 + $0x5c] sm:$0xf]
    %v2199 = vld [vmem:[#allocation5 + $0x60] sm:$0xff]
    %v2200 = vld [vmem:[#allocation5 + $0x68] sm:$0xf]
    %v2201 = vld [vmem:[#allocation5 + $0x6c] sm:$0xff]
    %v2202 = vld [vmem:[#allocation5 + $0x74] sm:$0xf]
    %v2203 = vld [vmem:[#allocation5 + $0x78] sm:$0xff]
    %v2204 = vld [vmem:[#allocation5 + $0x80] sm:$0xf]
    %v2205 = vld [vmem:[#allocation5 + $0x84] sm:$0xff]
    %v2206 = vld [vmem:[#allocation5 + $0x8c] sm:$0xf]
    %v2207 = vld [vmem:[#allocation5 + $0x90] sm:$0xff]
    %v2208 = vld [vmem:[#allocation5 + $0x98] sm:$0xf]
    %v2209 = vld [vmem:[#allocation5 + $0x9c] sm:$0xff]
    %v2210 = vld [vmem:[#allocation5 + $0xa4] sm:$0xf]
    %v2211 = vld [vmem:[#allocation5 + $0xa8] sm:$0xff]
    %v2212 = vld [vmem:[#allocation5 + $0xb0] sm:$0xf]
    %v2213 = vld [vmem:[#allocation5 + $0xb4] sm:$0xff]
    %v2214 = vld [vmem:[#allocation5 + $0xbc] sm:$0xf]
    %v2247 = vunpack.c.l.b16 %v2183
    %v2248 = vunpack.c.h.b16 %v2183
    %v2249 = vunpack.c.l.b16 %v2184
    %v2250 = vunpack.c.l.b16 %v2185
    %v2251 = vunpack.c.h.b16 %v2185
    %v2252 = vunpack.c.l.b16 %v2186
    %v2253 = vunpack.c.l.b16 %v2187
    %v2254 = vunpack.c.h.b16 %v2187
    %v2255 = vunpack.c.l.b16 %v2188
    %v2256 = vunpack.c.l.b16 %v2189
    %v2257 = vunpack.c.h.b16 %v2189
    %v2258 = vunpack.c.l.b16 %v2190
    %v2259 = vunpack.c.l.b16 %v2191
    %v2260 = vunpack.c.h.b16 %v2191
    %v2261 = vunpack.c.l.b16 %v2192
    %v2262 = vunpack.c.l.b16 %v2193
    %v2263 = vunpack.c.h.b16 %v2193
    %v2264 = vunpack.c.l.b16 %v2194
    %v2265 = vunpack.c.l.b16 %v2195
    %v2266 = vunpack.c.h.b16 %v2195
    %v2267 = vunpack.c.l.b16 %v2196
    %v2268 = vunpack.c.l.b16 %v2197
    %v2269 = vunpack.c.h.b16 %v2197
    %v2270 = vunpack.c.l.b16 %v2198
    %v2271 = vunpack.c.l.b16 %v2199
    %v2272 = vunpack.c.h.b16 %v2199
    %v2273 = vunpack.c.l.b16 %v2200
    %v2274 = vunpack.c.l.b16 %v2201
    %v2275 = vunpack.c.h.b16 %v2201
    %v2276 = vunpack.c.l.b16 %v2202
    %v2277 = vunpack.c.l.b16 %v2203
    %v2278 = vunpack.c.h.b16 %v2203
    %v2279 = vunpack.c.l.b16 %v2204
    %v2280 = vunpack.c.l.b16 %v2205
    %v2281 = vunpack.c.h.b16 %v2205
    %v2282 = vunpack.c.l.b16 %v2206
    %v2283 = vunpack.c.l.b16 %v2207
    %v2284 = vunpack.c.h.b16 %v2207
    %v2285 = vunpack.c.l.b16 %v2208
    %v2286 = vunpack.c.l.b16 %v2209
    %v2287 = vunpack.c.h.b16 %v2209
    %v2288 = vunpack.c.l.b16 %v2210
    %v2289 = vunpack.c.l.b16 %v2211
    %v2290 = vunpack.c.h.b16 %v2211
    %v2291 = vunpack.c.l.b16 %v2212
    %v2292 = vunpack.c.l.b16 %v2213
    %v2293 = vunpack.c.h.b16 %v2213
    %v2294 = vunpack.c.l.b16 %v2214
    %v2295 = vpack.c.b16 %v2250, %v2247
    %v2296 = vpack.c.b16 %v2251, %v2248
    %v2297 = vpack.c.b16 %v2252, %v2249
    %v2298 = vpack.c.b16 %v2256, %v2253
    %v2299 = vpack.c.b16 %v2257, %v2254
    %v2300 = vpack.c.b16 %v2258, %v2255
    %v2301 = vpack.c.b16 %v2262, %v2259
    %v2302 = vpack.c.b16 %v2263, %v2260
    %v2303 = vpack.c.b16 %v2264, %v2261
    %v2304 = vpack.c.b16 %v2268, %v2265
    %v2305 = vpack.c.b16 %v2269, %v2266
    %v2306 = vpack.c.b16 %v2270, %v2267
    %v2307 = vpack.c.b16 %v2274, %v2271
    %v2308 = vpack.c.b16 %v2275, %v2272
    %v2309 = vpack.c.b16 %v2276, %v2273
    %v2310 = vpack.c.b16 %v2280, %v2277
    %v2311 = vpack.c.b16 %v2281, %v2278
    %v2312 = vpack.c.b16 %v2282, %v2279
    %v2313 = vpack.c.b16 %v2286, %v2283
    %v2314 = vpack.c.b16 %v2287, %v2284
    %v2315 = vpack.c.b16 %v2288, %v2285
    %v2316 = vpack.c.b16 %v2292, %v2289
    %v2317 = vpack.c.b16 %v2293, %v2290
    %v2318 = vpack.c.b16 %v2294, %v2291
    %2343 = vmatprep.subr.bf16.mxu0 %v2317
    %2344 = vmatpush1.bf16.msra.mxu0 %v2316
    %2345 = vmatprep.subr.bf16.mxu0 %v2314
    %2346 = vmatpush1.bf16.msra.mxu0 %v2313
    %2347 = vmatprep.subr.bf16.mxu0 %v2311
    %2348 = vmatpush1.bf16.msra.mxu0 %v2310
    %2349 = vmatprep.subr.bf16.mxu0 %v2308
    %2350 = vmatpush1.bf16.msra.mxu0 %v2307
    %2351 = vmatprep.subr.bf16.mxu0 %v2305
    %2352 = vmatpush1.bf16.msra.mxu0 %v2304
    %2353 = vmatprep.subr.bf16.mxu0 %v2302
    %2354 = vmatpush1.bf16.msra.mxu0 %v2301
    %2355 = vmatprep.subr.bf16.mxu0 %v2299
    %2356 = vmatpush1.bf16.msra.mxu0 %v2298
    %2357 = vmatprep.subr.bf16.mxu0 %v2296
    %2358 = vmatpush1.bf16.msra.mxu0 %v2295
    %2359 = vmatprep.subr.bf16.mxu0 0
    %2360 = vmatpush2.bf16.msra.mxu0 0
    %2361 = vmatprep.subr.bf16.mxu0 0
    %2362 = vmatpush2.bf16.msra.mxu0 0
    %2363 = vmatprep.subr.bf16.mxu0 0
    %2364 = vmatpush2.bf16.msra.mxu0 0
    %2365 = vmatprep.subr.bf16.mxu0 0
    %2366 = vmatpush2.bf16.msra.mxu0 0
    %2367 = vmatprep.subr.bf16.mxu0 0
    %2368 = vmatpush2.bf16.msra.mxu0 0
    %2369 = vmatprep.subr.bf16.mxu0 0
    %2370 = vmatpush2.bf16.msra.mxu0 0
    %2371 = vmatprep.subr.bf16.mxu0 0
    %2372 = vmatpush2.bf16.msra.mxu0 0
    %2373 = vmatprep.subr.bf16.mxu0 0
    %2374 = vmatpush2.bf16.msra.mxu0 0
    %2375 = vmatprep.mubr.bf16.mxu0 0
    %2376 = vmatmul.mubr.bf16.gmra.mxu0 %v2182
    %v2377 = vpop.f32.mrf.mxu0
    %v2378 = vadd.f32 %v2176, %v2377
    %v2379 = vpop.f32.mrf.mxu0
    %v2380 = vadd.f32 %v2177, %v2379
    %v2381 = vpop.f32.mrf.mxu0
    %v2382 = vpop.f32.mrf.mxu0
    %2383 = vdwg.mxu0
    %2384 = vmatprep.subr.bf16.mxu0 0
    %2385 = vmatpush1.bf16.msra.mxu0 %v2318
    %2386 = vmatprep.subr.bf16.mxu0 0
    %2387 = vmatpush1.bf16.msra.mxu0 %v2315
    %2388 = vmatprep.subr.bf16.mxu0 0
    %2389 = vmatpush1.bf16.msra.mxu0 %v2312
    %2390 = vmatprep.subr.bf16.mxu0 0
    %2391 = vmatpush1.bf16.msra.mxu0 %v2309
    %2392 = vmatprep.subr.bf16.mxu0 0
    %2393 = vmatpush1.bf16.msra.mxu0 %v2306
    %2394 = vmatprep.subr.bf16.mxu0 0
    %2395 = vmatpush1.bf16.msra.mxu0 %v2303
    %2396 = vmatprep.subr.bf16.mxu0 0
    %2397 = vmatpush1.bf16.msra.mxu0 %v2300
    %2398 = vmatprep.subr.bf16.mxu0 0
    %2399 = vmatpush1.bf16.msra.mxu0 %v2297
    %2400 = vmatprep.subr.bf16.mxu0 0
    %2401 = vmatpush2.bf16.msra.mxu0 0
    %2402 = vmatprep.subr.bf16.mxu0 0
    %2403 = vmatpush2.bf16.msra.mxu0 0
    %2404 = vmatprep.subr.bf16.mxu0 0
    %2405 = vmatpush2.bf16.msra.mxu0 0
    %2406 = vmatprep.subr.bf16.mxu0 0
    %2407 = vmatpush2.bf16.msra.mxu0 0
    %2408 = vmatprep.subr.bf16.mxu0 0
    %2409 = vmatpush2.bf16.msra.mxu0 0
    %2410 = vmatprep.subr.bf16.mxu0 0
    %2411 = vmatpush2.bf16.msra.mxu0 0
    %2412 = vmatprep.subr.bf16.mxu0 0
    %2413 = vmatpush2.bf16.msra.mxu0 0
    %2414 = vmatprep.subr.bf16.mxu0 0
    %2415 = vmatpush2.bf16.msra.mxu0 0
    %2416 = vmatprep.mubr.bf16.mxu0 0
    %2417 = vmatmul.mubr.bf16.gmra.mxu0 %v2182
    %v2418 = vpop.f32.mrf.mxu0
    %v2419 = vadd.f32 %v2178, %v2418
    %v2420 = vpop.f32.mrf.mxu0
    %v2421 = vpop.f32.mrf.mxu0
    %v2422 = vpop.f32.mrf.mxu0
    %2423 = vdwg.mxu0
    %v2424 = vadd.f32 %v2179, %v2378
    %v2425 = vxor.u32 %v2424, 2147483648
    %v2426 = vmul.f32 %v2425, 1.442695
    %v2427 = vpow.pop %v2426
    %v2428 = vadd.f32 %v2427, 1.0
    %v2429 = vrcp.pop %v2428
    %v2430 = vmul.f32 1.0, %v2429
    %v2431 = vadd.f32 %v2180, %v2380
    %v2432 = vxor.u32 %v2431, 2147483648
    %v2433 = vmul.f32 %v2432, 1.442695
    %v2434 = vpow.pop %v2433
    %v2435 = vadd.f32 %v2434, 1.0
    %v2436 = vrcp.pop %v2435
    %v2437 = vmul.f32 1.0, %v2436
    %v2438 = vmul.f32 %v2430, %v2419
    %v2439 = vadd.f32 %v2181, %v2438
    %v2440 = vtanh.pop %v2439
    %v2441 = vsub.f32 1.0, %v2437
    %v2442 = vmul.f32 %v2441, %v2440
    %v2443 = vmul.f32 %v2437, %v1798
    %v2444 = vadd.f32 %v2442, %v2443
    %2445 = vst [vmem:[#allocation3] sm:$0xff] %v2444
    %v2446 = vld [vmem:[#allocation2 + $0x18] sm:$0xff]
    %v2447 = vld [vmem:[#allocation2 + $0x20] sm:$0xff]
    %v2448 = vld [vmem:[#allocation2 + $0x28] sm:$0xff]
    %v2449 = vpack.c.bf16 %v2444, %v2444
    %v2450 = vld [vmem:[#allocation5] sm:$0xff]
    %v2451 = vld [vmem:[#allocation5 + $0x8] sm:$0xf]
    %v2452 = vld [vmem:[#allocation5 + $0xc] sm:$0xff]
    %v2453 = vld [vmem:[#allocation5 + $0x14] sm:$0xf]
    %v2454 = vld [vmem:[#allocation5 + $0x18] sm:$0xff]
    %v2455 = vld [vmem:[#allocation5 + $0x20] sm:$0xf]
    %v2456 = vld [vmem:[#allocation5 + $0x24] sm:$0xff]
    %v2457 = vld [vmem:[#allocation5 + $0x2c] sm:$0xf]
    %v2458 = vld [vmem:[#allocation5 + $0x30] sm:$0xff]
    %v2459 = vld [vmem:[#allocation5 + $0x38] sm:$0xf]
    %v2460 = vld [vmem:[#allocation5 + $0x3c] sm:$0xff]
    %v2461 = vld [vmem:[#allocation5 + $0x44] sm:$0xf]
    %v2462 = vld [vmem:[#allocation5 + $0x48] sm:$0xff]
    %v2463 = vld [vmem:[#allocation5 + $0x50] sm:$0xf]
    %v2464 = vld [vmem:[#allocation5 + $0x54] sm:$0xff]
    %v2465 = vld [vmem:[#allocation5 + $0x5c] sm:$0xf]
    %v2466 = vld [vmem:[#allocation5 + $0x60] sm:$0xff]
    %v2467 = vld [vmem:[#allocation5 + $0x68] sm:$0xf]
    %v2468 = vld [vmem:[#allocation5 + $0x6c] sm:$0xff]
    %v2469 = vld [vmem:[#allocation5 + $0x74] sm:$0xf]
    %v2470 = vld [vmem:[#allocation5 + $0x78] sm:$0xff]
    %v2471 = vld [vmem:[#allocation5 + $0x80] sm:$0xf]
    %v2472 = vld [vmem:[#allocation5 + $0x84] sm:$0xff]
    %v2473 = vld [vmem:[#allocation5 + $0x8c] sm:$0xf]
    %v2474 = vld [vmem:[#allocation5 + $0x90] sm:$0xff]
    %v2475 = vld [vmem:[#allocation5 + $0x98] sm:$0xf]
    %v2476 = vld [vmem:[#allocation5 + $0x9c] sm:$0xff]
    %v2477 = vld [vmem:[#allocation5 + $0xa4] sm:$0xf]
    %v2478 = vld [vmem:[#allocation5 + $0xa8] sm:$0xff]
    %v2479 = vld [vmem:[#allocation5 + $0xb0] sm:$0xf]
    %v2480 = vld [vmem:[#allocation5 + $0xb4] sm:$0xff]
    %v2481 = vld [vmem:[#allocation5 + $0xbc] sm:$0xf]
    %v2514 = vunpack.c.l.b16 %v2450
    %v2515 = vunpack.c.h.b16 %v2450
    %v2516 = vunpack.c.l.b16 %v2451
    %v2517 = vunpack.c.l.b16 %v2452
    %v2518 = vunpack.c.h.b16 %v2452
    %v2519 = vunpack.c.l.b16 %v2453
    %v2520 = vunpack.c.l.b16 %v2454
    %v2521 = vunpack.c.h.b16 %v2454
    %v2522 = vunpack.c.l.b16 %v2455
    %v2523 = vunpack.c.l.b16 %v2456
    %v2524 = vunpack.c.h.b16 %v2456
    %v2525 = vunpack.c.l.b16 %v2457
    %v2526 = vunpack.c.l.b16 %v2458
    %v2527 = vunpack.c.h.b16 %v2458
    %v2528 = vunpack.c.l.b16 %v2459
    %v2529 = vunpack.c.l.b16 %v2460
    %v2530 = vunpack.c.h.b16 %v2460
    %v2531 = vunpack.c.l.b16 %v2461
    %v2532 = vunpack.c.l.b16 %v2462
    %v2533 = vunpack.c.h.b16 %v2462
    %v2534 = vunpack.c.l.b16 %v2463
    %v2535 = vunpack.c.l.b16 %v2464
    %v2536 = vunpack.c.h.b16 %v2464
    %v2537 = vunpack.c.l.b16 %v2465
    %v2538 = vunpack.c.l.b16 %v2466
    %v2539 = vunpack.c.h.b16 %v2466
    %v2540 = vunpack.c.l.b16 %v2467
    %v2541 = vunpack.c.l.b16 %v2468
    %v2542 = vunpack.c.h.b16 %v2468
    %v2543 = vunpack.c.l.b16 %v2469
    %v2544 = vunpack.c.l.b16 %v2470
    %v2545 = vunpack.c.h.b16 %v2470
    %v2546 = vunpack.c.l.b16 %v2471
    %v2547 = vunpack.c.l.b16 %v2472
    %v2548 = vunpack.c.h.b16 %v2472
    %v2549 = vunpack.c.l.b16 %v2473
    %v2550 = vunpack.c.l.b16 %v2474
    %v2551 = vunpack.c.h.b16 %v2474
    %v2552 = vunpack.c.l.b16 %v2475
    %v2553 = vunpack.c.l.b16 %v2476
    %v2554 = vunpack.c.h.b16 %v2476
    %v2555 = vunpack.c.l.b16 %v2477
    %v2556 = vunpack.c.l.b16 %v2478
    %v2557 = vunpack.c.h.b16 %v2478
    %v2558 = vunpack.c.l.b16 %v2479
    %v2559 = vunpack.c.l.b16 %v2480
    %v2560 = vunpack.c.h.b16 %v2480
    %v2561 = vunpack.c.l.b16 %v2481
    %v2562 = vpack.c.b16 %v2517, %v2514
    %v2563 = vpack.c.b16 %v2518, %v2515
    %v2564 = vpack.c.b16 %v2519, %v2516
    %v2565 = vpack.c.b16 %v2523, %v2520
    %v2566 = vpack.c.b16 %v2524, %v2521
    %v2567 = vpack.c.b16 %v2525, %v2522
    %v2568 = vpack.c.b16 %v2529, %v2526
    %v2569 = vpack.c.b16 %v2530, %v2527
    %v2570 = vpack.c.b16 %v2531, %v2528
    %v2571 = vpack.c.b16 %v2535, %v2532
    %v2572 = vpack.c.b16 %v2536, %v2533
    %v2573 = vpack.c.b16 %v2537, %v2534
    %v2574 = vpack.c.b16 %v2541, %v2538
    %v2575 = vpack.c.b16 %v2542, %v2539
    %v2576 = vpack.c.b16 %v2543, %v2540
    %v2577 = vpack.c.b16 %v2547, %v2544
    %v2578 = vpack.c.b16 %v2548, %v2545
    %v2579 = vpack.c.b16 %v2549, %v2546
    %v2580 = vpack.c.b16 %v2553, %v2550
    %v2581 = vpack.c.b16 %v2554, %v2551
    %v2582 = vpack.c.b16 %v2555, %v2552
    %v2583 = vpack.c.b16 %v2559, %v2556
    %v2584 = vpack.c.b16 %v2560, %v2557
    %v2585 = vpack.c.b16 %v2561, %v2558
    %2610 = vmatprep.subr.bf16.mxu0 %v2584
    %2611 = vmatpush1.bf16.msra.mxu0 %v2583
    %2612 = vmatprep.subr.bf16.mxu0 %v2581
    %2613 = vmatpush1.bf16.msra.mxu0 %v2580
    %2614 = vmatprep.subr.bf16.mxu0 %v2578
    %2615 = vmatpush1.bf16.msra.mxu0 %v2577
    %2616 = vmatprep.subr.bf16.mxu0 %v2575
    %2617 = vmatpush1.bf16.msra.mxu0 %v2574
    %2618 = vmatprep.subr.bf16.mxu0 %v2572
    %2619 = vmatpush1.bf16.msra.mxu0 %v2571
    %2620 = vmatprep.subr.bf16.mxu0 %v2569
    %2621 = vmatpush1.bf16.msra.mxu0 %v2568
    %2622 = vmatprep.subr.bf16.mxu0 %v2566
    %2623 = vmatpush1.bf16.msra.mxu0 %v2565
    %2624 = vmatprep.subr.bf16.mxu0 %v2563
    %2625 = vmatpush1.bf16.msra.mxu0 %v2562
    %2626 = vmatprep.subr.bf16.mxu0 0
    %2627 = vmatpush2.bf16.msra.mxu0 0
    %2628 = vmatprep.subr.bf16.mxu0 0
    %2629 = vmatpush2.bf16.msra.mxu0 0
    %2630 = vmatprep.subr.bf16.mxu0 0
    %2631 = vmatpush2.bf16.msra.mxu0 0
    %2632 = vmatprep.subr.bf16.mxu0 0
    %2633 = vmatpush2.bf16.msra.mxu0 0
    %2634 = vmatprep.subr.bf16.mxu0 0
    %2635 = vmatpush2.bf16.msra.mxu0 0
    %2636 = vmatprep.subr.bf16.mxu0 0
    %2637 = vmatpush2.bf16.msra.mxu0 0
    %2638 = vmatprep.subr.bf16.mxu0 0
    %2639 = vmatpush2.bf16.msra.mxu0 0
    %2640 = vmatprep.subr.bf16.mxu0 0
    %2641 = vmatpush2.bf16.msra.mxu0 0
    %2642 = vmatprep.mubr.bf16.mxu0 0
    %2643 = vmatmul.mubr.bf16.gmra.mxu0 %v2449
    %v2644 = vpop.f32.mrf.mxu0
    %v2645 = vadd.f32 %v2176, %v2644
    %v2646 = vpop.f32.mrf.mxu0
    %v2647 = vadd.f32 %v2177, %v2646
    %v2648 = vpop.f32.mrf.mxu0
    %v2649 = vpop.f32.mrf.mxu0
    %2650 = vdwg.mxu0
    %2651 = vmatprep.subr.bf16.mxu0 0
    %2652 = vmatpush1.bf16.msra.mxu0 %v2585
    %2653 = vmatprep.subr.bf16.mxu0 0
    %2654 = vmatpush1.bf16.msra.mxu0 %v2582
    %2655 = vmatprep.subr.bf16.mxu0 0
    %2656 = vmatpush1.bf16.msra.mxu0 %v2579
    %2657 = vmatprep.subr.bf16.mxu0 0
    %2658 = vmatpush1.bf16.msra.mxu0 %v2576
    %2659 = vmatprep.subr.bf16.mxu0 0
    %2660 = vmatpush1.bf16.msra.mxu0 %v2573
    %2661 = vmatprep.subr.bf16.mxu0 0
    %2662 = vmatpush1.bf16.msra.mxu0 %v2570
    %2663 = vmatprep.subr.bf16.mxu0 0
    %2664 = vmatpush1.bf16.msra.mxu0 %v2567
    %2665 = vmatprep.subr.bf16.mxu0 0
    %2666 = vmatpush1.bf16.msra.mxu0 %v2564
    %2667 = vmatprep.subr.bf16.mxu0 0
    %2668 = vmatpush2.bf16.msra.mxu0 0
    %2669 = vmatprep.subr.bf16.mxu0 0
    %2670 = vmatpush2.bf16.msra.mxu0 0
    %2671 = vmatprep.subr.bf16.mxu0 0
    %2672 = vmatpush2.bf16.msra.mxu0 0
    %2673 = vmatprep.subr.bf16.mxu0 0
    %2674 = vmatpush2.bf16.msra.mxu0 0
    %2675 = vmatprep.subr.bf16.mxu0 0
    %2676 = vmatpush2.bf16.msra.mxu0 0
    %2677 = vmatprep.subr.bf16.mxu0 0
    %2678 = vmatpush2.bf16.msra.mxu0 0
    %2679 = vmatprep.subr.bf16.mxu0 0
    %2680 = vmatpush2.bf16.msra.mxu0 0
    %2681 = vmatprep.subr.bf16.mxu0 0
    %2682 = vmatpush2.bf16.msra.mxu0 0
    %2683 = vmatprep.mubr.bf16.mxu0 0
    %2684 = vmatmul.mubr.bf16.gmra.mxu0 %v2449
    %v2685 = vpop.f32.mrf.mxu0
    %v2686 = vadd.f32 %v2178, %v2685
    %v2687 = vpop.f32.mrf.mxu0
    %v2688 = vpop.f32.mrf.mxu0
    %v2689 = vpop.f32.mrf.mxu0
    %2690 = vdwg.mxu0
    %v2691 = vadd.f32 %v2446, %v2645
    %v2692 = vxor.u32 %v2691, 2147483648
    %v2693 = vmul.f32 %v2692, 1.442695
    %v2694 = vpow.pop %v2693
    %v2695 = vadd.f32 %v2694, 1.0
    %v2696 = vrcp.pop %v2695
    %v2697 = vmul.f32 1.0, %v2696
    %v2698 = vadd.f32 %v2447, %v2647
    %v2699 = vxor.u32 %v2698, 2147483648
    %v2700 = vmul.f32 %v2699, 1.442695
    %v2701 = vpow.pop %v2700
    %v2702 = vadd.f32 %v2701, 1.0
    %v2703 = vrcp.pop %v2702
    %v2704 = vmul.f32 1.0, %v2703
    %v2705 = vmul.f32 %v2697, %v2686
    %v2706 = vadd.f32 %v2448, %v2705
    %v2707 = vtanh.pop %v2706
    %v2708 = vsub.f32 1.0, %v2704
    %v2709 = vmul.f32 %v2708, %v2707
    %v2710 = vmul.f32 %v2704, %v2444
    %v2711 = vadd.f32 %v2709, %v2710
    %2712 = vst [vmem:[#allocation3 + $0x8] sm:$0xff] %v2711
    %v2713 = vld [vmem:[#allocation2 + $0x30] sm:$0xff]
    %v2714 = vld [vmem:[#allocation2 + $0x38] sm:$0xff]
    %v2715 = vld [vmem:[#allocation2 + $0x40] sm:$0xff]
    %v2716 = vpack.c.bf16 %v2711, %v2711
    %v2717 = vld [vmem:[#allocation5] sm:$0xff]
    %v2718 = vld [vmem:[#allocation5 + $0x8] sm:$0xf]
    %v2719 = vld [vmem:[#allocation5 + $0xc] sm:$0xff]
    %v2720 = vld [vmem:[#allocation5 + $0x14] sm:$0xf]
    %v2721 = vld [vmem:[#allocation5 + $0x18] sm:$0xff]
    %v2722 = vld [vmem:[#allocation5 + $0x20] sm:$0xf]
    %v2723 = vld [vmem:[#allocation5 + $0x24] sm:$0xff]
    %v2724 = vld [vmem:[#allocation5 + $0x2c] sm:$0xf]
    %v2725 = vld [vmem:[#allocation5 + $0x30] sm:$0xff]
    %v2726 = vld [vmem:[#allocation5 + $0x38] sm:$0xf]
    %v2727 = vld [vmem:[#allocation5 + $0x3c] sm:$0xff]
    %v2728 = vld [vmem:[#allocation5 + $0x44] sm:$0xf]
    %v2729 = vld [vmem:[#allocation5 + $0x48] sm:$0xff]
    %v2730 = vld [vmem:[#allocation5 + $0x50] sm:$0xf]
    %v2731 = vld [vmem:[#allocation5 + $0x54] sm:$0xff]
    %v2732 = vld [vmem:[#allocation5 + $0x5c] sm:$0xf]
    %v2733 = vld [vmem:[#allocation5 + $0x60] sm:$0xff]
    %v2734 = vld [vmem:[#allocation5 + $0x68] sm:$0xf]
    %v2735 = vld [vmem:[#allocation5 + $0x6c] sm:$0xff]
    %v2736 = vld [vmem:[#allocation5 + $0x74] sm:$0xf]
    %v2737 = vld [vmem:[#allocation5 + $0x78] sm:$0xff]
    %v2738 = vld [vmem:[#allocation5 + $0x80] sm:$0xf]
    %v2739 = vld [vmem:[#allocation5 + $0x84] sm:$0xff]
    %v2740 = vld [vmem:[#allocation5 + $0x8c] sm:$0xf]
    %v2741 = vld [vmem:[#allocation5 + $0x90] sm:$0xff]
    %v2742 = vld [vmem:[#allocation5 + $0x98] sm:$0xf]
    %v2743 = vld [vmem:[#allocation5 + $0x9c] sm:$0xff]
    %v2744 = vld [vmem:[#allocation5 + $0xa4] sm:$0xf]
    %v2745 = vld [vmem:[#allocation5 + $0xa8] sm:$0xff]
    %v2746 = vld [vmem:[#allocation5 + $0xb0] sm:$0xf]
    %v2747 = vld [vmem:[#allocation5 + $0xb4] sm:$0xff]
    %v2748 = vld [vmem:[#allocation5 + $0xbc] sm:$0xf]
    %v2781 = vunpack.c.l.b16 %v2717
    %v2782 = vunpack.c.h.b16 %v2717
    %v2783 = vunpack.c.l.b16 %v2718
    %v2784 = vunpack.c.l.b16 %v2719
    %v2785 = vunpack.c.h.b16 %v2719
    %v2786 = vunpack.c.l.b16 %v2720
    %v2787 = vunpack.c.l.b16 %v2721
    %v2788 = vunpack.c.h.b16 %v2721
    %v2789 = vunpack.c.l.b16 %v2722
    %v2790 = vunpack.c.l.b16 %v2723
    %v2791 = vunpack.c.h.b16 %v2723
    %v2792 = vunpack.c.l.b16 %v2724
    %v2793 = vunpack.c.l.b16 %v2725
    %v2794 = vunpack.c.h.b16 %v2725
    %v2795 = vunpack.c.l.b16 %v2726
    %v2796 = vunpack.c.l.b16 %v2727
    %v2797 = vunpack.c.h.b16 %v2727
    %v2798 = vunpack.c.l.b16 %v2728
    %v2799 = vunpack.c.l.b16 %v2729
    %v2800 = vunpack.c.h.b16 %v2729
    %v2801 = vunpack.c.l.b16 %v2730
    %v2802 = vunpack.c.l.b16 %v2731
    %v2803 = vunpack.c.h.b16 %v2731
    %v2804 = vunpack.c.l.b16 %v2732
    %v2805 = vunpack.c.l.b16 %v2733
    %v2806 = vunpack.c.h.b16 %v2733
    %v2807 = vunpack.c.l.b16 %v2734
    %v2808 = vunpack.c.l.b16 %v2735
    %v2809 = vunpack.c.h.b16 %v2735
    %v2810 = vunpack.c.l.b16 %v2736
    %v2811 = vunpack.c.l.b16 %v2737
    %v2812 = vunpack.c.h.b16 %v2737
    %v2813 = vunpack.c.l.b16 %v2738
    %v2814 = vunpack.c.l.b16 %v2739
    %v2815 = vunpack.c.h.b16 %v2739
    %v2816 = vunpack.c.l.b16 %v2740
    %v2817 = vunpack.c.l.b16 %v2741
    %v2818 = vunpack.c.h.b16 %v2741
    %v2819 = vunpack.c.l.b16 %v2742
    %v2820 = vunpack.c.l.b16 %v2743
    %v2821 = vunpack.c.h.b16 %v2743
    %v2822 = vunpack.c.l.b16 %v2744
    %v2823 = vunpack.c.l.b16 %v2745
    %v2824 = vunpack.c.h.b16 %v2745
    %v2825 = vunpack.c.l.b16 %v2746
    %v2826 = vunpack.c.l.b16 %v2747
    %v2827 = vunpack.c.h.b16 %v2747
    %v2828 = vunpack.c.l.b16 %v2748
    %v2829 = vpack.c.b16 %v2784, %v2781
    %v2830 = vpack.c.b16 %v2785, %v2782
    %v2831 = vpack.c.b16 %v2786, %v2783
    %v2832 = vpack.c.b16 %v2790, %v2787
    %v2833 = vpack.c.b16 %v2791, %v2788
    %v2834 = vpack.c.b16 %v2792, %v2789
    %v2835 = vpack.c.b16 %v2796, %v2793
    %v2836 = vpack.c.b16 %v2797, %v2794
    %v2837 = vpack.c.b16 %v2798, %v2795
    %v2838 = vpack.c.b16 %v2802, %v2799
    %v2839 = vpack.c.b16 %v2803, %v2800
    %v2840 = vpack.c.b16 %v2804, %v2801
    %v2841 = vpack.c.b16 %v2808, %v2805
    %v2842 = vpack.c.b16 %v2809, %v2806
    %v2843 = vpack.c.b16 %v2810, %v2807
    %v2844 = vpack.c.b16 %v2814, %v2811
    %v2845 = vpack.c.b16 %v2815, %v2812
    %v2846 = vpack.c.b16 %v2816, %v2813
    %v2847 = vpack.c.b16 %v2820, %v2817
    %v2848 = vpack.c.b16 %v2821, %v2818
    %v2849 = vpack.c.b16 %v2822, %v2819
    %v2850 = vpack.c.b16 %v2826, %v2823
    %v2851 = vpack.c.b16 %v2827, %v2824
    %v2852 = vpack.c.b16 %v2828, %v2825
    %2877 = vmatprep.subr.bf16.mxu0 %v2851
    %2878 = vmatpush1.bf16.msra.mxu0 %v2850
    %2879 = vmatprep.subr.bf16.mxu0 %v2848
    %2880 = vmatpush1.bf16.msra.mxu0 %v2847
    %2881 = vmatprep.subr.bf16.mxu0 %v2845
    %2882 = vmatpush1.bf16.msra.mxu0 %v2844
    %2883 = vmatprep.subr.bf16.mxu0 %v2842
    %2884 = vmatpush1.bf16.msra.mxu0 %v2841
    %2885 = vmatprep.subr.bf16.mxu0 %v2839
    %2886 = vmatpush1.bf16.msra.mxu0 %v2838
    %2887 = vmatprep.subr.bf16.mxu0 %v2836
    %2888 = vmatpush1.bf16.msra.mxu0 %v2835
    %2889 = vmatprep.subr.bf16.mxu0 %v2833
    %2890 = vmatpush1.bf16.msra.mxu0 %v2832
    %2891 = vmatprep.subr.bf16.mxu0 %v2830
    %2892 = vmatpush1.bf16.msra.mxu0 %v2829
    %2893 = vmatprep.subr.bf16.mxu0 0
    %2894 = vmatpush2.bf16.msra.mxu0 0
    %2895 = vmatprep.subr.bf16.mxu0 0
    %2896 = vmatpush2.bf16.msra.mxu0 0
    %2897 = vmatprep.subr.bf16.mxu0 0
    %2898 = vmatpush2.bf16.msra.mxu0 0
    %2899 = vmatprep.subr.bf16.mxu0 0
    %2900 = vmatpush2.bf16.msra.mxu0 0
    %2901 = vmatprep.subr.bf16.mxu0 0
    %2902 = vmatpush2.bf16.msra.mxu0 0
    %2903 = vmatprep.subr.bf16.mxu0 0
    %2904 = vmatpush2.bf16.msra.mxu0 0
    %2905 = vmatprep.subr.bf16.mxu0 0
    %2906 = vmatpush2.bf16.msra.mxu0 0
    %2907 = vmatprep.subr.bf16.mxu0 0
    %2908 = vmatpush2.bf16.msra.mxu0 0
    %2909 = vmatprep.mubr.bf16.mxu0 0
    %2910 = vmatmul.mubr.bf16.gmra.mxu0 %v2716
    %v2911 = vpop.f32.mrf.mxu0
    %v2912 = vadd.f32 %v2176, %v2911
    %v2913 = vpop.f32.mrf.mxu0
    %v2914 = vadd.f32 %v2177, %v2913
    %v2915 = vpop.f32.mrf.mxu0
    %v2916 = vpop.f32.mrf.mxu0
    %2917 = vdwg.mxu0
    %2918 = vmatprep.subr.bf16.mxu0 0
    %2919 = vmatpush1.bf16.msra.mxu0 %v2852
    %2920 = vmatprep.subr.bf16.mxu0 0
    %2921 = vmatpush1.bf16.msra.mxu0 %v2849
    %2922 = vmatprep.subr.bf16.mxu0 0
    %2923 = vmatpush1.bf16.msra.mxu0 %v2846
    %2924 = vmatprep.subr.bf16.mxu0 0
    %2925 = vmatpush1.bf16.msra.mxu0 %v2843
    %2926 = vmatprep.subr.bf16.mxu0 0
    %2927 = vmatpush1.bf16.msra.mxu0 %v2840
    %2928 = vmatprep.subr.bf16.mxu0 0
    %2929 = vmatpush1.bf16.msra.mxu0 %v2837
    %2930 = vmatprep.subr.bf16.mxu0 0
    %2931 = vmatpush1.bf16.msra.mxu0 %v2834
    %2932 = vmatprep.subr.bf16.mxu0 0
    %2933 = vmatpush1.bf16.msra.mxu0 %v2831
    %2934 = vmatprep.subr.bf16.mxu0 0
    %2935 = vmatpush2.bf16.msra.mxu0 0
    %2936 = vmatprep.subr.bf16.mxu0 0
    %2937 = vmatpush2.bf16.msra.mxu0 0
    %2938 = vmatprep.subr.bf16.mxu0 0
    %2939 = vmatpush2.bf16.msra.mxu0 0
    %2940 = vmatprep.subr.bf16.mxu0 0
    %2941 = vmatpush2.bf16.msra.mxu0 0
    %2942 = vmatprep.subr.bf16.mxu0 0
    %2943 = vmatpush2.bf16.msra.mxu0 0
    %2944 = vmatprep.subr.bf16.mxu0 0
    %2945 = vmatpush2.bf16.msra.mxu0 0
    %2946 = vmatprep.subr.bf16.mxu0 0
    %2947 = vmatpush2.bf16.msra.mxu0 0
    %2948 = vmatprep.subr.bf16.mxu0 0
    %2949 = vmatpush2.bf16.msra.mxu0 0
    %2950 = vmatprep.mubr.bf16.mxu0 0
    %2951 = vmatmul.mubr.bf16.gmra.mxu0 %v2716
    %v2952 = vpop.f32.mrf.mxu0
    %v2953 = vadd.f32 %v2178, %v2952
    %v2954 = vpop.f32.mrf.mxu0
    %v2955 = vpop.f32.mrf.mxu0
    %v2956 = vpop.f32.mrf.mxu0
    %2957 = vdwg.mxu0
    %v2958 = vadd.f32 %v2713, %v2912
    %v2959 = vxor.u32 %v2958, 2147483648
    %v2960 = vmul.f32 %v2959, 1.442695
    %v2961 = vpow.pop %v2960
    %v2962 = vadd.f32 %v2961, 1.0
    %v2963 = vrcp.pop %v2962
    %v2964 = vmul.f32 1.0, %v2963
    %v2965 = vadd.f32 %v2714, %v2914
    %v2966 = vxor.u32 %v2965, 2147483648
    %v2967 = vmul.f32 %v2966, 1.442695
    %v2968 = vpow.pop %v2967
    %v2969 = vadd.f32 %v2968, 1.0
    %v2970 = vrcp.pop %v2969
    %v2971 = vmul.f32 1.0, %v2970
    %v2972 = vmul.f32 %v2964, %v2953
    %v2973 = vadd.f32 %v2715, %v2972
    %v2974 = vtanh.pop %v2973
    %v2975 = vsub.f32 1.0, %v2971
    %v2976 = vmul.f32 %v2975, %v2974
    %v2977 = vmul.f32 %v2971, %v2711
    %v2978 = vadd.f32 %v2976, %v2977
    %2979 = vst [vmem:[#allocation3 + $0x10] sm:$0xff] %v2978
    %v2980 = vld [vmem:[#allocation2 + $0x48] sm:$0xff]
    %v2981 = vld [vmem:[#allocation2 + $0x50] sm:$0xff]
    %v2982 = vld [vmem:[#allocation2 + $0x58] sm:$0xff]
    %v2983 = vpack.c.bf16 %v2978, %v2978
    %v2984 = vld [vmem:[#allocation5] sm:$0xff]
    %v2985 = vld [vmem:[#allocation5 + $0x8] sm:$0xf]
    %v2986 = vld [vmem:[#allocation5 + $0xc] sm:$0xff]
    %v2987 = vld [vmem:[#allocation5 + $0x14] sm:$0xf]
    %v2988 = vld [vmem:[#allocation5 + $0x18] sm:$0xff]
    %v2989 = vld [vmem:[#allocation5 + $0x20] sm:$0xf]
    %v2990 = vld [vmem:[#allocation5 + $0x24] sm:$0xff]
    %v2991 = vld [vmem:[#allocation5 + $0x2c] sm:$0xf]
    %v2992 = vld [vmem:[#allocation5 + $0x30] sm:$0xff]
    %v2993 = vld [vmem:[#allocation5 + $0x38] sm:$0xf]
    %v2994 = vld [vmem:[#allocation5 + $0x3c] sm:$0xff]
    %v2995 = vld [vmem:[#allocation5 + $0x44] sm:$0xf]
    %v2996 = vld [vmem:[#allocation5 + $0x48] sm:$0xff]
    %v2997 = vld [vmem:[#allocation5 + $0x50] sm:$0xf]
    %v2998 = vld [vmem:[#allocation5 + $0x54] sm:$0xff]
    %v2999 = vld [vmem:[#allocation5 + $0x5c] sm:$0xf]
    %v3000 = vld [vmem:[#allocation5 + $0x60] sm:$0xff]
    %v3001 = vld [vmem:[#allocation5 + $0x68] sm:$0xf]
    %v3002 = vld [vmem:[#allocation5 + $0x6c] sm:$0xff]
    %v3003 = vld [vmem:[#allocation5 + $0x74] sm:$0xf]
    %v3004 = vld [vmem:[#allocation5 + $0x78] sm:$0xff]
    %v3005 = vld [vmem:[#allocation5 + $0x80] sm:$0xf]
    %v3006 = vld [vmem:[#allocation5 + $0x84] sm:$0xff]
    %v3007 = vld [vmem:[#allocation5 + $0x8c] sm:$0xf]
    %v3008 = vld [vmem:[#allocation5 + $0x90] sm:$0xff]
    %v3009 = vld [vmem:[#allocation5 + $0x98] sm:$0xf]
    %v3010 = vld [vmem:[#allocation5 + $0x9c] sm:$0xff]
    %v3011 = vld [vmem:[#allocation5 + $0xa4] sm:$0xf]
    %v3012 = vld [vmem:[#allocation5 + $0xa8] sm:$0xff]
    %v3013 = vld [vmem:[#allocation5 + $0xb0] sm:$0xf]
    %v3014 = vld [vmem:[#allocation5 + $0xb4] sm:$0xff]
    %v3015 = vld [vmem:[#allocation5 + $0xbc] sm:$0xf]
    %v3048 = vunpack.c.l.b16 %v2984
    %v3049 = vunpack.c.h.b16 %v2984
    %v3050 = vunpack.c.l.b16 %v2985
    %v3051 = vunpack.c.l.b16 %v2986
    %v3052 = vunpack.c.h.b16 %v2986
    %v3053 = vunpack.c.l.b16 %v2987
    %v3054 = vunpack.c.l.b16 %v2988
    %v3055 = vunpack.c.h.b16 %v2988
    %v3056 = vunpack.c.l.b16 %v2989
    %v3057 = vunpack.c.l.b16 %v2990
    %v3058 = vunpack.c.h.b16 %v2990
    %v3059 = vunpack.c.l.b16 %v2991
    %v3060 = vunpack.c.l.b16 %v2992
    %v3061 = vunpack.c.h.b16 %v2992
    %v3062 = vunpack.c.l.b16 %v2993
    %v3063 = vunpack.c.l.b16 %v2994
    %v3064 = vunpack.c.h.b16 %v2994
    %v3065 = vunpack.c.l.b16 %v2995
    %v3066 = vunpack.c.l.b16 %v2996
    %v3067 = vunpack.c.h.b16 %v2996
    %v3068 = vunpack.c.l.b16 %v2997
    %v3069 = vunpack.c.l.b16 %v2998
    %v3070 = vunpack.c.h.b16 %v2998
    %v3071 = vunpack.c.l.b16 %v2999
    %v3072 = vunpack.c.l.b16 %v3000
    %v3073 = vunpack.c.h.b16 %v3000
    %v3074 = vunpack.c.l.b16 %v3001
    %v3075 = vunpack.c.l.b16 %v3002
    %v3076 = vunpack.c.h.b16 %v3002
    %v3077 = vunpack.c.l.b16 %v3003
    %v3078 = vunpack.c.l.b16 %v3004
    %v3079 = vunpack.c.h.b16 %v3004
    %v3080 = vunpack.c.l.b16 %v3005
    %v3081 = vunpack.c.l.b16 %v3006
    %v3082 = vunpack.c.h.b16 %v3006
    %v3083 = vunpack.c.l.b16 %v3007
    %v3084 = vunpack.c.l.b16 %v3008
    %v3085 = vunpack.c.h.b16 %v3008
    %v3086 = vunpack.c.l.b16 %v3009
    %v3087 = vunpack.c.l.b16 %v3010
    %v3088 = vunpack.c.h.b16 %v3010
    %v3089 = vunpack.c.l.b16 %v3011
    %v3090 = vunpack.c.l.b16 %v3012
    %v3091 = vunpack.c.h.b16 %v3012
    %v3092 = vunpack.c.l.b16 %v3013
    %v3093 = vunpack.c.l.b16 %v3014
    %v3094 = vunpack.c.h.b16 %v3014
    %v3095 = vunpack.c.l.b16 %v3015
    %v3096 = vpack.c.b16 %v3051, %v3048
    %v3097 = vpack.c.b16 %v3052, %v3049
    %v3098 = vpack.c.b16 %v3053, %v3050
    %v3099 = vpack.c.b16 %v3057, %v3054
    %v3100 = vpack.c.b16 %v3058, %v3055
    %v3101 = vpack.c.b16 %v3059, %v3056
    %v3102 = vpack.c.b16 %v3063, %v3060
    %v3103 = vpack.c.b16 %v3064, %v3061
    %v3104 = vpack.c.b16 %v3065, %v3062
    %v3105 = vpack.c.b16 %v3069, %v3066
    %v3106 = vpack.c.b16 %v3070, %v3067
    %v3107 = vpack.c.b16 %v3071, %v3068
    %v3108 = vpack.c.b16 %v3075, %v3072
    %v3109 = vpack.c.b16 %v3076, %v3073
    %v3110 = vpack.c.b16 %v3077, %v3074
    %v3111 = vpack.c.b16 %v3081, %v3078
    %v3112 = vpack.c.b16 %v3082, %v3079
    %v3113 = vpack.c.b16 %v3083, %v3080
    %v3114 = vpack.c.b16 %v3087, %v3084
    %v3115 = vpack.c.b16 %v3088, %v3085
    %v3116 = vpack.c.b16 %v3089, %v3086
    %v3117 = vpack.c.b16 %v3093, %v3090
    %v3118 = vpack.c.b16 %v3094, %v3091
    %v3119 = vpack.c.b16 %v3095, %v3092
    %3144 = vmatprep.subr.bf16.mxu0 %v3118
    %3145 = vmatpush1.bf16.msra.mxu0 %v3117
    %3146 = vmatprep.subr.bf16.mxu0 %v3115
    %3147 = vmatpush1.bf16.msra.mxu0 %v3114
    %3148 = vmatprep.subr.bf16.mxu0 %v3112
    %3149 = vmatpush1.bf16.msra.mxu0 %v3111
    %3150 = vmatprep.subr.bf16.mxu0 %v3109
    %3151 = vmatpush1.bf16.msra.mxu0 %v3108
    %3152 = vmatprep.subr.bf16.mxu0 %v3106
    %3153 = vmatpush1.bf16.msra.mxu0 %v3105
    %3154 = vmatprep.subr.bf16.mxu0 %v3103
    %3155 = vmatpush1.bf16.msra.mxu0 %v3102
    %3156 = vmatprep.subr.bf16.mxu0 %v3100
    %3157 = vmatpush1.bf16.msra.mxu0 %v3099
    %3158 = vmatprep.subr.bf16.mxu0 %v3097
    %3159 = vmatpush1.bf16.msra.mxu0 %v3096
    %3160 = vmatprep.subr.bf16.mxu0 0
    %3161 = vmatpush2.bf16.msra.mxu0 0
    %3162 = vmatprep.subr.bf16.mxu0 0
    %3163 = vmatpush2.bf16.msra.mxu0 0
    %3164 = vmatprep.subr.bf16.mxu0 0
    %3165 = vmatpush2.bf16.msra.mxu0 0
    %3166 = vmatprep.subr.bf16.mxu0 0
    %3167 = vmatpush2.bf16.msra.mxu0 0
    %3168 = vmatprep.subr.bf16.mxu0 0
    %3169 = vmatpush2.bf16.msra.mxu0 0
    %3170 = vmatprep.subr.bf16.mxu0 0
    %3171 = vmatpush2.bf16.msra.mxu0 0
    %3172 = vmatprep.subr.bf16.mxu0 0
    %3173 = vmatpush2.bf16.msra.mxu0 0
    %3174 = vmatprep.subr.bf16.mxu0 0
    %3175 = vmatpush2.bf16.msra.mxu0 0
    %3176 = vmatprep.mubr.bf16.mxu0 0
    %3177 = vmatmul.mubr.bf16.gmra.mxu0 %v2983
    %v3178 = vpop.f32.mrf.mxu0
    %v3179 = vadd.f32 %v2176, %v3178
    %v3180 = vpop.f32.mrf.mxu0
    %v3181 = vadd.f32 %v2177, %v3180
    %v3182 = vpop.f32.mrf.mxu0
    %v3183 = vpop.f32.mrf.mxu0
    %3184 = vdwg.mxu0
    %3185 = vmatprep.subr.bf16.mxu0 0
    %3186 = vmatpush1.bf16.msra.mxu0 %v3119
    %3187 = vmatprep.subr.bf16.mxu0 0
    %3188 = vmatpush1.bf16.msra.mxu0 %v3116
    %3189 = vmatprep.subr.bf16.mxu0 0
    %3190 = vmatpush1.bf16.msra.mxu0 %v3113
    %3191 = vmatprep.subr.bf16.mxu0 0
    %3192 = vmatpush1.bf16.msra.mxu0 %v3110
    %3193 = vmatprep.subr.bf16.mxu0 0
    %3194 = vmatpush1.bf16.msra.mxu0 %v3107
    %3195 = vmatprep.subr.bf16.mxu0 0
    %3196 = vmatpush1.bf16.msra.mxu0 %v3104
    %3197 = vmatprep.subr.bf16.mxu0 0
    %3198 = vmatpush1.bf16.msra.mxu0 %v3101
    %3199 = vmatprep.subr.bf16.mxu0 0
    %3200 = vmatpush1.bf16.msra.mxu0 %v3098
    %3201 = vmatprep.subr.bf16.mxu0 0
    %3202 = vmatpush2.bf16.msra.mxu0 0
    %3203 = vmatprep.subr.bf16.mxu0 0
    %3204 = vmatpush2.bf16.msra.mxu0 0
    %3205 = vmatprep.subr.bf16.mxu0 0
    %3206 = vmatpush2.bf16.msra.mxu0 0
    %3207 = vmatprep.subr.bf16.mxu0 0
    %3208 = vmatpush2.bf16.msra.mxu0 0
    %3209 = vmatprep.subr.bf16.mxu0 0
    %3210 = vmatpush2.bf16.msra.mxu0 0
    %3211 = vmatprep.subr.bf16.mxu0 0
    %3212 = vmatpush2.bf16.msra.mxu0 0
    %3213 = vmatprep.subr.bf16.mxu0 0
    %3214 = vmatpush2.bf16.msra.mxu0 0
    %3215 = vmatprep.subr.bf16.mxu0 0
    %3216 = vmatpush2.bf16.msra.mxu0 0
    %3217 = vmatprep.mubr.bf16.mxu0 0
    %3218 = vmatmul.mubr.bf16.gmra.mxu0 %v2983
    %v3219 = vpop.f32.mrf.mxu0
    %v3220 = vadd.f32 %v2178, %v3219
    %v3221 = vpop.f32.mrf.mxu0
    %v3222 = vpop.f32.mrf.mxu0
    %v3223 = vpop.f32.mrf.mxu0
    %3224 = vdwg.mxu0
    %v3225 = vadd.f32 %v2980, %v3179
    %v3226 = vxor.u32 %v3225, 2147483648
    %v3227 = vmul.f32 %v3226, 1.442695
    %v3228 = vpow.pop %v3227
    %v3229 = vadd.f32 %v3228, 1.0
    %v3230 = vrcp.pop %v3229
    %v3231 = vmul.f32 1.0, %v3230
    %v3232 = vadd.f32 %v2981, %v3181
    %v3233 = vxor.u32 %v3232, 2147483648
    %v3234 = vmul.f32 %v3233, 1.442695
    %v3235 = vpow.pop %v3234
    %v3236 = vadd.f32 %v3235, 1.0
    %v3237 = vrcp.pop %v3236
    %v3238 = vmul.f32 1.0, %v3237
    %v3239 = vmul.f32 %v3231, %v3220
    %v3240 = vadd.f32 %v2982, %v3239
    %v3241 = vtanh.pop %v3240
    %v3242 = vsub.f32 1.0, %v3238
    %v3243 = vmul.f32 %v3242, %v3241
    %v3244 = vmul.f32 %v3238, %v2978
    %v3245 = vadd.f32 %v3243, %v3244
    %3246 = vst [vmem:[#allocation3 + $0x18] sm:$0xff] %v3245
    %v3247 = vld [vmem:[#allocation2 + $0x60] sm:$0xff]
    %v3248 = vld [vmem:[#allocation2 + $0x68] sm:$0xff]
    %v3249 = vld [vmem:[#allocation2 + $0x70] sm:$0xff]
    %v3250 = vpack.c.bf16 %v3245, %v3245
    %v3251 = vld [vmem:[#allocation5] sm:$0xff]
    %v3252 = vld [vmem:[#allocation5 + $0x8] sm:$0xf]
    %v3253 = vld [vmem:[#allocation5 + $0xc] sm:$0xff]
    %v3254 = vld [vmem:[#allocation5 + $0x14] sm:$0xf]
    %v3255 = vld [vmem:[#allocation5 + $0x18] sm:$0xff]
    %v3256 = vld [vmem:[#allocation5 + $0x20] sm:$0xf]
    %v3257 = vld [vmem:[#allocation5 + $0x24] sm:$0xff]
    %v3258 = vld [vmem:[#allocation5 + $0x2c] sm:$0xf]
    %v3259 = vld [vmem:[#allocation5 + $0x30] sm:$0xff]
    %v3260 = vld [vmem:[#allocation5 + $0x38] sm:$0xf]
    %v3261 = vld [vmem:[#allocation5 + $0x3c] sm:$0xff]
    %v3262 = vld [vmem:[#allocation5 + $0x44] sm:$0xf]
    %v3263 = vld [vmem:[#allocation5 + $0x48] sm:$0xff]
    %v3264 = vld [vmem:[#allocation5 + $0x50] sm:$0xf]
    %v3265 = vld [vmem:[#allocation5 + $0x54] sm:$0xff]
    %v3266 = vld [vmem:[#allocation5 + $0x5c] sm:$0xf]
    %v3267 = vld [vmem:[#allocation5 + $0x60] sm:$0xff]
    %v3268 = vld [vmem:[#allocation5 + $0x68] sm:$0xf]
    %v3269 = vld [vmem:[#allocation5 + $0x6c] sm:$0xff]
    %v3270 = vld [vmem:[#allocation5 + $0x74] sm:$0xf]
    %v3271 = vld [vmem:[#allocation5 + $0x78] sm:$0xff]
    %v3272 = vld [vmem:[#allocation5 + $0x80] sm:$0xf]
    %v3273 = vld [vmem:[#allocation5 + $0x84] sm:$0xff]
    %v3274 = vld [vmem:[#allocation5 + $0x8c] sm:$0xf]
    %v3275 = vld [vmem:[#allocation5 + $0x90] sm:$0xff]
    %v3276 = vld [vmem:[#allocation5 + $0x98] sm:$0xf]
    %v3277 = vld [vmem:[#allocation5 + $0x9c] sm:$0xff]
    %v3278 = vld [vmem:[#allocation5 + $0xa4] sm:$0xf]
    %v3279 = vld [vmem:[#allocation5 + $0xa8] sm:$0xff]
    %v3280 = vld [vmem:[#allocation5 + $0xb0] sm:$0xf]
    %v3281 = vld [vmem:[#allocation5 + $0xb4] sm:$0xff]
    %v3282 = vld [vmem:[#allocation5 + $0xbc] sm:$0xf]
    %v3315 = vunpack.c.l.b16 %v3251
    %v3316 = vunpack.c.h.b16 %v3251
    %v3317 = vunpack.c.l.b16 %v3252
    %v3318 = vunpack.c.l.b16 %v3253
    %v3319 = vunpack.c.h.b16 %v3253
    %v3320 = vunpack.c.l.b16 %v3254
    %v3321 = vunpack.c.l.b16 %v3255
    %v3322 = vunpack.c.h.b16 %v3255
    %v3323 = vunpack.c.l.b16 %v3256
    %v3324 = vunpack.c.l.b16 %v3257
    %v3325 = vunpack.c.h.b16 %v3257
    %v3326 = vunpack.c.l.b16 %v3258
    %v3327 = vunpack.c.l.b16 %v3259
    %v3328 = vunpack.c.h.b16 %v3259
    %v3329 = vunpack.c.l.b16 %v3260
    %v3330 = vunpack.c.l.b16 %v3261
    %v3331 = vunpack.c.h.b16 %v3261
    %v3332 = vunpack.c.l.b16 %v3262
    %v3333 = vunpack.c.l.b16 %v3263
    %v3334 = vunpack.c.h.b16 %v3263
    %v3335 = vunpack.c.l.b16 %v3264
    %v3336 = vunpack.c.l.b16 %v3265
    %v3337 = vunpack.c.h.b16 %v3265
    %v3338 = vunpack.c.l.b16 %v3266
    %v3339 = vunpack.c.l.b16 %v3267
    %v3340 = vunpack.c.h.b16 %v3267
    %v3341 = vunpack.c.l.b16 %v3268
    %v3342 = vunpack.c.l.b16 %v3269
    %v3343 = vunpack.c.h.b16 %v3269
    %v3344 = vunpack.c.l.b16 %v3270
    %v3345 = vunpack.c.l.b16 %v3271
    %v3346 = vunpack.c.h.b16 %v3271
    %v3347 = vunpack.c.l.b16 %v3272
    %v3348 = vunpack.c.l.b16 %v3273
    %v3349 = vunpack.c.h.b16 %v3273
    %v3350 = vunpack.c.l.b16 %v3274
    %v3351 = vunpack.c.l.b16 %v3275
    %v3352 = vunpack.c.h.b16 %v3275
    %v3353 = vunpack.c.l.b16 %v3276
    %v3354 = vunpack.c.l.b16 %v3277
    %v3355 = vunpack.c.h.b16 %v3277
    %v3356 = vunpack.c.l.b16 %v3278
    %v3357 = vunpack.c.l.b16 %v3279
    %v3358 = vunpack.c.h.b16 %v3279
    %v3359 = vunpack.c.l.b16 %v3280
    %v3360 = vunpack.c.l.b16 %v3281
    %v3361 = vunpack.c.h.b16 %v3281
    %v3362 = vunpack.c.l.b16 %v3282
    %v3363 = vpack.c.b16 %v3318, %v3315
    %v3364 = vpack.c.b16 %v3319, %v3316
    %v3365 = vpack.c.b16 %v3320, %v3317
    %v3366 = vpack.c.b16 %v3324, %v3321
    %v3367 = vpack.c.b16 %v3325, %v3322
    %v3368 = vpack.c.b16 %v3326, %v3323
    %v3369 = vpack.c.b16 %v3330, %v3327
    %v3370 = vpack.c.b16 %v3331, %v3328
    %v3371 = vpack.c.b16 %v3332, %v3329
    %v3372 = vpack.c.b16 %v3336, %v3333
    %v3373 = vpack.c.b16 %v3337, %v3334
    %v3374 = vpack.c.b16 %v3338, %v3335
    %v3375 = vpack.c.b16 %v3342, %v3339
    %v3376 = vpack.c.b16 %v3343, %v3340
    %v3377 = vpack.c.b16 %v3344, %v3341
    %v3378 = vpack.c.b16 %v3348, %v3345
    %v3379 = vpack.c.b16 %v3349, %v3346
    %v3380 = vpack.c.b16 %v3350, %v3347
    %v3381 = vpack.c.b16 %v3354, %v3351
    %v3382 = vpack.c.b16 %v3355, %v3352
    %v3383 = vpack.c.b16 %v3356, %v3353
    %v3384 = vpack.c.b16 %v3360, %v3357
    %v3385 = vpack.c.b16 %v3361, %v3358
    %v3386 = vpack.c.b16 %v3362, %v3359
    %3411 = vmatprep.subr.bf16.mxu0 %v3385
    %3412 = vmatpush1.bf16.msra.mxu0 %v3384
    %3413 = vmatprep.subr.bf16.mxu0 %v3382
    %3414 = vmatpush1.bf16.msra.mxu0 %v3381
    %3415 = vmatprep.subr.bf16.mxu0 %v3379
    %3416 = vmatpush1.bf16.msra.mxu0 %v3378
    %3417 = vmatprep.subr.bf16.mxu0 %v3376
    %3418 = vmatpush1.bf16.msra.mxu0 %v3375
    %3419 = vmatprep.subr.bf16.mxu0 %v3373
    %3420 = vmatpush1.bf16.msra.mxu0 %v3372
    %3421 = vmatprep.subr.bf16.mxu0 %v3370
    %3422 = vmatpush1.bf16.msra.mxu0 %v3369
    %3423 = vmatprep.subr.bf16.mxu0 %v3367
    %3424 = vmatpush1.bf16.msra.mxu0 %v3366
    %3425 = vmatprep.subr.bf16.mxu0 %v3364
    %3426 = vmatpush1.bf16.msra.mxu0 %v3363
    %3427 = vmatprep.subr.bf16.mxu0 0
    %3428 = vmatpush2.bf16.msra.mxu0 0
    %3429 = vmatprep.subr.bf16.mxu0 0
    %3430 = vmatpush2.bf16.msra.mxu0 0
    %3431 = vmatprep.subr.bf16.mxu0 0
    %3432 = vmatpush2.bf16.msra.mxu0 0
    %3433 = vmatprep.subr.bf16.mxu0 0
    %3434 = vmatpush2.bf16.msra.mxu0 0
    %3435 = vmatprep.subr.bf16.mxu0 0
    %3436 = vmatpush2.bf16.msra.mxu0 0
    %3437 = vmatprep.subr.bf16.mxu0 0
    %3438 = vmatpush2.bf16.msra.mxu0 0
    %3439 = vmatprep.subr.bf16.mxu0 0
    %3440 = vmatpush2.bf16.msra.mxu0 0
    %3441 = vmatprep.subr.bf16.mxu0 0
    %3442 = vmatpush2.bf16.msra.mxu0 0
    %3443 = vmatprep.mubr.bf16.mxu0 0
    %3444 = vmatmul.mubr.bf16.gmra.mxu0 %v3250
    %v3445 = vpop.f32.mrf.mxu0
    %v3446 = vadd.f32 %v2176, %v3445
    %v3447 = vpop.f32.mrf.mxu0
    %v3448 = vadd.f32 %v2177, %v3447
    %v3449 = vpop.f32.mrf.mxu0
    %v3450 = vpop.f32.mrf.mxu0
    %3451 = vdwg.mxu0
    %3452 = vmatprep.subr.bf16.mxu0 0
    %3453 = vmatpush1.bf16.msra.mxu0 %v3386
    %3454 = vmatprep.subr.bf16.mxu0 0
    %3455 = vmatpush1.bf16.msra.mxu0 %v3383
    %3456 = vmatprep.subr.bf16.mxu0 0
    %3457 = vmatpush1.bf16.msra.mxu0 %v3380
    %3458 = vmatprep.subr.bf16.mxu0 0
    %3459 = vmatpush1.bf16.msra.mxu0 %v3377
    %3460 = vmatprep.subr.bf16.mxu0 0
    %3461 = vmatpush1.bf16.msra.mxu0 %v3374
    %3462 = vmatprep.subr.bf16.mxu0 0
    %3463 = vmatpush1.bf16.msra.mxu0 %v3371
    %3464 = vmatprep.subr.bf16.mxu0 0
    %3465 = vmatpush1.bf16.msra.mxu0 %v3368
    %3466 = vmatprep.subr.bf16.mxu0 0
    %3467 = vmatpush1.bf16.msra.mxu0 %v3365
    %3468 = vmatprep.subr.bf16.mxu0 0
    %3469 = vmatpush2.bf16.msra.mxu0 0
    %3470 = vmatprep.subr.bf16.mxu0 0
    %3471 = vmatpush2.bf16.msra.mxu0 0
    %3472 = vmatprep.subr.bf16.mxu0 0
    %3473 = vmatpush2.bf16.msra.mxu0 0
    %3474 = vmatprep.subr.bf16.mxu0 0
    %3475 = vmatpush2.bf16.msra.mxu0 0
    %3476 = vmatprep.subr.bf16.mxu0 0
    %3477 = vmatpush2.bf16.msra.mxu0 0
    %3478 = vmatprep.subr.bf16.mxu0 0
    %3479 = vmatpush2.bf16.msra.mxu0 0
    %3480 = vmatprep.subr.bf16.mxu0 0
    %3481 = vmatpush2.bf16.msra.mxu0 0
    %3482 = vmatprep.subr.bf16.mxu0 0
    %3483 = vmatpush2.bf16.msra.mxu0 0
    %3484 = vmatprep.mubr.bf16.mxu0 0
    %3485 = vmatmul.mubr.bf16.gmra.mxu0 %v3250
    %v3486 = vpop.f32.mrf.mxu0
    %v3487 = vadd.f32 %v2178, %v3486
    %v3488 = vpop.f32.mrf.mxu0
    %v3489 = vpop.f32.mrf.mxu0
    %v3490 = vpop.f32.mrf.mxu0
    %3491 = vdwg.mxu0
    %v3492 = vadd.f32 %v3247, %v3446
    %v3493 = vxor.u32 %v3492, 2147483648
    %v3494 = vmul.f32 %v3493, 1.442695
    %v3495 = vpow.pop %v3494
    %v3496 = vadd.f32 %v3495, 1.0
    %v3497 = vrcp.pop %v3496
    %v3498 = vmul.f32 1.0, %v3497
    %v3499 = vadd.f32 %v3248, %v3448
    %v3500 = vxor.u32 %v3499, 2147483648
    %v3501 = vmul.f32 %v3500, 1.442695
    %v3502 = vpow.pop %v3501
    %v3503 = vadd.f32 %v3502, 1.0
    %v3504 = vrcp.pop %v3503
    %v3505 = vmul.f32 1.0, %v3504
    %v3506 = vmul.f32 %v3498, %v3487
    %v3507 = vadd.f32 %v3249, %v3506
    %v3508 = vtanh.pop %v3507
    %v3509 = vsub.f32 1.0, %v3505
    %v3510 = vmul.f32 %v3509, %v3508
    %v3511 = vmul.f32 %v3505, %v3245
    %v3512 = vadd.f32 %v3510, %v3511
    %3513 = vst [vmem:[#allocation3 + $0x20] sm:$0xff] %v3512
    %v3514 = vld [vmem:[#allocation2 + $0x78] sm:$0xff]
    %v3515 = vld [vmem:[#allocation2 + $0x80] sm:$0xff]
    %v3516 = vld [vmem:[#allocation2 + $0x88] sm:$0xff]
    %v3517 = vpack.c.bf16 %v3512, %v3512
    %v3518 = vld [vmem:[#allocation5] sm:$0xff]
    %v3519 = vld [vmem:[#allocation5 + $0x8] sm:$0xf]
    %v3520 = vld [vmem:[#allocation5 + $0xc] sm:$0xff]
    %v3521 = vld [vmem:[#allocation5 + $0x14] sm:$0xf]
    %v3522 = vld [vmem:[#allocation5 + $0x18] sm:$0xff]
    %v3523 = vld [vmem:[#allocation5 + $0x20] sm:$0xf]
    %v3524 = vld [vmem:[#allocation5 + $0x24] sm:$0xff]
    %v3525 = vld [vmem:[#allocation5 + $0x2c] sm:$0xf]
    %v3526 = vld [vmem:[#allocation5 + $0x30] sm:$0xff]
    %v3527 = vld [vmem:[#allocation5 + $0x38] sm:$0xf]
    %v3528 = vld [vmem:[#allocation5 + $0x3c] sm:$0xff]
    %v3529 = vld [vmem:[#allocation5 + $0x44] sm:$0xf]
    %v3530 = vld [vmem:[#allocation5 + $0x48] sm:$0xff]
    %v3531 = vld [vmem:[#allocation5 + $0x50] sm:$0xf]
    %v3532 = vld [vmem:[#allocation5 + $0x54] sm:$0xff]
    %v3533 = vld [vmem:[#allocation5 + $0x5c] sm:$0xf]
    %v3534 = vld [vmem:[#allocation5 + $0x60] sm:$0xff]
    %v3535 = vld [vmem:[#allocation5 + $0x68] sm:$0xf]
    %v3536 = vld [vmem:[#allocation5 + $0x6c] sm:$0xff]
    %v3537 = vld [vmem:[#allocation5 + $0x74] sm:$0xf]
    %v3538 = vld [vmem:[#allocation5 + $0x78] sm:$0xff]
    %v3539 = vld [vmem:[#allocation5 + $0x80] sm:$0xf]
    %v3540 = vld [vmem:[#allocation5 + $0x84] sm:$0xff]
    %v3541 = vld [vmem:[#allocation5 + $0x8c] sm:$0xf]
    %v3542 = vld [vmem:[#allocation5 + $0x90] sm:$0xff]
    %v3543 = vld [vmem:[#allocation5 + $0x98] sm:$0xf]
    %v3544 = vld [vmem:[#allocation5 + $0x9c] sm:$0xff]
    %v3545 = vld [vmem:[#allocation5 + $0xa4] sm:$0xf]
    %v3546 = vld [vmem:[#allocation5 + $0xa8] sm:$0xff]
    %v3547 = vld [vmem:[#allocation5 + $0xb0] sm:$0xf]
    %v3548 = vld [vmem:[#allocation5 + $0xb4] sm:$0xff]
    %v3549 = vld [vmem:[#allocation5 + $0xbc] sm:$0xf]
    %v3582 = vunpack.c.l.b16 %v3518
    %v3583 = vunpack.c.h.b16 %v3518
    %v3584 = vunpack.c.l.b16 %v3519
    %v3585 = vunpack.c.l.b16 %v3520
    %v3586 = vunpack.c.h.b16 %v3520
    %v3587 = vunpack.c.l.b16 %v3521
    %v3588 = vunpack.c.l.b16 %v3522
    %v3589 = vunpack.c.h.b16 %v3522
    %v3590 = vunpack.c.l.b16 %v3523
    %v3591 = vunpack.c.l.b16 %v3524
    %v3592 = vunpack.c.h.b16 %v3524
    %v3593 = vunpack.c.l.b16 %v3525
    %v3594 = vunpack.c.l.b16 %v3526
    %v3595 = vunpack.c.h.b16 %v3526
    %v3596 = vunpack.c.l.b16 %v3527
    %v3597 = vunpack.c.l.b16 %v3528
    %v3598 = vunpack.c.h.b16 %v3528
    %v3599 = vunpack.c.l.b16 %v3529
    %v3600 = vunpack.c.l.b16 %v3530
    %v3601 = vunpack.c.h.b16 %v3530
    %v3602 = vunpack.c.l.b16 %v3531
    %v3603 = vunpack.c.l.b16 %v3532
    %v3604 = vunpack.c.h.b16 %v3532
    %v3605 = vunpack.c.l.b16 %v3533
    %v3606 = vunpack.c.l.b16 %v3534
    %v3607 = vunpack.c.h.b16 %v3534
    %v3608 = vunpack.c.l.b16 %v3535
    %v3609 = vunpack.c.l.b16 %v3536
    %v3610 = vunpack.c.h.b16 %v3536
    %v3611 = vunpack.c.l.b16 %v3537
    %v3612 = vunpack.c.l.b16 %v3538
    %v3613 = vunpack.c.h.b16 %v3538
    %v3614 = vunpack.c.l.b16 %v3539
    %v3615 = vunpack.c.l.b16 %v3540
    %v3616 = vunpack.c.h.b16 %v3540
    %v3617 = vunpack.c.l.b16 %v3541
    %v3618 = vunpack.c.l.b16 %v3542
    %v3619 = vunpack.c.h.b16 %v3542
    %v3620 = vunpack.c.l.b16 %v3543
    %v3621 = vunpack.c.l.b16 %v3544
    %v3622 = vunpack.c.h.b16 %v3544
    %v3623 = vunpack.c.l.b16 %v3545
    %v3624 = vunpack.c.l.b16 %v3546
    %v3625 = vunpack.c.h.b16 %v3546
    %v3626 = vunpack.c.l.b16 %v3547
    %v3627 = vunpack.c.l.b16 %v3548
    %v3628 = vunpack.c.h.b16 %v3548
    %v3629 = vunpack.c.l.b16 %v3549
    %v3630 = vpack.c.b16 %v3585, %v3582
    %v3631 = vpack.c.b16 %v3586, %v3583
    %v3632 = vpack.c.b16 %v3587, %v3584
    %v3633 = vpack.c.b16 %v3591, %v3588
    %v3634 = vpack.c.b16 %v3592, %v3589
    %v3635 = vpack.c.b16 %v3593, %v3590
    %v3636 = vpack.c.b16 %v3597, %v3594
    %v3637 = vpack.c.b16 %v3598, %v3595
    %v3638 = vpack.c.b16 %v3599, %v3596
    %v3639 = vpack.c.b16 %v3603, %v3600
    %v3640 = vpack.c.b16 %v3604, %v3601
    %v3641 = vpack.c.b16 %v3605, %v3602
    %v3642 = vpack.c.b16 %v3609, %v3606
    %v3643 = vpack.c.b16 %v3610, %v3607
    %v3644 = vpack.c.b16 %v3611, %v3608
    %v3645 = vpack.c.b16 %v3615, %v3612
    %v3646 = vpack.c.b16 %v3616, %v3613
    %v3647 = vpack.c.b16 %v3617, %v3614
    %v3648 = vpack.c.b16 %v3621, %v3618
    %v3649 = vpack.c.b16 %v3622, %v3619
    %v3650 = vpack.c.b16 %v3623, %v3620
    %v3651 = vpack.c.b16 %v3627, %v3624
    %v3652 = vpack.c.b16 %v3628, %v3625
    %v3653 = vpack.c.b16 %v3629, %v3626
    %3678 = vmatprep.subr.bf16.mxu0 %v3652
    %3679 = vmatpush1.bf16.msra.mxu0 %v3651
    %3680 = vmatprep.subr.bf16.mxu0 %v3649
    %3681 = vmatpush1.bf16.msra.mxu0 %v3648
    %3682 = vmatprep.subr.bf16.mxu0 %v3646
    %3683 = vmatpush1.bf16.msra.mxu0 %v3645
    %3684 = vmatprep.subr.bf16.mxu0 %v3643
    %3685 = vmatpush1.bf16.msra.mxu0 %v3642
    %3686 = vmatprep.subr.bf16.mxu0 %v3640
    %3687 = vmatpush1.bf16.msra.mxu0 %v3639
    %3688 = vmatprep.subr.bf16.mxu0 %v3637
    %3689 = vmatpush1.bf16.msra.mxu0 %v3636
    %3690 = vmatprep.subr.bf16.mxu0 %v3634
    %3691 = vmatpush1.bf16.msra.mxu0 %v3633
    %3692 = vmatprep.subr.bf16.mxu0 %v3631
    %3693 = vmatpush1.bf16.msra.mxu0 %v3630
    %3694 = vmatprep.subr.bf16.mxu0 0
    %3695 = vmatpush2.bf16.msra.mxu0 0
    %3696 = vmatprep.subr.bf16.mxu0 0
    %3697 = vmatpush2.bf16.msra.mxu0 0
    %3698 = vmatprep.subr.bf16.mxu0 0
    %3699 = vmatpush2.bf16.msra.mxu0 0
    %3700 = vmatprep.subr.bf16.mxu0 0
    %3701 = vmatpush2.bf16.msra.mxu0 0
    %3702 = vmatprep.subr.bf16.mxu0 0
    %3703 = vmatpush2.bf16.msra.mxu0 0
    %3704 = vmatprep.subr.bf16.mxu0 0
    %3705 = vmatpush2.bf16.msra.mxu0 0
    %3706 = vmatprep.subr.bf16.mxu0 0
    %3707 = vmatpush2.bf16.msra.mxu0 0
    %3708 = vmatprep.subr.bf16.mxu0 0
    %3709 = vmatpush2.bf16.msra.mxu0 0
    %3710 = vmatprep.mubr.bf16.mxu0 0
    %3711 = vmatmul.mubr.bf16.gmra.mxu0 %v3517
    %v3712 = vpop.f32.mrf.mxu0
    %v3713 = vadd.f32 %v2176, %v3712
    %v3714 = vpop.f32.mrf.mxu0
    %v3715 = vadd.f32 %v2177, %v3714
    %v3716 = vpop.f32.mrf.mxu0
    %v3717 = vpop.f32.mrf.mxu0
    %3718 = vdwg.mxu0
    %3719 = vmatprep.subr.bf16.mxu0 0
    %3720 = vmatpush1.bf16.msra.mxu0 %v3653
    %3721 = vmatprep.subr.bf16.mxu0 0
    %3722 = vmatpush1.bf16.msra.mxu0 %v3650
    %3723 = vmatprep.subr.bf16.mxu0 0
    %3724 = vmatpush1.bf16.msra.mxu0 %v3647
    %3725 = vmatprep.subr.bf16.mxu0 0
    %3726 = vmatpush1.bf16.msra.mxu0 %v3644
    %3727 = vmatprep.subr.bf16.mxu0 0
    %3728 = vmatpush1.bf16.msra.mxu0 %v3641
    %3729 = vmatprep.subr.bf16.mxu0 0
    %3730 = vmatpush1.bf16.msra.mxu0 %v3638
    %3731 = vmatprep.subr.bf16.mxu0 0
    %3732 = vmatpush1.bf16.msra.mxu0 %v3635
    %3733 = vmatprep.subr.bf16.mxu0 0
    %3734 = vmatpush1.bf16.msra.mxu0 %v3632
    %3735 = vmatprep.subr.bf16.mxu0 0
    %3736 = vmatpush2.bf16.msra.mxu0 0
    %3737 = vmatprep.subr.bf16.mxu0 0
    %3738 = vmatpush2.bf16.msra.mxu0 0
    %3739 = vmatprep.subr.bf16.mxu0 0
    %3740 = vmatpush2.bf16.msra.mxu0 0
    %3741 = vmatprep.subr.bf16.mxu0 0
    %3742 = vmatpush2.bf16.msra.mxu0 0
    %3743 = vmatprep.subr.bf16.mxu0 0
    %3744 = vmatpush2.bf16.msra.mxu0 0
    %3745 = vmatprep.subr.bf16.mxu0 0
    %3746 = vmatpush2.bf16.msra.mxu0 0
    %3747 = vmatprep.subr.bf16.mxu0 0
    %3748 = vmatpush2.bf16.msra.mxu0 0
    %3749 = vmatprep.subr.bf16.mxu0 0
    %3750 = vmatpush2.bf16.msra.mxu0 0
    %3751 = vmatprep.mubr.bf16.mxu0 0
    %3752 = vmatmul.mubr.bf16.gmra.mxu0 %v3517
    %v3753 = vpop.f32.mrf.mxu0
    %v3754 = vadd.f32 %v2178, %v3753
    %v3755 = vpop.f32.mrf.mxu0
    %v3756 = vpop.f32.mrf.mxu0
    %v3757 = vpop.f32.mrf.mxu0
    %3758 = vdwg.mxu0
    %v3759 = vadd.f32 %v3514, %v3713
    %v3760 = vxor.u32 %v3759, 2147483648
    %v3761 = vmul.f32 %v3760, 1.442695
    %v3762 = vpow.pop %v3761
    %v3763 = vadd.f32 %v3762, 1.0
    %v3764 = vrcp.pop %v3763
    %v3765 = vmul.f32 1.0, %v3764
    %v3766 = vadd.f32 %v3515, %v3715
    %v3767 = vxor.u32 %v3766, 2147483648
    %v3768 = vmul.f32 %v3767, 1.442695
    %v3769 = vpow.pop %v3768
    %v3770 = vadd.f32 %v3769, 1.0
    %v3771 = vrcp.pop %v3770
    %v3772 = vmul.f32 1.0, %v3771
    %v3773 = vmul.f32 %v3765, %v3754
    %v3774 = vadd.f32 %v3516, %v3773
    %v3775 = vtanh.pop %v3774
    %v3776 = vsub.f32 1.0, %v3772
    %v3777 = vmul.f32 %v3776, %v3775
    %v3778 = vmul.f32 %v3772, %v3512
    %v3779 = vadd.f32 %v3777, %v3778
    %3780 = vst [vmem:[#allocation3 + $0x28] sm:$0xff] %v3779
    %v3781 = vld [vmem:[#allocation2 + $0x90] sm:$0xff]
    %v3782 = vld [vmem:[#allocation2 + $0x98] sm:$0xff]
    %v3783 = vld [vmem:[#allocation2 + $0xa0] sm:$0xff]
    %v3784 = vpack.c.bf16 %v3779, %v3779
    %v3785 = vld [vmem:[#allocation5] sm:$0xff]
    %v3786 = vld [vmem:[#allocation5 + $0x8] sm:$0xf]
    %v3787 = vld [vmem:[#allocation5 + $0xc] sm:$0xff]
    %v3788 = vld [vmem:[#allocation5 + $0x14] sm:$0xf]
    %v3789 = vld [vmem:[#allocation5 + $0x18] sm:$0xff]
    %v3790 = vld [vmem:[#allocation5 + $0x20] sm:$0xf]
    %v3791 = vld [vmem:[#allocation5 + $0x24] sm:$0xff]
    %v3792 = vld [vmem:[#allocation5 + $0x2c] sm:$0xf]
    %v3793 = vld [vmem:[#allocation5 + $0x30] sm:$0xff]
    %v3794 = vld [vmem:[#allocation5 + $0x38] sm:$0xf]
    %v3795 = vld [vmem:[#allocation5 + $0x3c] sm:$0xff]
    %v3796 = vld [vmem:[#allocation5 + $0x44] sm:$0xf]
    %v3797 = vld [vmem:[#allocation5 + $0x48] sm:$0xff]
    %v3798 = vld [vmem:[#allocation5 + $0x50] sm:$0xf]
    %v3799 = vld [vmem:[#allocation5 + $0x54] sm:$0xff]
    %v3800 = vld [vmem:[#allocation5 + $0x5c] sm:$0xf]
    %v3801 = vld [vmem:[#allocation5 + $0x60] sm:$0xff]
    %v3802 = vld [vmem:[#allocation5 + $0x68] sm:$0xf]
    %v3803 = vld [vmem:[#allocation5 + $0x6c] sm:$0xff]
    %v3804 = vld [vmem:[#allocation5 + $0x74] sm:$0xf]
    %v3805 = vld [vmem:[#allocation5 + $0x78] sm:$0xff]
    %v3806 = vld [vmem:[#allocation5 + $0x80] sm:$0xf]
    %v3807 = vld [vmem:[#allocation5 + $0x84] sm:$0xff]
    %v3808 = vld [vmem:[#allocation5 + $0x8c] sm:$0xf]
    %v3809 = vld [vmem:[#allocation5 + $0x90] sm:$0xff]
    %v3810 = vld [vmem:[#allocation5 + $0x98] sm:$0xf]
    %v3811 = vld [vmem:[#allocation5 + $0x9c] sm:$0xff]
    %v3812 = vld [vmem:[#allocation5 + $0xa4] sm:$0xf]
    %v3813 = vld [vmem:[#allocation5 + $0xa8] sm:$0xff]
    %v3814 = vld [vmem:[#allocation5 + $0xb0] sm:$0xf]
    %v3815 = vld [vmem:[#allocation5 + $0xb4] sm:$0xff]
    %v3816 = vld [vmem:[#allocation5 + $0xbc] sm:$0xf]
    %v3849 = vunpack.c.l.b16 %v3785
    %v3850 = vunpack.c.h.b16 %v3785
    %v3851 = vunpack.c.l.b16 %v3786
    %v3852 = vunpack.c.l.b16 %v3787
    %v3853 = vunpack.c.h.b16 %v3787
    %v3854 = vunpack.c.l.b16 %v3788
    %v3855 = vunpack.c.l.b16 %v3789
    %v3856 = vunpack.c.h.b16 %v3789
    %v3857 = vunpack.c.l.b16 %v3790
    %v3858 = vunpack.c.l.b16 %v3791
    %v3859 = vunpack.c.h.b16 %v3791
    %v3860 = vunpack.c.l.b16 %v3792
    %v3861 = vunpack.c.l.b16 %v3793
    %v3862 = vunpack.c.h.b16 %v3793
    %v3863 = vunpack.c.l.b16 %v3794
    %v3864 = vunpack.c.l.b16 %v3795
    %v3865 = vunpack.c.h.b16 %v3795
    %v3866 = vunpack.c.l.b16 %v3796
    %v3867 = vunpack.c.l.b16 %v3797
    %v3868 = vunpack.c.h.b16 %v3797
    %v3869 = vunpack.c.l.b16 %v3798
    %v3870 = vunpack.c.l.b16 %v3799
    %v3871 = vunpack.c.h.b16 %v3799
    %v3872 = vunpack.c.l.b16 %v3800
    %v3873 = vunpack.c.l.b16 %v3801
    %v3874 = vunpack.c.h.b16 %v3801
    %v3875 = vunpack.c.l.b16 %v3802
    %v3876 = vunpack.c.l.b16 %v3803
    %v3877 = vunpack.c.h.b16 %v3803
    %v3878 = vunpack.c.l.b16 %v3804
    %v3879 = vunpack.c.l.b16 %v3805
    %v3880 = vunpack.c.h.b16 %v3805
    %v3881 = vunpack.c.l.b16 %v3806
    %v3882 = vunpack.c.l.b16 %v3807
    %v3883 = vunpack.c.h.b16 %v3807
    %v3884 = vunpack.c.l.b16 %v3808
    %v3885 = vunpack.c.l.b16 %v3809
    %v3886 = vunpack.c.h.b16 %v3809
    %v3887 = vunpack.c.l.b16 %v3810
    %v3888 = vunpack.c.l.b16 %v3811
    %v3889 = vunpack.c.h.b16 %v3811
    %v3890 = vunpack.c.l.b16 %v3812
    %v3891 = vunpack.c.l.b16 %v3813
    %v3892 = vunpack.c.h.b16 %v3813
    %v3893 = vunpack.c.l.b16 %v3814
    %v3894 = vunpack.c.l.b16 %v3815
    %v3895 = vunpack.c.h.b16 %v3815
    %v3896 = vunpack.c.l.b16 %v3816
    %v3897 = vpack.c.b16 %v3852, %v3849
    %v3898 = vpack.c.b16 %v3853, %v3850
    %v3899 = vpack.c.b16 %v3854, %v3851
    %v3900 = vpack.c.b16 %v3858, %v3855
    %v3901 = vpack.c.b16 %v3859, %v3856
    %v3902 = vpack.c.b16 %v3860, %v3857
    %v3903 = vpack.c.b16 %v3864, %v3861
    %v3904 = vpack.c.b16 %v3865, %v3862
    %v3905 = vpack.c.b16 %v3866, %v3863
    %v3906 = vpack.c.b16 %v3870, %v3867
    %v3907 = vpack.c.b16 %v3871, %v3868
    %v3908 = vpack.c.b16 %v3872, %v3869
    %v3909 = vpack.c.b16 %v3876, %v3873
    %v3910 = vpack.c.b16 %v3877, %v3874
    %v3911 = vpack.c.b16 %v3878, %v3875
    %v3912 = vpack.c.b16 %v3882, %v3879
    %v3913 = vpack.c.b16 %v3883, %v3880
    %v3914 = vpack.c.b16 %v3884, %v3881
    %v3915 = vpack.c.b16 %v3888, %v3885
    %v3916 = vpack.c.b16 %v3889, %v3886
    %v3917 = vpack.c.b16 %v3890, %v3887
    %v3918 = vpack.c.b16 %v3894, %v3891
    %v3919 = vpack.c.b16 %v3895, %v3892
    %v3920 = vpack.c.b16 %v3896, %v3893
    %3945 = vmatprep.subr.bf16.mxu0 %v3919
    %3946 = vmatpush1.bf16.msra.mxu0 %v3918
    %3947 = vmatprep.subr.bf16.mxu0 %v3916
    %3948 = vmatpush1.bf16.msra.mxu0 %v3915
    %3949 = vmatprep.subr.bf16.mxu0 %v3913
    %3950 = vmatpush1.bf16.msra.mxu0 %v3912
    %3951 = vmatprep.subr.bf16.mxu0 %v3910
    %3952 = vmatpush1.bf16.msra.mxu0 %v3909
    %3953 = vmatprep.subr.bf16.mxu0 %v3907
    %3954 = vmatpush1.bf16.msra.mxu0 %v3906
    %3955 = vmatprep.subr.bf16.mxu0 %v3904
    %3956 = vmatpush1.bf16.msra.mxu0 %v3903
    %3957 = vmatprep.subr.bf16.mxu0 %v3901
    %3958 = vmatpush1.bf16.msra.mxu0 %v3900
    %3959 = vmatprep.subr.bf16.mxu0 %v3898
    %3960 = vmatpush1.bf16.msra.mxu0 %v3897
    %3961 = vmatprep.subr.bf16.mxu0 0
    %3962 = vmatpush2.bf16.msra.mxu0 0
    %3963 = vmatprep.subr.bf16.mxu0 0
    %3964 = vmatpush2.bf16.msra.mxu0 0
    %3965 = vmatprep.subr.bf16.mxu0 0
    %3966 = vmatpush2.bf16.msra.mxu0 0
    %3967 = vmatprep.subr.bf16.mxu0 0
    %3968 = vmatpush2.bf16.msra.mxu0 0
    %3969 = vmatprep.subr.bf16.mxu0 0
    %3970 = vmatpush2.bf16.msra.mxu0 0
    %3971 = vmatprep.subr.bf16.mxu0 0
    %3972 = vmatpush2.bf16.msra.mxu0 0
    %3973 = vmatprep.subr.bf16.mxu0 0
    %3974 = vmatpush2.bf16.msra.mxu0 0
    %3975 = vmatprep.subr.bf16.mxu0 0
    %3976 = vmatpush2.bf16.msra.mxu0 0
    %3977 = vmatprep.mubr.bf16.mxu0 0
    %3978 = vmatmul.mubr.bf16.gmra.mxu0 %v3784
    %v3979 = vpop.f32.mrf.mxu0
    %v3980 = vadd.f32 %v2176, %v3979
    %v3981 = vpop.f32.mrf.mxu0
    %v3982 = vadd.f32 %v2177, %v3981
    %v3983 = vpop.f32.mrf.mxu0
    %v3984 = vpop.f32.mrf.mxu0
    %3985 = vdwg.mxu0
    %3986 = vmatprep.subr.bf16.mxu0 0
    %3987 = vmatpush1.bf16.msra.mxu0 %v3920
    %3988 = vmatprep.subr.bf16.mxu0 0
    %3989 = vmatpush1.bf16.msra.mxu0 %v3917
    %3990 = vmatprep.subr.bf16.mxu0 0
    %3991 = vmatpush1.bf16.msra.mxu0 %v3914
    %3992 = vmatprep.subr.bf16.mxu0 0
    %3993 = vmatpush1.bf16.msra.mxu0 %v3911
    %3994 = vmatprep.subr.bf16.mxu0 0
    %3995 = vmatpush1.bf16.msra.mxu0 %v3908
    %3996 = vmatprep.subr.bf16.mxu0 0
    %3997 = vmatpush1.bf16.msra.mxu0 %v3905
    %3998 = vmatprep.subr.bf16.mxu0 0
    %3999 = vmatpush1.bf16.msra.mxu0 %v3902
    %4000 = vmatprep.subr.bf16.mxu0 0
    %4001 = vmatpush1.bf16.msra.mxu0 %v3899
    %4002 = vmatprep.subr.bf16.mxu0 0
    %4003 = vmatpush2.bf16.msra.mxu0 0
    %4004 = vmatprep.subr.bf16.mxu0 0
    %4005 = vmatpush2.bf16.msra.mxu0 0
    %4006 = vmatprep.subr.bf16.mxu0 0
    %4007 = vmatpush2.bf16.msra.mxu0 0
    %4008 = vmatprep.subr.bf16.mxu0 0
    %4009 = vmatpush2.bf16.msra.mxu0 0
    %4010 = vmatprep.subr.bf16.mxu0 0
    %4011 = vmatpush2.bf16.msra.mxu0 0
    %4012 = vmatprep.subr.bf16.mxu0 0
    %4013 = vmatpush2.bf16.msra.mxu0 0
    %4014 = vmatprep.subr.bf16.mxu0 0
    %4015 = vmatpush2.bf16.msra.mxu0 0
    %4016 = vmatprep.subr.bf16.mxu0 0
    %4017 = vmatpush2.bf16.msra.mxu0 0
    %4018 = vmatprep.mubr.bf16.mxu0 0
    %4019 = vmatmul.mubr.bf16.gmra.mxu0 %v3784
    %v4020 = vpop.f32.mrf.mxu0
    %v4021 = vadd.f32 %v2178, %v4020
    %v4022 = vpop.f32.mrf.mxu0
    %v4023 = vpop.f32.mrf.mxu0
    %v4024 = vpop.f32.mrf.mxu0
    %4025 = vdwg.mxu0
    %v4026 = vadd.f32 %v3781, %v3980
    %v4027 = vxor.u32 %v4026, 2147483648
    %v4028 = vmul.f32 %v4027, 1.442695
    %v4029 = vpow.pop %v4028
    %v4030 = vadd.f32 %v4029, 1.0
    %v4031 = vrcp.pop %v4030
    %v4032 = vmul.f32 1.0, %v4031
    %v4033 = vadd.f32 %v3782, %v3982
    %v4034 = vxor.u32 %v4033, 2147483648
    %v4035 = vmul.f32 %v4034, 1.442695
    %v4036 = vpow.pop %v4035
    %v4037 = vadd.f32 %v4036, 1.0
    %v4038 = vrcp.pop %v4037
    %v4039 = vmul.f32 1.0, %v4038
    %v4040 = vmul.f32 %v4032, %v4021
    %v4041 = vadd.f32 %v3783, %v4040
    %v4042 = vtanh.pop %v4041
    %v4043 = vsub.f32 1.0, %v4039
    %v4044 = vmul.f32 %v4043, %v4042
    %v4045 = vmul.f32 %v4039, %v3779
    %v4046 = vadd.f32 %v4044, %v4045
    %4047 = vst [vmem:[#allocation3 + $0x30] sm:$0xff] %v4046
    %v4048 = vld [vmem:[#allocation2 + $0xa8] sm:$0xff]
    %v4049 = vld [vmem:[#allocation2 + $0xb0] sm:$0xff]
    %v4050 = vld [vmem:[#allocation2 + $0xb8] sm:$0xff]
    %v4051 = vpack.c.bf16 %v4046, %v4046
    %v4052 = vld [vmem:[#allocation5] sm:$0xff]
    %v4053 = vld [vmem:[#allocation5 + $0x8] sm:$0xf]
    %v4054 = vld [vmem:[#allocation5 + $0xc] sm:$0xff]
    %v4055 = vld [vmem:[#allocation5 + $0x14] sm:$0xf]
    %v4056 = vld [vmem:[#allocation5 + $0x18] sm:$0xff]
    %v4057 = vld [vmem:[#allocation5 + $0x20] sm:$0xf]
    %v4058 = vld [vmem:[#allocation5 + $0x24] sm:$0xff]
    %v4059 = vld [vmem:[#allocation5 + $0x2c] sm:$0xf]
    %v4060 = vld [vmem:[#allocation5 + $0x30] sm:$0xff]
    %v4061 = vld [vmem:[#allocation5 + $0x38] sm:$0xf]
    %v4062 = vld [vmem:[#allocation5 + $0x3c] sm:$0xff]
    %v4063 = vld [vmem:[#allocation5 + $0x44] sm:$0xf]
    %v4064 = vld [vmem:[#allocation5 + $0x48] sm:$0xff]
    %v4065 = vld [vmem:[#allocation5 + $0x50] sm:$0xf]
    %v4066 = vld [vmem:[#allocation5 + $0x54] sm:$0xff]
    %v4067 = vld [vmem:[#allocation5 + $0x5c] sm:$0xf]
    %v4068 = vld [vmem:[#allocation5 + $0x60] sm:$0xff]
    %v4069 = vld [vmem:[#allocation5 + $0x68] sm:$0xf]
    %v4070 = vld [vmem:[#allocation5 + $0x6c] sm:$0xff]
    %v4071 = vld [vmem:[#allocation5 + $0x74] sm:$0xf]
    %v4072 = vld [vmem:[#allocation5 + $0x78] sm:$0xff]
    %v4073 = vld [vmem:[#allocation5 + $0x80] sm:$0xf]
    %v4074 = vld [vmem:[#allocation5 + $0x84] sm:$0xff]
    %v4075 = vld [vmem:[#allocation5 + $0x8c] sm:$0xf]
    %v4076 = vld [vmem:[#allocation5 + $0x90] sm:$0xff]
    %v4077 = vld [vmem:[#allocation5 + $0x98] sm:$0xf]
    %v4078 = vld [vmem:[#allocation5 + $0x9c] sm:$0xff]
    %v4079 = vld [vmem:[#allocation5 + $0xa4] sm:$0xf]
    %v4080 = vld [vmem:[#allocation5 + $0xa8] sm:$0xff]
    %v4081 = vld [vmem:[#allocation5 + $0xb0] sm:$0xf]
    %v4082 = vld [vmem:[#allocation5 + $0xb4] sm:$0xff]
    %v4083 = vld [vmem:[#allocation5 + $0xbc] sm:$0xf]
    %v4116 = vunpack.c.l.b16 %v4052
    %v4117 = vunpack.c.h.b16 %v4052
    %v4118 = vunpack.c.l.b16 %v4053
    %v4119 = vunpack.c.l.b16 %v4054
    %v4120 = vunpack.c.h.b16 %v4054
    %v4121 = vunpack.c.l.b16 %v4055
    %v4122 = vunpack.c.l.b16 %v4056
    %v4123 = vunpack.c.h.b16 %v4056
    %v4124 = vunpack.c.l.b16 %v4057
    %v4125 = vunpack.c.l.b16 %v4058
    %v4126 = vunpack.c.h.b16 %v4058
    %v4127 = vunpack.c.l.b16 %v4059
    %v4128 = vunpack.c.l.b16 %v4060
    %v4129 = vunpack.c.h.b16 %v4060
    %v4130 = vunpack.c.l.b16 %v4061
    %v4131 = vunpack.c.l.b16 %v4062
    %v4132 = vunpack.c.h.b16 %v4062
    %v4133 = vunpack.c.l.b16 %v4063
    %v4134 = vunpack.c.l.b16 %v4064
    %v4135 = vunpack.c.h.b16 %v4064
    %v4136 = vunpack.c.l.b16 %v4065
    %v4137 = vunpack.c.l.b16 %v4066
    %v4138 = vunpack.c.h.b16 %v4066
    %v4139 = vunpack.c.l.b16 %v4067
    %v4140 = vunpack.c.l.b16 %v4068
    %v4141 = vunpack.c.h.b16 %v4068
    %v4142 = vunpack.c.l.b16 %v4069
    %v4143 = vunpack.c.l.b16 %v4070
    %v4144 = vunpack.c.h.b16 %v4070
    %v4145 = vunpack.c.l.b16 %v4071
    %v4146 = vunpack.c.l.b16 %v4072
    %v4147 = vunpack.c.h.b16 %v4072
    %v4148 = vunpack.c.l.b16 %v4073
    %v4149 = vunpack.c.l.b16 %v4074
    %v4150 = vunpack.c.h.b16 %v4074
    %v4151 = vunpack.c.l.b16 %v4075
    %v4152 = vunpack.c.l.b16 %v4076
    %v4153 = vunpack.c.h.b16 %v4076
    %v4154 = vunpack.c.l.b16 %v4077
    %v4155 = vunpack.c.l.b16 %v4078
    %v4156 = vunpack.c.h.b16 %v4078
    %v4157 = vunpack.c.l.b16 %v4079
    %v4158 = vunpack.c.l.b16 %v4080
    %v4159 = vunpack.c.h.b16 %v4080
    %v4160 = vunpack.c.l.b16 %v4081
    %v4161 = vunpack.c.l.b16 %v4082
    %v4162 = vunpack.c.h.b16 %v4082
    %v4163 = vunpack.c.l.b16 %v4083
    %v4164 = vpack.c.b16 %v4119, %v4116
    %v4165 = vpack.c.b16 %v4120, %v4117
    %v4166 = vpack.c.b16 %v4121, %v4118
    %v4167 = vpack.c.b16 %v4125, %v4122
    %v4168 = vpack.c.b16 %v4126, %v4123
    %v4169 = vpack.c.b16 %v4127, %v4124
    %v4170 = vpack.c.b16 %v4131, %v4128
    %v4171 = vpack.c.b16 %v4132, %v4129
    %v4172 = vpack.c.b16 %v4133, %v4130
    %v4173 = vpack.c.b16 %v4137, %v4134
    %v4174 = vpack.c.b16 %v4138, %v4135
    %v4175 = vpack.c.b16 %v4139, %v4136
    %v4176 = vpack.c.b16 %v4143, %v4140
    %v4177 = vpack.c.b16 %v4144, %v4141
    %v4178 = vpack.c.b16 %v4145, %v4142
    %v4179 = vpack.c.b16 %v4149, %v4146
    %v4180 = vpack.c.b16 %v4150, %v4147
    %v4181 = vpack.c.b16 %v4151, %v4148
    %v4182 = vpack.c.b16 %v4155, %v4152
    %v4183 = vpack.c.b16 %v4156, %v4153
    %v4184 = vpack.c.b16 %v4157, %v4154
    %v4185 = vpack.c.b16 %v4161, %v4158
    %v4186 = vpack.c.b16 %v4162, %v4159
    %v4187 = vpack.c.b16 %v4163, %v4160
    %4212 = vmatprep.subr.bf16.mxu0 %v4186
    %4213 = vmatpush1.bf16.msra.mxu0 %v4185
    %4214 = vmatprep.subr.bf16.mxu0 %v4183
    %4215 = vmatpush1.bf16.msra.mxu0 %v4182
    %4216 = vmatprep.subr.bf16.mxu0 %v4180
    %4217 = vmatpush1.bf16.msra.mxu0 %v4179
    %4218 = vmatprep.subr.bf16.mxu0 %v4177
    %4219 = vmatpush1.bf16.msra.mxu0 %v4176
    %4220 = vmatprep.subr.bf16.mxu0 %v4174
    %4221 = vmatpush1.bf16.msra.mxu0 %v4173
    %4222 = vmatprep.subr.bf16.mxu0 %v4171
    %4223 = vmatpush1.bf16.msra.mxu0 %v4170
    %4224 = vmatprep.subr.bf16.mxu0 %v4168
    %4225 = vmatpush1.bf16.msra.mxu0 %v4167
    %4226 = vmatprep.subr.bf16.mxu0 %v4165
    %4227 = vmatpush1.bf16.msra.mxu0 %v4164
    %4228 = vmatprep.subr.bf16.mxu0 0
    %4229 = vmatpush2.bf16.msra.mxu0 0
    %4230 = vmatprep.subr.bf16.mxu0 0
    %4231 = vmatpush2.bf16.msra.mxu0 0
    %4232 = vmatprep.subr.bf16.mxu0 0
    %4233 = vmatpush2.bf16.msra.mxu0 0
    %4234 = vmatprep.subr.bf16.mxu0 0
    %4235 = vmatpush2.bf16.msra.mxu0 0
    %4236 = vmatprep.subr.bf16.mxu0 0
    %4237 = vmatpush2.bf16.msra.mxu0 0
    %4238 = vmatprep.subr.bf16.mxu0 0
    %4239 = vmatpush2.bf16.msra.mxu0 0
    %4240 = vmatprep.subr.bf16.mxu0 0
    %4241 = vmatpush2.bf16.msra.mxu0 0
    %4242 = vmatprep.subr.bf16.mxu0 0
    %4243 = vmatpush2.bf16.msra.mxu0 0
    %4244 = vmatprep.mubr.bf16.mxu0 0
    %4245 = vmatmul.mubr.bf16.gmra.mxu0 %v4051
    %v4246 = vpop.f32.mrf.mxu0
    %v4247 = vadd.f32 %v2176, %v4246
    %v4248 = vpop.f32.mrf.mxu0
    %v4249 = vadd.f32 %v2177, %v4248
    %v4250 = vpop.f32.mrf.mxu0
    %v4251 = vpop.f32.mrf.mxu0
    %4252 = vdwg.mxu0
    %4253 = vmatprep.subr.bf16.mxu0 0
    %4254 = vmatpush1.bf16.msra.mxu0 %v4187
    %4255 = vmatprep.subr.bf16.mxu0 0
    %4256 = vmatpush1.bf16.msra.mxu0 %v4184
    %4257 = vmatprep.subr.bf16.mxu0 0
    %4258 = vmatpush1.bf16.msra.mxu0 %v4181
    %4259 = vmatprep.subr.bf16.mxu0 0
    %4260 = vmatpush1.bf16.msra.mxu0 %v4178
    %4261 = vmatprep.subr.bf16.mxu0 0
    %4262 = vmatpush1.bf16.msra.mxu0 %v4175
    %4263 = vmatprep.subr.bf16.mxu0 0
    %4264 = vmatpush1.bf16.msra.mxu0 %v4172
    %4265 = vmatprep.subr.bf16.mxu0 0
    %4266 = vmatpush1.bf16.msra.mxu0 %v4169
    %4267 = vmatprep.subr.bf16.mxu0 0
    %4268 = vmatpush1.bf16.msra.mxu0 %v4166
    %4269 = vmatprep.subr.bf16.mxu0 0
    %4270 = vmatpush2.bf16.msra.mxu0 0
    %4271 = vmatprep.subr.bf16.mxu0 0
    %4272 = vmatpush2.bf16.msra.mxu0 0
    %4273 = vmatprep.subr.bf16.mxu0 0
    %4274 = vmatpush2.bf16.msra.mxu0 0
    %4275 = vmatprep.subr.bf16.mxu0 0
    %4276 = vmatpush2.bf16.msra.mxu0 0
    %4277 = vmatprep.subr.bf16.mxu0 0
    %4278 = vmatpush2.bf16.msra.mxu0 0
    %4279 = vmatprep.subr.bf16.mxu0 0
    %4280 = vmatpush2.bf16.msra.mxu0 0
    %4281 = vmatprep.subr.bf16.mxu0 0
    %4282 = vmatpush2.bf16.msra.mxu0 0
    %4283 = vmatprep.subr.bf16.mxu0 0
    %4284 = vmatpush2.bf16.msra.mxu0 0
    %4285 = vmatprep.mubr.bf16.mxu0 0
    %4286 = vmatmul.mubr.bf16.gmra.mxu0 %v4051
    %v4287 = vpop.f32.mrf.mxu0
    %v4288 = vadd.f32 %v2178, %v4287
    %v4289 = vpop.f32.mrf.mxu0
    %v4290 = vpop.f32.mrf.mxu0
    %v4291 = vpop.f32.mrf.mxu0
    %4292 = vdwg.mxu0
    %v4293 = vadd.f32 %v4048, %v4247
    %v4294 = vxor.u32 %v4293, 2147483648
    %v4295 = vmul.f32 %v4294, 1.442695
    %v4296 = vpow.pop %v4295
    %v4297 = vadd.f32 %v4296, 1.0
    %v4298 = vrcp.pop %v4297
    %v4299 = vmul.f32 1.0, %v4298
    %v4300 = vadd.f32 %v4049, %v4249
    %v4301 = vxor.u32 %v4300, 2147483648
    %v4302 = vmul.f32 %v4301, 1.442695
    %v4303 = vpow.pop %v4302
    %v4304 = vadd.f32 %v4303, 1.0
    %v4305 = vrcp.pop %v4304
    %v4306 = vmul.f32 1.0, %v4305
    %v4307 = vmul.f32 %v4299, %v4288
    %v4308 = vadd.f32 %v4050, %v4307
    %v4309 = vtanh.pop %v4308
    %v4310 = vsub.f32 1.0, %v4306
    %v4311 = vmul.f32 %v4310, %v4309
    %v4312 = vmul.f32 %v4306, %v4046
    %v4313 = vadd.f32 %v4311, %v4312
    %4314 = vst [vmem:[#allocation3 + $0x38] sm:$0xff] %v4313
    %s4315 = smul.u32 %s1799, 1
    %s4316 = sshll.u32 %s4315, 4
    %4317 = dma.done %s265, %s4316
    %v4318 = vld [vmem:[#allocation3] sm:$0xff]
    %v4319 = vld [vmem:[#allocation3 + $0x8] sm:$0xff]
    %v4320 = vld [vmem:[#allocation3 + $0x10] sm:$0xff]
    %v4321 = vld [vmem:[#allocation3 + $0x18] sm:$0xff]
    %v4322 = vld [vmem:[#allocation3 + $0x20] sm:$0xff]
    %v4323 = vld [vmem:[#allocation3 + $0x28] sm:$0xff]
    %v4324 = vld [vmem:[#allocation3 + $0x30] sm:$0xff]
    %v4325 = vld [vmem:[#allocation3 + $0x38] sm:$0xff]
    %v4326 = vpack.c.bf16 %v4319, %v4318
    %v4327 = vpack.c.bf16 %v4321, %v4320
    %v4328 = vpack.c.bf16 %v4323, %v4322
    %v4329 = vpack.c.bf16 %v4325, %v4324
    %v4330 = vld [vmem:[#allocation6] sm:$0xf]
    %v4331 = vld [vmem:[#allocation6 + $0x4] sm:$0xf]
    %v4332 = vld [vmem:[#allocation6 + $0x8] sm:$0xf]
    %v4333 = vld [vmem:[#allocation6 + $0xc] sm:$0xf]
    %v4334 = vld [vmem:[#allocation6 + $0x10] sm:$0xf]
    %v4335 = vld [vmem:[#allocation6 + $0x14] sm:$0xf]
    %v4336 = vld [vmem:[#allocation6 + $0x18] sm:$0xf]
    %v4337 = vld [vmem:[#allocation6 + $0x1c] sm:$0xf]
    %v4338 = vld [vmem:[#allocation6 + $0x20] sm:$0xf]
    %v4339 = vld [vmem:[#allocation6 + $0x24] sm:$0xf]
    %v4340 = vld [vmem:[#allocation6 + $0x28] sm:$0xf]
    %v4341 = vld [vmem:[#allocation6 + $0x2c] sm:$0xf]
    %v4342 = vld [vmem:[#allocation6 + $0x30] sm:$0xf]
    %v4343 = vld [vmem:[#allocation6 + $0x34] sm:$0xf]
    %v4344 = vld [vmem:[#allocation6 + $0x38] sm:$0xf]
    %v4345 = vld [vmem:[#allocation6 + $0x3c] sm:$0xf]
    %v4346 = vld [vmem:[%s14] sm:$0x1]
    %v4348 = vlaneseq
    %v4349 = vshrl.u32 %v4348, 7
    %v4350 = vsub.s32 0, %v4349
    %v4351 = vrot.slane %v4346, %v4350
    %v4369 = vunpack.c.l.b16 %v4330
    %v4370 = vunpack.c.l.b16 %v4331
    %v4371 = vunpack.c.l.b16 %v4332
    %v4372 = vunpack.c.l.b16 %v4333
    %v4373 = vunpack.c.l.b16 %v4334
    %v4374 = vunpack.c.l.b16 %v4335
    %v4375 = vunpack.c.l.b16 %v4336
    %v4376 = vunpack.c.l.b16 %v4337
    %v4377 = vunpack.c.l.b16 %v4338
    %v4378 = vunpack.c.l.b16 %v4339
    %v4379 = vunpack.c.l.b16 %v4340
    %v4380 = vunpack.c.l.b16 %v4341
    %v4381 = vunpack.c.l.b16 %v4342
    %v4382 = vunpack.c.l.b16 %v4343
    %v4383 = vunpack.c.l.b16 %v4344
    %v4384 = vunpack.c.l.b16 %v4345
    %v4385 = vpack.c.b16 %v4370, %v4369
    %v4386 = vpack.c.b16 %v4372, %v4371
    %v4387 = vpack.c.b16 %v4374, %v4373
    %v4388 = vpack.c.b16 %v4376, %v4375
    %v4389 = vpack.c.b16 %v4378, %v4377
    %v4390 = vpack.c.b16 %v4380, %v4379
    %v4391 = vpack.c.b16 %v4382, %v4381
    %v4392 = vpack.c.b16 %v4384, %v4383
    %4401 = vmatprep.subr.bf16.mxu0 0
    %4402 = vmatpush1.bf16.msra.mxu0 %v4392
    %4403 = vmatprep.subr.bf16.mxu0 0
    %4404 = vmatpush1.bf16.msra.mxu0 %v4391
    %4405 = vmatprep.subr.bf16.mxu0 0
    %4406 = vmatpush1.bf16.msra.mxu0 %v4390
    %4407 = vmatprep.subr.bf16.mxu0 0
    %4408 = vmatpush1.bf16.msra.mxu0 %v4389
    %4409 = vmatprep.subr.bf16.mxu0 0
    %4410 = vmatpush1.bf16.msra.mxu0 %v4388
    %4411 = vmatprep.subr.bf16.mxu0 0
    %4412 = vmatpush1.bf16.msra.mxu0 %v4387
    %4413 = vmatprep.subr.bf16.mxu0 0
    %4414 = vmatpush1.bf16.msra.mxu0 %v4386
    %4415 = vmatprep.subr.bf16.mxu0 0
    %4416 = vmatpush1.bf16.msra.mxu0 %v4385
    %4417 = vmatprep.subr.bf16.mxu0 0
    %4418 = vmatpush2.bf16.msra.mxu0 0
    %4419 = vmatprep.subr.bf16.mxu0 0
    %4420 = vmatpush2.bf16.msra.mxu0 0
    %4421 = vmatprep.subr.bf16.mxu0 0
    %4422 = vmatpush2.bf16.msra.mxu0 0
    %4423 = vmatprep.subr.bf16.mxu0 0
    %4424 = vmatpush2.bf16.msra.mxu0 0
    %4425 = vmatprep.subr.bf16.mxu0 0
    %4426 = vmatpush2.bf16.msra.mxu0 0
    %4427 = vmatprep.subr.bf16.mxu0 0
    %4428 = vmatpush2.bf16.msra.mxu0 0
    %4429 = vmatprep.subr.bf16.mxu0 0
    %4430 = vmatpush2.bf16.msra.mxu0 0
    %4431 = vmatprep.subr.bf16.mxu0 0
    %4432 = vmatpush2.bf16.msra.mxu0 0
    %4433 = vmatprep.mubr.bf16.mxu0 0
    %4434 = vmatmul.mubr.bf16.gmra.mxu0 %v4326
    %v4435 = vpop.f32.mrf.mxu0
    %v4436 = vadd.f32 %v4351, %v4435
    %v4437 = vpop.f32.mrf.mxu0
    %v4438 = vpop.f32.mrf.mxu0
    %v4439 = vadd.f32 %v4351, %v4438
    %v4440 = vpop.f32.mrf.mxu0
    %4441 = vmatprep.mubr.bf16.mxu0 0
    %4442 = vmatmul.mubr.bf16.gmra.mxu0 %v4327
    %v4443 = vpop.f32.mrf.mxu0
    %v4444 = vadd.f32 %v4351, %v4443
    %v4445 = vpop.f32.mrf.mxu0
    %v4446 = vpop.f32.mrf.mxu0
    %v4447 = vadd.f32 %v4351, %v4446
    %v4448 = vpop.f32.mrf.mxu0
    %4449 = vmatprep.mubr.bf16.mxu0 0
    %4450 = vmatmul.mubr.bf16.gmra.mxu0 %v4328
    %v4451 = vpop.f32.mrf.mxu0
    %v4452 = vadd.f32 %v4351, %v4451
    %v4453 = vpop.f32.mrf.mxu0
    %v4454 = vpop.f32.mrf.mxu0
    %v4455 = vadd.f32 %v4351, %v4454
    %v4456 = vpop.f32.mrf.mxu0
    %4457 = vmatprep.mubr.bf16.mxu0 0
    %4458 = vmatmul.mubr.bf16.gmra.mxu0 %v4329
    %v4459 = vpop.f32.mrf.mxu0
    %v4460 = vadd.f32 %v4351, %v4459
    %v4461 = vpop.f32.mrf.mxu0
    %v4462 = vpop.f32.mrf.mxu0
    %v4463 = vadd.f32 %v4351, %v4462
    %v4464 = vpop.f32.mrf.mxu0
    %4465 = vdwg.mxu0
    %4466 = vst [vmem:[%s15] sm:$0xff] %v4436
    %4467 = vst [vmem:[%s15 + $0x8] sm:$0xff] %v4439
    %4468 = vst [vmem:[%s15 + $0x10] sm:$0xff] %v4444
    %4469 = vst [vmem:[%s15 + $0x18] sm:$0xff] %v4447
    %4470 = vst [vmem:[%s15 + $0x20] sm:$0xff] %v4452
    %4471 = vst [vmem:[%s15 + $0x28] sm:$0xff] %v4455
    %4472 = vst [vmem:[%s15 + $0x30] sm:$0xff] %v4460
    %4473 = vst [vmem:[%s15 + $0x38] sm:$0xff] %v4463
    %4474 = vst [vmem:[%s16] sm:$0xff] %v4313
    // Predicated region
    $region164: #{seq2seq_forward.1} parent=1 // pred_check
      _
    $region165: #{seq2seq_forward.1} parent=1 // pred_check_branch
      %4476 = sbr.rel (0) target = $region167
    $region166: #{seq2seq_forward.1} parent=1 // pred_region
      _
    $region167: #{seq2seq_forward.1} parent=1 // pred_fallthru
      _
    // Predicated region
    $region168: #{seq2seq_forward.1} parent=1 // pred_check
      _
    $region169: #{seq2seq_forward.1} parent=1 // pred_check_branch
      %4478 = sbr.rel (0) target = $region171
    $region170: #{seq2seq_forward.1} parent=1 // pred_region
      _
    $region171: #{seq2seq_forward.1} parent=1 // pred_fallthru
      _
    // Predicated region
    $region172: #{seq2seq_forward.1} parent=1 // pred_check
      _
    $region173: #{seq2seq_forward.1} parent=1 // pred_check_branch
      %4480 = sbr.rel (0) target = $region175
    $region174: #{seq2seq_forward.1} parent=1 // pred_region
      _
    $region175: #{seq2seq_forward.1} parent=1 // pred_fallthru
      _
    // Predicated region
    $region176: #{seq2seq_forward.1} parent=1 // pred_check
      _
    $region177: #{seq2seq_forward.1} parent=1 // pred_check_branch
      %4482 = sbr.rel (0) target = $region179
    $region178: #{seq2seq_forward.1} parent=1 // pred_region
      _
    $region179: #{seq2seq_forward.1} parent=1 // pred_fallthru
      _
    %4483 = vsyncpa [#allocation9], 1
    %4484 = vsyncpa [#allocation11], 1
  %4485 = vsyncmov [#allocation7]
  %s4486 = vpop.sfrf %4485
  %p4487 = scmp.eq.s32.totalorder %s4486, 0
  %p4488 = pneg %p4487
  %4490 = shalt.err (%p4488)
  %s4491 = scalar_lea.sflag [#allocation7], 1
  %4492 = vsyncmov %s4491
  %s4493 = vpop.sfrf %4492
  %p4494 = scmp.eq.s32.totalorder %s4493, 0
  %p4495 = pneg %p4494
  %4497 = shalt.err (%p4495)
  %s4498 = scalar_lea.sflag [#allocation7], 2
  %4499 = vsyncmov %s4498
  %s4500 = vpop.sfrf %4499
  %p4501 = scmp.eq.s32.totalorder %s4500, 0
  %p4502 = pneg %p4501
  %4504 = shalt.err (%p4502)

</llo_original>
